<compile_context>
chip_gen: v7x
topology: tpu7x:2x2x1
jax: 0.10.0
libtpu: 0.0.40
codegen_flags: <defaults>
</compile_context>

<pallas_src>
import jax
import jax.numpy as jnp
from jax.experimental import pallas as pl
from jax.experimental.pallas import tpu as pltpu


NEG_INF = -1e30


def edge_layer_kernel(blk_start_ref, nblk_ref,            # scalar prefetch (SMEM)
                      dst_ref, h_n_ref, h_e_ref, w_ref,   # inputs (VMEM)
                      out_ref,                             # output (VMEM)
                      m_i, l_i, acc):                      # scratch (VMEM)
    n_idx = pl.program_id(0)           # node-tile index   ("parallel")
    e_idx = pl.program_id(1)           # edge-block index  ("arbitrary" reduction)

    @pl.when(e_idx == 0)
    def _init():
        m_i[...] = jnp.full_like(m_i, NEG_INF)
        l_i[...] = jnp.zeros_like(l_i)
        acc[...] = jnp.zeros_like(acc)

    # Only process edge blocks that actually contain edges destined to this
    # node tile (CSR block range from scalar prefetch); skip the rest.
    @pl.when(e_idx < nblk_ref[n_idx])
    def _update():
        h_n = h_n_ref[...]             # [TN, D]  bf16 node features (this tile)
        h_e = h_e_ref[...]             # [TE, D]  bf16 edge features (this block)
        dst_row = dst_ref[...]         # [1, TE]  int32 destination node ids

        tn = h_n.shape[0]
        te = h_e.shape[0]

        # Scores for every (node-in-tile, edge-in-block) pair on the MXU:
        #   S[v, e] = <h_node[v], h_edge[e]>  (kept only where dst[e] == v)
        s = jax.lax.dot_general(
            h_n, h_e, (((1,), (1,)), ((), ())),
            preferred_element_type=jnp.float32)                    # [TN, TE]

        # mask[v, e] = (local node row v) == (dst[e] - tile offset); offset is
        # applied to the cheap [1, TE] row, not the [TN, TE] iota.
        local_ids = jax.lax.broadcasted_iota(jnp.int32, (tn, te), 0)
        mask = local_ids == (dst_row - n_idx * tn)                 # [TN, TE]
        s = jnp.where(mask, s, NEG_INF)

        # Online (flash-style) softmax over the edge axis.
        m_cur = jnp.max(s, axis=-1, keepdims=True)                 # [TN, 1]
        m_new = jnp.maximum(m_i[...], m_cur)
        # [TN,1] guard replaces the full-tile mask multiply: masked scores are
        # already -1e30, so exp underflows to exactly 0 once safe_m is finite.
        safe_m = jnp.where(m_new < -1e29, 0.0, m_new)              # [TN, 1]
        alpha = jnp.exp(m_i[...] - m_new)                          # [TN, 1]
        p = jnp.exp(s - safe_m)                                    # [TN, TE]

        l_i[...] = alpha * l_i[...] + jnp.sum(p, axis=-1, keepdims=True)
        acc[...] = alpha * acc[...] + jnp.dot(
            p.astype(jnp.bfloat16), h_e, preferred_element_type=jnp.float32)
        m_i[...] = m_new

    @pl.when(e_idx == pl.num_programs(1) - 1)
    def _finalize():
        l = l_i[...]
        l = jnp.where(l == 0.0, 1.0, l)        # isolated nodes -> output 0
        neigh = acc[...] * pl.reciprocal(l, approx=True)           # [TN, D]
        out = jnp.dot(neigh.astype(jnp.bfloat16), w_ref[...],
                      preferred_element_type=jnp.float32)
        out_ref[...] = jnp.tanh(out).astype(out_ref.dtype)


def edge_layer_forward(node_id, src, dst, rel_id, ent_emb, rel_emb, neigh_w,
                       *, tn=None, te=None):
    """Gathers, sorting & CSR offsets in JAX; softmax-aggregation in Pallas.

    Note: the grid extent along the edge-block axis is data-dependent, so this
    wrapper must run eagerly (it is not meant to be jitted as a whole).
    """
    del src  # only the destination side is used (e_dot_v / edge_softmax / sum)
    N = node_id.shape[0]
    E = dst.shape[0]
    D = ent_emb.shape[1]

    # Tile sizes: tn=256 fills the v6e/v7x MXU once there are >=2 node tiles
    # (keeps the "parallel" axis shardable across v7x's two TensorCores);
    # te is the edge-reduction tile (bigger amortizes per-step overhead).
    if tn is None:
        tn = 256 if N >= 512 else 128
    if te is None:
        te = 2048 if E >= 2048 else max(512, pl.cdiv(E, 512) * 512)

    # bf16 operands for the MXU (f32 accumulation happens in-kernel).
    h_nodes = ent_emb[node_id].astype(jnp.bfloat16)   # [N, D]
    h_edge = rel_emb[rel_id].astype(jnp.bfloat16)     # [E, D]
    w = neigh_w.astype(jnp.bfloat16)                  # [D, D]
    dst_i32 = dst.astype(jnp.int32)                   # [E]

    # CSR layout: sort edges by destination so each node tile's edges are
    # contiguous in the edge arrays.
    order = jnp.argsort(dst_i32)
    dst_sorted = dst_i32[order]
    h_edge = h_edge[order]

    n_pad = pl.cdiv(N, tn) * tn
    e_pad = pl.cdiv(E, te) * te
    if n_pad != N:
        h_nodes = jnp.pad(h_nodes, ((0, n_pad - N), (0, 0)))
    if e_pad != E:
        h_edge = jnp.pad(h_edge, ((0, e_pad - E), (0, 0)))
        # Sentinel dst = n_pad never matches any node row -> padded edges masked.
        dst_sorted = jnp.pad(dst_sorted, (0, e_pad - E), constant_values=n_pad)

    num_node_tiles = n_pad // tn
    num_edge_blocks = e_pad // te

    # Per-node-tile range of edge blocks.  Boundary blocks may be shared by
    # two node tiles; the in-kernel mask drops foreign edges.
    bounds = jnp.arange(num_node_tiles + 1, dtype=jnp.int32) * tn
    edge_lo = jnp.searchsorted(dst_sorted, bounds[:-1], side='left')
    edge_hi = jnp.searchsorted(dst_sorted, bounds[1:], side='left')
    blk_start = (edge_lo // te).astype(jnp.int32)                  # [tiles]
    blk_end = ((edge_hi + te - 1) // te).astype(jnp.int32)         # [tiles]
    nblk = (blk_end - blk_start).astype(jnp.int32)                 # [tiles]

    # Data-dependent grid extent along the reduction axis (eager wrapper).
    max_blk = max(int(jnp.max(nblk)), 1)

    dst_2d = dst_sorted.reshape(1, e_pad)             # lane-dense index row

    def dst_blk_map(n, e, bs, nb):
        return (0, jnp.minimum(bs[n] + e, num_edge_blocks - 1))

    def hedge_blk_map(n, e, bs, nb):
        return (jnp.minimum(bs[n] + e, num_edge_blocks - 1), 0)

    grid_spec = pltpu.PrefetchScalarGridSpec(
        num_scalar_prefetch=2,
        grid=(num_node_tiles, max_blk),
        in_specs=[
            pl.BlockSpec((1, te), dst_blk_map),                      # dst ids
            pl.BlockSpec((tn, D), lambda n, e, bs, nb: (n, 0)),      # node feats
            pl.BlockSpec((te, D), hedge_blk_map),                    # edge feats
            pl.BlockSpec((D, D), lambda n, e, bs, nb: (0, 0)),       # neigh_w
        ],
        out_specs=pl.BlockSpec((tn, D), lambda n, e, bs, nb: (n, 0)),
        scratch_shapes=[
            pltpu.VMEM((tn, 1), jnp.float32),   # running max  m_i
            pltpu.VMEM((tn, 1), jnp.float32),   # running sum  l_i
            pltpu.VMEM((tn, D), jnp.float32),   # accumulator
        ],
    )

    out = pl.pallas_call(
        edge_layer_kernel,
        out_shape=jax.ShapeDtypeStruct((n_pad, D), jnp.float32),
        grid_spec=grid_spec,
        compiler_params=pltpu.CompilerParams(
            dimension_semantics=("parallel", "arbitrary"),
            vmem_limit_bytes=48 * 1024 * 1024),   # safe on v7x's 64 MiB VMEM
    )(blk_start, nblk, dst_2d, h_nodes, h_edge, w)

    return out[:N]


def _reference(node_id, dst, rel_id, ent_emb, rel_emb, neigh_w):
    """Pure-JAX segment-op reference, on the same bf16-quantized operands."""
    N = node_id.shape[0]
    h_nodes = ent_emb[node_id].astype(jnp.bfloat16).astype(jnp.float32)
    h_edge = rel_emb[rel_id].astype(jnp.bfloat16).astype(jnp.float32)
    w = neigh_w.astype(jnp.bfloat16).astype(jnp.float32)

    scores = jnp.sum(h_edge * h_nodes[dst], axis=-1)                  # [E]
    seg_max = jax.ops.segment_max(scores, dst, num_segments=N)
    seg_max = jnp.where(jnp.isfinite(seg_max), seg_max, 0.0)
    p = jnp.exp(scores - seg_max[dst])
    denom = jax.ops.segment_sum(p, dst, num_segments=N)
    denom = jnp.where(denom == 0, 1.0, denom)
    norm = p / denom[dst]
    neigh = jax.ops.segment_sum(h_edge * norm[:, None], dst, num_segments=N)
    return jnp.tanh(neigh @ w)


if __name__ == "__main__":
    key = jax.random.PRNGKey(0)
    k1, k2, k3, k4, k5, k6, k7 = jax.random.split(key, 7)

    # Small synthetic graph / embedding sizes (lane-dense feature dim).
    N = 256         # num nodes (== num_ent here)
    E = 1024        # num edges
    D = 128         # h_dim
    num_rel = 5     # rel_emb has 2 * num_rel rows

    node_id = jax.random.permutation(k1, jnp.arange(N, dtype=jnp.int32))
    src = jax.random.randint(k2, (E,), 0, N, dtype=jnp.int32)
    dst = jax.random.randint(k3, (E,), 0, N, dtype=jnp.int32)
    rel_id = jax.random.randint(k4, (E,), 0, 2 * num_rel, dtype=jnp.int32)

    ent_emb = jax.random.normal(k5, (N, D), dtype=jnp.float32)
    rel_emb = jax.random.normal(k6, (2 * num_rel, D), dtype=jnp.float32)

    # neigh_w: xavier_normal_ init, std = sqrt(2 / (fan_in + fan_out))
    xavier_std = (2.0 / (D + D)) ** 0.5
    neigh_w = xavier_std * jax.random.normal(k7, (D, D), dtype=jnp.float32)

    out = edge_layer_forward(node_id, src, dst, rel_id, ent_emb, rel_emb, neigh_w)
    out = jax.block_until_ready(out)

    ref = _reference(node_id, dst, rel_id, ent_emb, rel_emb, neigh_w)
    assert out.shape == (N, D)
    max_err = float(jnp.max(jnp.abs(out - ref)))
    assert jnp.allclose(out, ref, atol=2e-2, rtol=2e-2), (
        f"mismatch vs reference (max abs err {max_err:.4e})")

    print("KERNEL_OK")
</pallas_src>

<mosaic_0001>
module attributes {stable_mosaic.version = 11 : i64} {
  func.func @edge_layer_kernel(%arg0: i32, %arg1: i32, %arg2: memref<2xi32, #tpu.memory_space<smem>>, %arg3: memref<2xi32, #tpu.memory_space<smem>>, %arg4: memref<1x1024xi32, #tpu.memory_space<vmem>>, %arg5: memref<128x128xbf16, #tpu.memory_space<vmem>>, %arg6: memref<1024x128xbf16, #tpu.memory_space<vmem>>, %arg7: memref<128x128xbf16, #tpu.memory_space<vmem>>, %arg8: memref<128x128xf32, #tpu.memory_space<vmem>>, %arg9: memref<128x1xf32, #tpu.memory_space<vmem>>, %arg10: memref<128x1xf32, #tpu.memory_space<vmem>>, %arg11: memref<128x128xf32, #tpu.memory_space<vmem>>) attributes {dimension_semantics = [#tpu.dimension_semantics<parallel>, #tpu.dimension_semantics<arbitrary>], iteration_bounds = array<i64: 2, 1>, scalar_prefetch = 2 : i64, scratch_operands = 3 : i64, tpu.core_type = #tpu.core_type<tc>, window_params = [{transform_indices = @transform_0, window_bounds = array<i64: 1, 1024>}, {transform_indices = @transform_1, window_bounds = array<i64: 128, 128>}, {transform_indices = @transform_2, window_bounds = array<i64: 1024, 128>}, {pipeline_mode = #tpu.pipeline_mode<synchronous>, transform_indices = @transform_3, window_bounds = array<i64: 128, 128>}, {transform_indices = @transform_4, window_bounds = array<i64: 128, 128>}]} {
    %c0_i32 = arith.constant 0 : i32
    %0 = arith.cmpi eq, %arg1, %c0_i32 : i32
    %1 = arith.extui %0 : i1 to i32
    %c0_i32_0 = arith.constant 0 : i32
    %2 = arith.cmpi ne, %1, %c0_i32_0 : i32
    scf.if %2 {
      %cst = arith.constant -1.000000e+30 : f32
      %11 = vector.broadcast %cst : f32 to vector<128x1xf32>
      %c0 = arith.constant 0 : index
      %c0_4 = arith.constant 0 : index
      %12 = vector.load %arg9[%c0, %c0_4] : memref<128x1xf32, #tpu.memory_space<vmem>>, vector<128x1xf32>
      tpu.vector_store %arg9[%c0, %c0_4], %11 {strides = array<i32>} : memref<128x1xf32, #tpu.memory_space<vmem>>, vector<128x1xf32>,
      %cst_5 = arith.constant 0.000000e+00 : f32
      %13 = vector.broadcast %cst_5 : f32 to vector<128x1xf32>
      %c0_6 = arith.constant 0 : index
      %c0_7 = arith.constant 0 : index
      %14 = vector.load %arg10[%c0_6, %c0_7] : memref<128x1xf32, #tpu.memory_space<vmem>>, vector<128x1xf32>
      tpu.vector_store %arg10[%c0_6, %c0_7], %13 {strides = array<i32>} : memref<128x1xf32, #tpu.memory_space<vmem>>, vector<128x1xf32>,
      %cst_8 = arith.constant 0.000000e+00 : f32
      %15 = vector.broadcast %cst_8 : f32 to vector<128x128xf32>
      %c0_9 = arith.constant 0 : index
      %c0_10 = arith.constant 0 : index
      %16 = vector.load %arg11[%c0_9, %c0_10] : memref<128x128xf32, #tpu.memory_space<vmem>>, vector<128x128xf32>
      tpu.vector_store %arg11[%c0_9, %c0_10], %15 {strides = array<i32>} : memref<128x128xf32, #tpu.memory_space<vmem>>, vector<128x128xf32>,
    } else {
    }
    %3 = arith.index_cast %arg0 : i32 to index
    %4 = memref.load %arg3[%3] : memref<2xi32, #tpu.memory_space<smem>>
    %5 = arith.cmpi slt, %arg1, %4 : i32
    %6 = arith.extui %5 : i1 to i32
    %c0_i32_1 = arith.constant 0 : i32
    %7 = arith.cmpi ne, %6, %c0_i32_1 : i32
    scf.if %7 {
      %c0 = arith.constant 0 : index
      %c0_4 = arith.constant 0 : index
      %11 = vector.load %arg5[%c0, %c0_4] : memref<128x128xbf16, #tpu.memory_space<vmem>>, vector<128x128xbf16>
      %c0_5 = arith.constant 0 : index
      %c0_6 = arith.constant 0 : index
      %12 = vector.load %arg6[%c0_5, %c0_6] : memref<1024x128xbf16, #tpu.memory_space<vmem>>, vector<1024x128xbf16>
      %c0_7 = arith.constant 0 : index
      %c0_8 = arith.constant 0 : index
      %13 = vector.load %arg4[%c0_7, %c0_8] : memref<1x1024xi32, #tpu.memory_space<vmem>>, vector<1x1024xi32>
      %cst = arith.constant dense<0.000000e+00> : vector<128x1024xf32>
      %14 = tpu.matmul %11, %12, %cst {dimension_numbers = #tpu.dot_dimension_numbers<[1], [1], [0], [0], [0, 0, 1, 0], [], []>} : vector<128x128xbf16>, vector<1024x128xbf16>, vector<128x1024xf32> -> vector<128x1024xf32>
      %15 = tpu.iota {dimensions = array<i32: 0>} : vector<128x1024xi32>
      %c128_i32 = arith.constant 128 : i32
      %16 = arith.muli %arg0, %c128_i32 : i32
      %17 = vector.broadcast %16 : i32 to vector<1x1024xi32>
      %18 = arith.subi %13, %17 : vector<1x1024xi32>
      %19 = vector.broadcast %18 : vector<1x1024xi32> to vector<128x1024xi32>
      %20 = arith.cmpi eq, %15, %19 : vector<128x1024xi32>
      %cst_9 = arith.constant -1.000000e+30 : f32
      %21 = vector.broadcast %cst_9 : f32 to vector<128x1024xf32>
      %22 = arith.select %20, %14, %21 : vector<128x1024xi1>, vector<128x1024xf32>
      %cst_10 = arith.constant dense<0xFF800000> : vector<128xf32>
      %23 = vector.multi_reduction <maximumf>, %22, %cst_10 [1] : vector<128x1024xf32> to vector<128xf32>
      %24 = vector.shape_cast %23 : vector<128xf32> to vector<128x1xf32>
      %c0_11 = arith.constant 0 : index
      %c0_12 = arith.constant 0 : index
      %25 = vector.load %arg9[%c0_11, %c0_12] : memref<128x1xf32, #tpu.memory_space<vmem>>, vector<128x1xf32>
      %26 = arith.maximumf %25, %24 : vector<128x1xf32>
      %cst_13 = arith.constant -1.000000e+29 : f32
      %27 = vector.broadcast %cst_13 : f32 to vector<128x1xf32>
      %28 = arith.cmpf olt, %26, %27 : vector<128x1xf32>
      %cst_14 = arith.constant 0.000000e+00 : f32
      %29 = vector.broadcast %cst_14 : f32 to vector<128x1xf32>
      %30 = arith.select %28, %29, %26 : vector<128x1xi1>, vector<128x1xf32>
      %c0_15 = arith.constant 0 : index
      %c0_16 = arith.constant 0 : index
      %31 = vector.load %arg9[%c0_15, %c0_16] : memref<128x1xf32, #tpu.memory_space<vmem>>, vector<128x1xf32>
      %32 = arith.subf %31, %26 : vector<128x1xf32>
      %33 = math.exp %32 : vector<128x1xf32>
      %34 = vector.broadcast %30 : vector<128x1xf32> to vector<128x1024xf32>
      %35 = arith.subf %22, %34 : vector<128x1024xf32>
      %36 = math.exp %35 : vector<128x1024xf32>
      %c0_17 = arith.constant 0 : index
      %c0_18 = arith.constant 0 : index
      %37 = vector.load %arg10[%c0_17, %c0_18] : memref<128x1xf32, #tpu.memory_space<vmem>>, vector<128x1xf32>
      %38 = arith.mulf %33, %37 : vector<128x1xf32>
      %cst_19 = arith.constant dense<0.000000e+00> : vector<128xf32>
      %39 = vector.multi_reduction <add>, %36, %cst_19 [1] : vector<128x1024xf32> to vector<128xf32>
      %40 = vector.shape_cast %39 : vector<128xf32> to vector<128x1xf32>
      %41 = arith.addf %38, %40 : vector<128x1xf32>
      %c0_20 = arith.constant 0 : index
      %c0_21 = arith.constant 0 : index
      %42 = vector.load %arg10[%c0_20, %c0_21] : memref<128x1xf32, #tpu.memory_space<vmem>>, vector<128x1xf32>
      tpu.vector_store %arg10[%c0_20, %c0_21], %41 {strides = array<i32>} : memref<128x1xf32, #tpu.memory_space<vmem>>, vector<128x1xf32>,
      %c0_22 = arith.constant 0 : index
      %c0_23 = arith.constant 0 : index
      %43 = vector.load %arg11[%c0_22, %c0_23] : memref<128x128xf32, #tpu.memory_space<vmem>>, vector<128x128xf32>
      %44 = vector.broadcast %33 : vector<128x1xf32> to vector<128x128xf32>
      %45 = arith.mulf %44, %43 : vector<128x128xf32>
      %46 = arith.truncf %36 : vector<128x1024xf32> to vector<128x1024xbf16>
      %cst_24 = arith.constant dense<0.000000e+00> : vector<128x128xf32>
      %47 = tpu.matmul %46, %12, %cst_24 {dimension_numbers = #tpu.dot_dimension_numbers<[1], [0], [0], [1], [0, 0, 1, 1], [], []>} : vector<128x1024xbf16>, vector<1024x128xbf16>, vector<128x128xf32> -> vector<128x128xf32>
      %48 = arith.addf %45, %47 : vector<128x128xf32>
      %c0_25 = arith.constant 0 : index
      %c0_26 = arith.constant 0 : index
      %49 = vector.load %arg11[%c0_25, %c0_26] : memref<128x128xf32, #tpu.memory_space<vmem>>, vector<128x128xf32>
      tpu.vector_store %arg11[%c0_25, %c0_26], %48 {strides = array<i32>} : memref<128x128xf32, #tpu.memory_space<vmem>>, vector<128x128xf32>,
      %c0_27 = arith.constant 0 : index
      %c0_28 = arith.constant 0 : index
      %50 = vector.load %arg9[%c0_27, %c0_28] : memref<128x1xf32, #tpu.memory_space<vmem>>, vector<128x1xf32>
      tpu.vector_store %arg9[%c0_27, %c0_28], %26 {strides = array<i32>} : memref<128x1xf32, #tpu.memory_space<vmem>>, vector<128x1xf32>,
    } else {
    }
    %c0_i32_2 = arith.constant 0 : i32
    %8 = arith.cmpi eq, %arg1, %c0_i32_2 : i32
    %9 = arith.extui %8 : i1 to i32
    %c0_i32_3 = arith.constant 0 : i32
    %10 = arith.cmpi ne, %9, %c0_i32_3 : i32
    scf.if %10 {
      %c0 = arith.constant 0 : index
      %c0_4 = arith.constant 0 : index
      %11 = vector.load %arg10[%c0, %c0_4] : memref<128x1xf32, #tpu.memory_space<vmem>>, vector<128x1xf32>
      %cst = arith.constant 0.000000e+00 : f32
      %12 = vector.broadcast %cst : f32 to vector<128x1xf32>
      %13 = arith.cmpf oeq, %11, %12 : vector<128x1xf32>
      %cst_5 = arith.constant 1.000000e+00 : f32
      %14 = vector.broadcast %cst_5 : f32 to vector<128x1xf32>
      %15 = arith.select %13, %14, %11 : vector<128x1xi1>, vector<128x1xf32>
      %c0_6 = arith.constant 0 : index
      %c0_7 = arith.constant 0 : index
      %16 = vector.load %arg11[%c0_6, %c0_7] : memref<128x128xf32, #tpu.memory_space<vmem>>, vector<128x128xf32>
      %17 = tpu.reciprocal %15 {approx = true} : vector<128x1xf32> -> vector<128x1xf32>
      %18 = vector.broadcast %17 : vector<128x1xf32> to vector<128x128xf32>
      %19 = arith.mulf %16, %18 : vector<128x128xf32>
      %20 = arith.truncf %19 : vector<128x128xf32> to vector<128x128xbf16>
      %c0_8 = arith.constant 0 : index
      %c0_9 = arith.constant 0 : index
      %21 = vector.load %arg7[%c0_8, %c0_9] : memref<128x128xbf16, #tpu.memory_space<vmem>>, vector<128x128xbf16>
      %cst_10 = arith.constant dense<0.000000e+00> : vector<128x128xf32>
      %22 = tpu.matmul %20, %21, %cst_10 {dimension_numbers = #tpu.dot_dimension_numbers<[1], [0], [0], [1], [0, 0, 1, 1], [], []>} : vector<128x128xbf16>, vector<128x128xbf16>, vector<128x128xf32> -> vector<128x128xf32>
      %23 = math.tanh %22 : vector<128x128xf32>
      %c0_11 = arith.constant 0 : index
      %c0_12 = arith.constant 0 : index
      %24 = vector.load %arg8[%c0_11, %c0_12] : memref<128x128xf32, #tpu.memory_space<vmem>>, vector<128x128xf32>
      tpu.vector_store %arg8[%c0_11, %c0_12], %23 {strides = array<i32>} : memref<128x128xf32, #tpu.memory_space<vmem>>, vector<128x128xf32>,
    } else {
    }
    return
  }
  func.func @transform_0(%arg0: i32, %arg1: i32, %arg2: memref<2xi32, #tpu.memory_space<smem>>, %arg3: memref<2xi32, #tpu.memory_space<smem>>) -> (i32, i32) {
    %0 = arith.index_cast %arg0 : i32 to index
    %1 = memref.load %arg2[%0] : memref<2xi32, #tpu.memory_space<smem>>
    %2 = arith.addi %1, %arg1 : i32
    %c0_i32 = arith.constant 0 : i32
    %3 = arith.minsi %2, %c0_i32 : i32
    %c0_i32_0 = arith.constant 0 : i32
    %c0_i32_1 = arith.constant 0 : i32
    return %c0_i32_0, %3 : i32, i32
  }
  func.func @transform_1(%arg0: i32, %arg1: i32, %arg2: memref<2xi32, #tpu.memory_space<smem>>, %arg3: memref<2xi32, #tpu.memory_space<smem>>) -> (i32, i32) {
    %c0_i32 = arith.constant 0 : i32
    %c0_i32_0 = arith.constant 0 : i32
    return %arg0, %c0_i32 : i32, i32
  }
  func.func @transform_2(%arg0: i32, %arg1: i32, %arg2: memref<2xi32, #tpu.memory_space<smem>>, %arg3: memref<2xi32, #tpu.memory_space<smem>>) -> (i32, i32) {
    %0 = arith.index_cast %arg0 : i32 to index
    %1 = memref.load %arg2[%0] : memref<2xi32, #tpu.memory_space<smem>>
    %2 = arith.addi %1, %arg1 : i32
    %c0_i32 = arith.constant 0 : i32
    %3 = arith.minsi %2, %c0_i32 : i32
    %c0_i32_0 = arith.constant 0 : i32
    %c0_i32_1 = arith.constant 0 : i32
    return %3, %c0_i32_0 : i32, i32
  }
  func.func @transform_3(%arg0: i32, %arg1: i32, %arg2: memref<2xi32, #tpu.memory_space<smem>>, %arg3: memref<2xi32, #tpu.memory_space<smem>>) -> (i32, i32) {
    %c0_i32 = arith.constant 0 : i32
    %c0_i32_0 = arith.constant 0 : i32
    %c0_i32_1 = arith.constant 0 : i32
    return %c0_i32, %c0_i32_0 : i32, i32
  }
  func.func @transform_4(%arg0: i32, %arg1: i32, %arg2: memref<2xi32, #tpu.memory_space<smem>>, %arg3: memref<2xi32, #tpu.memory_space<smem>>) -> (i32, i32) {
    %c0_i32 = arith.constant 0 : i32
    %c0_i32_0 = arith.constant 0 : i32
    return %arg0, %c0_i32 : i32, i32
  }
}

</mosaic_0001>

<llo_original>
// kernel: tpu_custom_call.1
$region0: #{tpu_custom_call.1}
  #allocation0 [shape = 'u32[]', space=smem, size = 0x4, offset = 0x4, fixed_abs, tag = 'smem constant byte address 0x4 - core index']
  #allocation1 [shape = 'u32[144,128]{1,0:T(1,128)}', space=vmem, size = 0x12000, scoped, tag = 'internal scratch']
  #allocation2 [shape = 'f32[128,1]{1,0:T(8,128)}', space=vmem, size = 0x10000, scoped, tag = 'scratch operand']
  #allocation3 [shape = 'f32[128,1]{1,0:T(8,128)}', space=vmem, size = 0x10000, scoped, tag = 'scratch operand']
  #allocation4 [shape = 'f32[128,128]{1,0:T(8,128)}', space=vmem, size = 0x10000, scoped, tag = 'scratch operand']
  #allocation5 [shape = 's32[1]{0}', space=sflag, size = 0x4, scoped, tag = 'scoped memory for tpu_custom_call.1']
  #allocation6 [shape = 'u8[512]{0}', space=smem, size = 0x200, scoped, tag = 'prefetched SMEM operand 0']
  #allocation7 [shape = 'u8[512]{0}', space=smem, size = 0x200, scoped, tag = 'prefetched SMEM operand 1']
  %s0 = inlined_call_operand.hbm [shape: s32[2], index: 0, kind: input, shape index: {}]
  %s1 = inlined_call_operand.vmem [shape: s32[2], index: 1, kind: input, shape index: {}]
  %s2 = inlined_call_operand.hbm [shape: s32[1,1024], index: 2, kind: input, shape index: {}]
  %s3 = inlined_call_operand.hbm [shape: bf16[256,128], index: 3, kind: input, shape index: {}]
  %s4 = inlined_call_operand.hbm [shape: bf16[1024,128], index: 4, kind: input, shape index: {}]
  %s5 = inlined_call_operand.hbm [shape: bf16[128,128], index: 5, kind: input, shape index: {}]
  %s6 = inlined_call_operand.hbm [shape: f32[256,128], index: 6, kind: output, shape index: {}]
  %s7 = sld [smem:[#allocation0]]
  $region77: #{tpu_custom_call.1} parent=0
    _
  %s9 = ssub.s32 1, %s7
  %s10 = scalar_select 0, %s9, %s7
  %12 = dma.hbm_to_smem %s0, 16, [#allocation6], [#allocation5]
  %s13 = sshll.u32 %s1, 4
  %s14 = int_to_ptr.vmem [resolvable:$true] %s13
  %16 = dma.vmem_to_smem %s14, 16, [#allocation7], [#allocation5]
  %17 = dma.done [#allocation5], 32
  %18 = sfence
  $region1: #{tpu_custom_call.1} parent=0
    #allocation8 [shape = 'u8[8192]{0}', space=vmem, size = 0x2000, scoped, tag = 'input window, operand 2']
    #allocation9 [shape = 's32[2]{0}', space=sflag, size = 0x8, scoped, tag = 'scoped memory for tpu_custom_call.1']
    #allocation10 [shape = 's32[2]{0}', space=sflag, size = 0x8, scoped, tag = 'scoped memory for tpu_custom_call.1']
    #allocation11 [shape = 'u8[65536]{0}', space=vmem, size = 0x10000, scoped, tag = 'input window, operand 3']
    #allocation12 [shape = 's32[2]{0}', space=sflag, size = 0x8, scoped, tag = 'scoped memory for tpu_custom_call.1']
    #allocation13 [shape = 'u8[524288]{0}', space=vmem, size = 0x80000, scoped, tag = 'input window, operand 4']
    #allocation14 [shape = 'u8[32768]{0}', space=vmem, size = 0x8000, scoped, tag = 'input window, operand 5, single buffered']
    #allocation15 [shape = 's32[1]{0}', space=sflag, size = 0x4, scoped, tag = 'scoped memory for tpu_custom_call.1']
    #allocation16 [shape = 'u8[131072]{0}', space=vmem, size = 0x20000, scoped, tag = 'output window, operand 0']
    %19 = vsyncpa [#allocation9], 0
    %s20 = scalar_lea.sflag [#allocation9], 1
    %21 = vsyncpa %s20, 0
    %22 = vsyncpa [#allocation12], 0
    %s23 = scalar_lea.sflag [#allocation12], 1
    %24 = vsyncpa %s23, 0
    %25 = vsyncpa [#allocation15], 0
    %26 = vsyncpa [#allocation10], 0
    %s27 = scalar_lea.sflag [#allocation10], 1
    %28 = vsyncpa %s27, 0
    loop: start=0, step=1, limit=4
    $region2: #{tpu_custom_call.1} parent=1 // loop_pre_header
      _
    $region3: #{tpu_custom_call.1} parent=1 // loop_header
      %s30 = sphi 0, %s34
      %p31 = scmp.ge.s32.totalorder %s30, 4
      %s37 = sphi 0, %s49
      %s38 = sphi 0, %s45
      %s39 = sphi 0, %s37
      %s40 = sphi 0, %s38
      %s41 = sphi 0, %s39
      %s42 = sphi 0, %s40
      %s60 = sphi 0, %s62
      %s63 = sphi 0, %s60
      %s64 = sphi 0, %s63
      %s80 = sphi 0, %s64
      %s86 = sphi 0, %s88
      %s89 = sphi 0, %s86
      %s90 = sphi 0, %s89
      %s106 = sphi 0, %s90
      %s120 = sphi 0, %s122
      %s123 = sphi 0, %s120
      %s124 = sphi 0, %s123
      %s140 = sphi 0, %s124
      %s144 = sphi 0, %s144
      %s146 = sphi 0, %s144
      %s147 = sphi 0, %s146
      %s161 = sphi 0, %s147
      %s167 = sphi 0, %s169
      %s170 = sphi 0, %s167
      %s171 = sphi 0, %s170
      %s187 = sphi 0, %s171
    $region4: #{tpu_custom_call.1} parent=1 // loop_header_branch
      %33 = sbr.rel (%p31) target = $region8
    $region5: #{tpu_custom_call.1} parent=1 // loop_body
      %s35 = ssub.s32 %s30, 1
      %s36 = ssub.s32 %s30, 2
      %s43 = sadd.s32 1, %s38
      %p44 = scmp.ge.s32.totalorder %s43, 1
      %s45 = scalar_select %p44, 0, %s43
      %s46 = sadd.s32 1, %s37
      %s47 = scalar_select %p44, %s46, %s37
      %p48 = scmp.ge.s32.totalorder %s47, 2
      %s49 = scalar_select %p48, 0, %s47
      %s50 = sld [smem:[#allocation6 + %s37]]
      %s51 = sadd.s32 %s50, %s38
      %p52 = scmp.lt.s32.totalorder %s51, 0
      %s53 = scalar_select %p52, %s51, 0
      %s54 = sld [smem:[#allocation6 + %s49]]
      %s55 = sadd.s32 %s54, %s45
      %p56 = scmp.lt.s32.totalorder %s55, 0
      %s57 = scalar_select %p56, %s55, 0
      %s58 = ssub.s32 %s53, %s57
      %p59 = scmp.eq.s32.totalorder %s58, 0
      %s61 = sadd.s32 %s60, 1
      %s62 = scalar_select %p59, %s60, %s61
      %p65 = pneg %p59
      %p66 = scmp.eq.s32.totalorder %s30, 1
      %p67 = por %p65, %p66
      %p68 = scmp.ne.s32.totalorder %s60, %s63
      %p69 = scmp.eq.s32.totalorder %s30, 0
      %p70 = por %p68, %p69
      %p71 = scmp.ne.s32.totalorder %s60, %s63
      %p72 = scmp.eq.s32.totalorder %s35, 1
      %p73 = por %p71, %p72
      %p74 = scmp.ne.s32.totalorder %s63, %s64
      %p75 = scmp.eq.s32.totalorder %s35, 0
      %p76 = por %p74, %p75
      %p77 = scmp.ne.s32.totalorder %s63, %s64
      %p78 = scmp.eq.s32.totalorder %s36, 1
      %p79 = por %p77, %p78
      %p81 = scmp.ne.s32.totalorder %s64, %s80
      %p82 = scmp.eq.s32.totalorder %s36, 0
      %p83 = por %p81, %p82
      %s84 = ssub.s32 %s37, %s49
      %p85 = scmp.eq.s32.totalorder %s84, 0
      %s87 = sadd.s32 %s86, 1
      %s88 = scalar_select %p85, %s86, %s87
      %p91 = pneg %p85
      %p92 = scmp.eq.s32.totalorder %s30, 1
      %p93 = por %p91, %p92
      %p94 = scmp.ne.s32.totalorder %s86, %s89
      %p95 = scmp.eq.s32.totalorder %s30, 0
      %p96 = por %p94, %p95
      %p97 = scmp.ne.s32.totalorder %s86, %s89
      %p98 = scmp.eq.s32.totalorder %s35, 1
      %p99 = por %p97, %p98
      %p100 = scmp.ne.s32.totalorder %s89, %s90
      %p101 = scmp.eq.s32.totalorder %s35, 0
      %p102 = por %p100, %p101
      %p103 = scmp.ne.s32.totalorder %s89, %s90
      %p104 = scmp.eq.s32.totalorder %s36, 1
      %p105 = por %p103, %p104
      %p107 = scmp.ne.s32.totalorder %s90, %s106
      %p108 = scmp.eq.s32.totalorder %s36, 0
      %p109 = por %p107, %p108
      %s110 = sld [smem:[#allocation6 + %s37]]
      %s111 = sadd.s32 %s110, %s38
      %p112 = scmp.lt.s32.totalorder %s111, 0
      %s113 = scalar_select %p112, %s111, 0
      %s114 = sld [smem:[#allocation6 + %s49]]
      %s115 = sadd.s32 %s114, %s45
      %p116 = scmp.lt.s32.totalorder %s115, 0
      %s117 = scalar_select %p116, %s115, 0
      %s118 = ssub.s32 %s113, %s117
      %p119 = scmp.eq.s32.totalorder %s118, 0
      %s121 = sadd.s32 %s120, 1
      %s122 = scalar_select %p119, %s120, %s121
      %p125 = pneg %p119
      %p126 = scmp.eq.s32.totalorder %s30, 1
      %p127 = por %p125, %p126
      %p128 = scmp.ne.s32.totalorder %s120, %s123
      %p129 = scmp.eq.s32.totalorder %s30, 0
      %p130 = por %p128, %p129
      %p131 = scmp.ne.s32.totalorder %s120, %s123
      %p132 = scmp.eq.s32.totalorder %s35, 1
      %p133 = por %p131, %p132
      %p134 = scmp.ne.s32.totalorder %s123, %s124
      %p135 = scmp.eq.s32.totalorder %s35, 0
      %p136 = por %p134, %p135
      %p137 = scmp.ne.s32.totalorder %s123, %s124
      %p138 = scmp.eq.s32.totalorder %s36, 1
      %p139 = por %p137, %p138
      %p141 = scmp.ne.s32.totalorder %s124, %s140
      %p142 = scmp.eq.s32.totalorder %s36, 0
      %p143 = por %p141, %p142
      %s145 = sadd.s32 %s144, 1
      %p148 = scmp.eq.s32.totalorder %s30, 1
      %p149 = scmp.ne.s32.totalorder %s144, %s146
      %p150 = scmp.eq.s32.totalorder %s30, 0
      %p151 = por %p149, %p150
      %p152 = scmp.ne.s32.totalorder %s144, %s146
      %p153 = scmp.eq.s32.totalorder %s35, 1
      %p154 = por %p152, %p153
      %p155 = scmp.ne.s32.totalorder %s146, %s147
      %p156 = scmp.eq.s32.totalorder %s35, 0
      %p157 = por %p155, %p156
      %p158 = scmp.ne.s32.totalorder %s146, %s147
      %p159 = scmp.eq.s32.totalorder %s36, 1
      %p160 = por %p158, %p159
      %p162 = scmp.ne.s32.totalorder %s147, %s161
      %p163 = scmp.eq.s32.totalorder %s36, 0
      %p164 = por %p162, %p163
      %s165 = ssub.s32 %s37, %s49
      %p166 = scmp.eq.s32.totalorder %s165, 0
      %s168 = sadd.s32 %s167, 1
      %s169 = scalar_select %p166, %s167, %s168
      %p172 = pneg %p166
      %p173 = scmp.eq.s32.totalorder %s30, 1
      %p174 = por %p172, %p173
      %p175 = scmp.ne.s32.totalorder %s167, %s170
      %p176 = scmp.eq.s32.totalorder %s30, 0
      %p177 = por %p175, %p176
      %p178 = scmp.ne.s32.totalorder %s167, %s170
      %p179 = scmp.eq.s32.totalorder %s35, 1
      %p180 = por %p178, %p179
      %p181 = scmp.ne.s32.totalorder %s170, %s171
      %p182 = scmp.eq.s32.totalorder %s35, 0
      %p183 = por %p181, %p182
      %p184 = scmp.ne.s32.totalorder %s170, %s171
      %p185 = scmp.eq.s32.totalorder %s36, 1
      %p186 = por %p184, %p185
      %p188 = scmp.ne.s32.totalorder %s171, %s187
      %p189 = scmp.eq.s32.totalorder %s36, 0
      %p190 = por %p188, %p189
      %p191 = scmp.le.s32.totalorder 1, %s30
      %p192 = scmp.lt.s32.totalorder %s30, 3
      %p193 = pnand %p191, %p192
      %p194 = pneg %p193
      // Predicated region
      $region9: #{tpu_custom_call.1} parent=5 // pred_check
        _
      $region10: #{tpu_custom_call.1} parent=5 // pred_check_branch
        %196 = sbr.rel (%p193) target = $region12
      $region11: #{tpu_custom_call.1} parent=5 // pred_region
        %s197 = ssub.s32 %s30, 1
        // Predicated region
        $region13: #{tpu_custom_call.1} parent=11 // pred_check
          %p198 = pneg %p157
        $region14: #{tpu_custom_call.1} parent=11 // pred_check_branch
          %200 = sbr.rel (%p198) target = $region16
        $region15: #{tpu_custom_call.1} parent=11 // pred_region
          %s202 = ssub.s32 1024, 1024
          %203 = vsyncadd [#allocation15], %s202
          %s204 = sshll.u32 [#allocation14], 4
          %s205 = int_to_ptr.vmem [resolvable:$true] %s204
          %210 = dma.hbm_to_vmem [thread:$0]  %s5, 1024, %s205, [#allocation15], 64, 64, 4
        $region16: #{tpu_custom_call.1} parent=11 // pred_fallthru
          _
      $region12: #{tpu_custom_call.1} parent=5 // pred_fallthru
        _
      %p211 = scmp.lt.s32.totalorder %s30, 2
      // Predicated region
      $region17: #{tpu_custom_call.1} parent=5 // pred_check
        %p212 = pneg %p211
      $region18: #{tpu_custom_call.1} parent=5 // pred_check_branch
        %214 = sbr.rel (%p212) target = $region20
      $region19: #{tpu_custom_call.1} parent=5 // pred_region
        // Predicated region
        $region21: #{tpu_custom_call.1} parent=19 // pred_check
          %p215 = pneg %p70
        $region22: #{tpu_custom_call.1} parent=19 // pred_check_branch
          %217 = sbr.rel (%p215) target = $region24
        $region23: #{tpu_custom_call.1} parent=19 // pred_region
          %s218 = sand.u32 %s60, 1
          %s219 = scalar_lea.sflag [#allocation9], %s218
          %s220 = sand.u32 %s60, 1
          %s221 = smul.addr %s220, 8
          %s222 = scalar_lea.vmem [#allocation8], %s221
          %s223 = sld [smem:[#allocation6 + %s37]]
          %s224 = sadd.s32 %s223, %s38
          %p225 = scmp.lt.s32.totalorder %s224, 0
          %s226 = scalar_select %p225, %s224, 0
          %s227 = smul.u32 8, %s226
          %s229 = ssub.s32 128, 128
          %230 = vsyncadd %s219, %s229
          %s231 = smul.addr %s227, 16
          %s232 = scalar_lea.hbm %s2, %s231
          %s234 = sshll.u32 %s222, 4
          %s235 = int_to_ptr.vmem [resolvable:$true] %s234
          %237 = dma.hbm_to_vmem [thread:$0]  %s232, 128, %s235, %s219
        $region24: #{tpu_custom_call.1} parent=19 // pred_fallthru
          _
        // Predicated region
        $region25: #{tpu_custom_call.1} parent=19 // pred_check
          %p238 = pneg %p96
        $region26: #{tpu_custom_call.1} parent=19 // pred_check_branch
          %240 = sbr.rel (%p238) target = $region28
        $region27: #{tpu_custom_call.1} parent=19 // pred_region
          %s241 = sand.u32 %s30, 1
          %s242 = scalar_lea.sflag [#allocation12], %s241
          %s243 = sand.u32 %s86, 1
          %s244 = smul.addr %s243, 64
          %s245 = scalar_lea.vmem [#allocation11], %s244
          %s246 = smul.u32 16, %s37
          %s248 = ssub.s32 1024, 1024
          %249 = vsyncadd %s242, %s248
          %s250 = smul.addr %s246, 64
          %s251 = scalar_lea.hbm %s3, %s250
          %s252 = sshll.u32 %s245, 4
          %s253 = int_to_ptr.vmem [resolvable:$true] %s252
          %258 = dma.hbm_to_vmem [thread:$0]  %s251, 1024, %s253, %s242, 64, 64, 4
        $region28: #{tpu_custom_call.1} parent=19 // pred_fallthru
          _
        // Predicated region
        $region29: #{tpu_custom_call.1} parent=19 // pred_check
          %p259 = pneg %p130
        $region30: #{tpu_custom_call.1} parent=19 // pred_check_branch
          %261 = sbr.rel (%p259) target = $region32
        $region31: #{tpu_custom_call.1} parent=19 // pred_region
          %s262 = sand.u32 %s30, 1
          %s263 = scalar_lea.sflag [#allocation12], %s262
          %s264 = sand.u32 %s120, 1
          %s265 = smul.addr %s264, 512
          %s266 = scalar_lea.vmem [#allocation13], %s265
          %s267 = sld [smem:[#allocation6 + %s37]]
          %s268 = sadd.s32 %s267, %s38
          %p269 = scmp.lt.s32.totalorder %s268, 0
          %s270 = scalar_select %p269, %s268, 0
          %s271 = smul.u32 128, %s270
          %s273 = ssub.s32 8192, 8192
          %274 = vsyncadd %s263, %s273
          %s275 = smul.addr %s271, 64
          %s276 = scalar_lea.hbm %s4, %s275
          %s277 = sshll.u32 %s266, 4
          %s278 = int_to_ptr.vmem [resolvable:$true] %s277
          %283 = dma.hbm_to_vmem [thread:$0]  %s276, 8192, %s278, %s263, 64, 64, 4
        $region32: #{tpu_custom_call.1} parent=19 // pred_fallthru
          _
      $region20: #{tpu_custom_call.1} parent=5 // pred_fallthru
        _
      %p284 = scmp.le.s32.totalorder 1, %s30
      %p285 = scmp.lt.s32.totalorder %s30, 3
      %p286 = pnand %p284, %p285
      %p287 = pneg %p286
      // Predicated region
      $region33: #{tpu_custom_call.1} parent=5 // pred_check
        _
      $region34: #{tpu_custom_call.1} parent=5 // pred_check_branch
        %289 = sbr.rel (%p286) target = $region36
      $region35: #{tpu_custom_call.1} parent=5 // pred_region
        %s290 = ssub.s32 %s30, 1
        %s291 = sand.u32 %s63, 1
        %s292 = scalar_lea.sflag [#allocation9], %s291
        %s293 = sand.u32 %s63, 1
        %s294 = smul.addr %s293, 8
        %s295 = scalar_lea.vmem [#allocation8], %s294
        // Predicated region
        $region37: #{tpu_custom_call.1} parent=35 // pred_check
          %p296 = pneg %p76
        $region38: #{tpu_custom_call.1} parent=35 // pred_check_branch
          %298 = sbr.rel (%p296) target = $region40
        $region39: #{tpu_custom_call.1} parent=35 // pred_region
          %299 = dma.done %s292, 128
        $region40: #{tpu_custom_call.1} parent=35 // pred_fallthru
          _
        %s300 = sand.u32 %s35, 1
        %s301 = scalar_lea.sflag [#allocation12], %s300
        %s302 = sand.u32 %s89, 1
        %s303 = smul.addr %s302, 64
        %s304 = scalar_lea.vmem [#allocation11], %s303
        // Predicated region
        $region41: #{tpu_custom_call.1} parent=35 // pred_check
          %p305 = pneg %p102
        $region42: #{tpu_custom_call.1} parent=35 // pred_check_branch
          %307 = sbr.rel (%p305) target = $region44
        $region43: #{tpu_custom_call.1} parent=35 // pred_region
          %308 = dma.done %s301, 1024
        $region44: #{tpu_custom_call.1} parent=35 // pred_fallthru
          _
        %s309 = sand.u32 %s35, 1
        %s310 = scalar_lea.sflag [#allocation12], %s309
        %s311 = sand.u32 %s123, 1
        %s312 = smul.addr %s311, 512
        %s313 = scalar_lea.vmem [#allocation13], %s312
        // Predicated region
        $region45: #{tpu_custom_call.1} parent=35 // pred_check
          %p314 = pneg %p136
        $region46: #{tpu_custom_call.1} parent=35 // pred_check_branch
          %316 = sbr.rel (%p314) target = $region48
        $region47: #{tpu_custom_call.1} parent=35 // pred_region
          %317 = dma.done %s310, 8192
        $region48: #{tpu_custom_call.1} parent=35 // pred_fallthru
          _
        // Predicated region
        $region49: #{tpu_custom_call.1} parent=35 // pred_check
          %p318 = pneg %p157
        $region50: #{tpu_custom_call.1} parent=35 // pred_check_branch
          %320 = sbr.rel (%p318) target = $region52
        $region51: #{tpu_custom_call.1} parent=35 // pred_region
          %321 = dma.done [#allocation15], 1024
        $region52: #{tpu_custom_call.1} parent=35 // pred_fallthru
          _
        %s322 = sand.u32 %s63, 1
        %s323 = scalar_lea.sflag [#allocation9], %s322
        %s324 = sand.u32 %s63, 1
        %s325 = smul.addr %s324, 8
        %s326 = scalar_lea.vmem [#allocation8], %s325
        %p327 = pneg %p76
        %p328 = pneg %p73
        %s329 = sand.u32 %s35, 1
        %s330 = scalar_lea.sflag [#allocation12], %s329
        %s331 = sand.u32 %s89, 1
        %s332 = smul.addr %s331, 64
        %s333 = scalar_lea.vmem [#allocation11], %s332
        %p334 = pneg %p102
        %p335 = pneg %p99
        %s336 = sand.u32 %s35, 1
        %s337 = scalar_lea.sflag [#allocation12], %s336
        %s338 = sand.u32 %s123, 1
        %s339 = smul.addr %s338, 512
        %s340 = scalar_lea.vmem [#allocation13], %s339
        %p341 = pneg %p136
        %p342 = pneg %p133
        %p343 = pneg %p157
        %p344 = pneg %p154
        %p345 = pneg %p183
        %p346 = pneg %p180
        %s347 = sand.u32 %s170, 1
        %s348 = scalar_lea.sflag [#allocation10], %s347
        %s349 = sand.u32 %s170, 1
        %s350 = smul.addr %s349, 128
        %s351 = scalar_lea.vmem [#allocation16], %s350
        %s352 = sld [smem:[#allocation6 + %s39]]
        %s353 = sadd.s32 %s352, %s40
        %p354 = scmp.lt.s32.totalorder %s353, 0
        %s355 = scalar_select %p354, %s353, 0
        %s356 = smul.u32 8, %s355
        %s357 = smul.u32 16, %s39
        %s358 = sld [smem:[#allocation6 + %s39]]
        %s359 = sadd.s32 %s358, %s40
        %p360 = scmp.lt.s32.totalorder %s359, 0
        %s361 = scalar_select %p360, %s359, 0
        %s362 = smul.u32 128, %s361
        %s363 = smul.u32 16, %s39
        %p365 = scmp.eq.s32.totalorder %s40, 0
        // Predicated region
        $region53: #{tpu_custom_call.1} parent=35 // pred_check
          %p366 = pneg %p365
        $region54: #{tpu_custom_call.1} parent=35 // pred_check_branch
          %368 = sbr.rel (%p366) target = $region56
        $region55: #{tpu_custom_call.1} parent=35 // pred_region
          %vm369 = vcmask 7168
          %370 = vst.msk [vmem:[#allocation2] sm:$0xff] %vm369, -1e+30
          %371 = vst.msk [vmem:[#allocation2 + $0x8] sm:$0xff] %vm369, -1e+30
          %372 = vst.msk [vmem:[#allocation2 + $0x10] sm:$0xff] %vm369, -1e+30
          %373 = vst.msk [vmem:[#allocation2 + $0x18] sm:$0xff] %vm369, -1e+30
          %374 = vst.msk [vmem:[#allocation2 + $0x20] sm:$0xff] %vm369, -1e+30
          %375 = vst.msk [vmem:[#allocation2 + $0x28] sm:$0xff] %vm369, -1e+30
          %376 = vst.msk [vmem:[#allocation2 + $0x30] sm:$0xff] %vm369, -1e+30
          %377 = vst.msk [vmem:[#allocation2 + $0x38] sm:$0xff] %vm369, -1e+30
          %378 = vst.msk [vmem:[#allocation2 + $0x40] sm:$0xff] %vm369, -1e+30
          %379 = vst.msk [vmem:[#allocation2 + $0x48] sm:$0xff] %vm369, -1e+30
          %380 = vst.msk [vmem:[#allocation2 + $0x50] sm:$0xff] %vm369, -1e+30
          %381 = vst.msk [vmem:[#allocation2 + $0x58] sm:$0xff] %vm369, -1e+30
          %382 = vst.msk [vmem:[#allocation2 + $0x60] sm:$0xff] %vm369, -1e+30
          %383 = vst.msk [vmem:[#allocation2 + $0x68] sm:$0xff] %vm369, -1e+30
          %384 = vst.msk [vmem:[#allocation2 + $0x70] sm:$0xff] %vm369, -1e+30
          %385 = vst.msk [vmem:[#allocation2 + $0x78] sm:$0xff] %vm369, -1e+30
          %386 = vst.msk [vmem:[#allocation3] sm:$0xff] %vm369, 0.0
          %387 = vst.msk [vmem:[#allocation3 + $0x8] sm:$0xff] %vm369, 0.0
          %388 = vst.msk [vmem:[#allocation3 + $0x10] sm:$0xff] %vm369, 0.0
          %389 = vst.msk [vmem:[#allocation3 + $0x18] sm:$0xff] %vm369, 0.0
          %390 = vst.msk [vmem:[#allocation3 + $0x20] sm:$0xff] %vm369, 0.0
          %391 = vst.msk [vmem:[#allocation3 + $0x28] sm:$0xff] %vm369, 0.0
          %392 = vst.msk [vmem:[#allocation3 + $0x30] sm:$0xff] %vm369, 0.0
          %393 = vst.msk [vmem:[#allocation3 + $0x38] sm:$0xff] %vm369, 0.0
          %394 = vst.msk [vmem:[#allocation3 + $0x40] sm:$0xff] %vm369, 0.0
          %395 = vst.msk [vmem:[#allocation3 + $0x48] sm:$0xff] %vm369, 0.0
          %396 = vst.msk [vmem:[#allocation3 + $0x50] sm:$0xff] %vm369, 0.0
          %397 = vst.msk [vmem:[#allocation3 + $0x58] sm:$0xff] %vm369, 0.0
          %398 = vst.msk [vmem:[#allocation3 + $0x60] sm:$0xff] %vm369, 0.0
          %399 = vst.msk [vmem:[#allocation3 + $0x68] sm:$0xff] %vm369, 0.0
          %400 = vst.msk [vmem:[#allocation3 + $0x70] sm:$0xff] %vm369, 0.0
          %401 = vst.msk [vmem:[#allocation3 + $0x78] sm:$0xff] %vm369, 0.0
          %402 = vst [vmem:[#allocation4] sm:$0xff] 0.0
          %403 = vst [vmem:[#allocation4 + $0x8] sm:$0xff] 0.0
          %404 = vst [vmem:[#allocation4 + $0x10] sm:$0xff] 0.0
          %405 = vst [vmem:[#allocation4 + $0x18] sm:$0xff] 0.0
          %406 = vst [vmem:[#allocation4 + $0x20] sm:$0xff] 0.0
          %407 = vst [vmem:[#allocation4 + $0x28] sm:$0xff] 0.0
          %408 = vst [vmem:[#allocation4 + $0x30] sm:$0xff] 0.0
          %409 = vst [vmem:[#allocation4 + $0x38] sm:$0xff] 0.0
          %410 = vst [vmem:[#allocation4 + $0x40] sm:$0xff] 0.0
          %411 = vst [vmem:[#allocation4 + $0x48] sm:$0xff] 0.0
          %412 = vst [vmem:[#allocation4 + $0x50] sm:$0xff] 0.0
          %413 = vst [vmem:[#allocation4 + $0x58] sm:$0xff] 0.0
          %414 = vst [vmem:[#allocation4 + $0x60] sm:$0xff] 0.0
          %415 = vst [vmem:[#allocation4 + $0x68] sm:$0xff] 0.0
          %416 = vst [vmem:[#allocation4 + $0x70] sm:$0xff] 0.0
          %417 = vst [vmem:[#allocation4 + $0x78] sm:$0xff] 0.0
        $region56: #{tpu_custom_call.1} parent=35 // pred_fallthru
          _
        %s418 = sld [smem:[#allocation7 + %s39]]
        %p419 = scmp.lt.s32.totalorder %s40, %s418
        // Predicated region
        $region57: #{tpu_custom_call.1} parent=35 // pred_check
          %p420 = pneg %p419
        $region58: #{tpu_custom_call.1} parent=35 // pred_check_branch
          %422 = sbr.rel (%p420) target = $region60
        $region59: #{tpu_custom_call.1} parent=35 // pred_region
          %v423 = vld [vmem:[%s304] sm:$0xf]
          %v424 = vld [vmem:[%s304 + $0x4] sm:$0xf]
          %v425 = vld [vmem:[%s304 + $0x8] sm:$0xf]
          %v426 = vld [vmem:[%s304 + $0xc] sm:$0xf]
          %v427 = vld [vmem:[%s304 + $0x10] sm:$0xf]
          %v428 = vld [vmem:[%s304 + $0x14] sm:$0xf]
          %v429 = vld [vmem:[%s304 + $0x18] sm:$0xf]
          %v430 = vld [vmem:[%s304 + $0x1c] sm:$0xf]
          %v431 = vld [vmem:[%s304 + $0x20] sm:$0xf]
          %v432 = vld [vmem:[%s304 + $0x24] sm:$0xf]
          %v433 = vld [vmem:[%s304 + $0x28] sm:$0xf]
          %v434 = vld [vmem:[%s304 + $0x2c] sm:$0xf]
          %v435 = vld [vmem:[%s304 + $0x30] sm:$0xf]
          %v436 = vld [vmem:[%s304 + $0x34] sm:$0xf]
          %v437 = vld [vmem:[%s304 + $0x38] sm:$0xf]
          %v438 = vld [vmem:[%s304 + $0x3c] sm:$0xf]
          %v439 = vld [vmem:[%s313] sm:$0xf]
          %v440 = vld [vmem:[%s313 + $0x4] sm:$0xf]
          %v441 = vld [vmem:[%s313 + $0x8] sm:$0xf]
          %v442 = vld [vmem:[%s313 + $0xc] sm:$0xf]
          %v443 = vld [vmem:[%s313 + $0x10] sm:$0xf]
          %v444 = vld [vmem:[%s313 + $0x14] sm:$0xf]
          %v445 = vld [vmem:[%s313 + $0x18] sm:$0xf]
          %v446 = vld [vmem:[%s313 + $0x1c] sm:$0xf]
          %v447 = vld [vmem:[%s313 + $0x20] sm:$0xf]
          %v448 = vld [vmem:[%s313 + $0x24] sm:$0xf]
          %v449 = vld [vmem:[%s313 + $0x28] sm:$0xf]
          %v450 = vld [vmem:[%s313 + $0x2c] sm:$0xf]
          %v451 = vld [vmem:[%s313 + $0x30] sm:$0xf]
          %v452 = vld [vmem:[%s313 + $0x34] sm:$0xf]
          %v453 = vld [vmem:[%s313 + $0x38] sm:$0xf]
          %v454 = vld [vmem:[%s313 + $0x3c] sm:$0xf]
          %v455 = vld [vmem:[%s313 + $0x40] sm:$0xf]
          %v456 = vld [vmem:[%s313 + $0x44] sm:$0xf]
          %v457 = vld [vmem:[%s313 + $0x48] sm:$0xf]
          %v458 = vld [vmem:[%s313 + $0x4c] sm:$0xf]
          %v459 = vld [vmem:[%s313 + $0x50] sm:$0xf]
          %v460 = vld [vmem:[%s313 + $0x54] sm:$0xf]
          %v461 = vld [vmem:[%s313 + $0x58] sm:$0xf]
          %v462 = vld [vmem:[%s313 + $0x5c] sm:$0xf]
          %v463 = vld [vmem:[%s313 + $0x60] sm:$0xf]
          %v464 = vld [vmem:[%s313 + $0x64] sm:$0xf]
          %v465 = vld [vmem:[%s313 + $0x68] sm:$0xf]
          %v466 = vld [vmem:[%s313 + $0x6c] sm:$0xf]
          %v467 = vld [vmem:[%s313 + $0x70] sm:$0xf]
          %v468 = vld [vmem:[%s313 + $0x74] sm:$0xf]
          %v469 = vld [vmem:[%s313 + $0x78] sm:$0xf]
          %v470 = vld [vmem:[%s313 + $0x7c] sm:$0xf]
          %v471 = vld [vmem:[%s313 + $0x80] sm:$0xf]
          %v472 = vld [vmem:[%s313 + $0x84] sm:$0xf]
          %v473 = vld [vmem:[%s313 + $0x88] sm:$0xf]
          %v474 = vld [vmem:[%s313 + $0x8c] sm:$0xf]
          %v475 = vld [vmem:[%s313 + $0x90] sm:$0xf]
          %v476 = vld [vmem:[%s313 + $0x94] sm:$0xf]
          %v477 = vld [vmem:[%s313 + $0x98] sm:$0xf]
          %v478 = vld [vmem:[%s313 + $0x9c] sm:$0xf]
          %v479 = vld [vmem:[%s313 + $0xa0] sm:$0xf]
          %v480 = vld [vmem:[%s313 + $0xa4] sm:$0xf]
          %v481 = vld [vmem:[%s313 + $0xa8] sm:$0xf]
          %v482 = vld [vmem:[%s313 + $0xac] sm:$0xf]
          %v483 = vld [vmem:[%s313 + $0xb0] sm:$0xf]
          %v484 = vld [vmem:[%s313 + $0xb4] sm:$0xf]
          %v485 = vld [vmem:[%s313 + $0xb8] sm:$0xf]
          %v486 = vld [vmem:[%s313 + $0xbc] sm:$0xf]
          %v487 = vld [vmem:[%s313 + $0xc0] sm:$0xf]
          %v488 = vld [vmem:[%s313 + $0xc4] sm:$0xf]
          %v489 = vld [vmem:[%s313 + $0xc8] sm:$0xf]
          %v490 = vld [vmem:[%s313 + $0xcc] sm:$0xf]
          %v491 = vld [vmem:[%s313 + $0xd0] sm:$0xf]
          %v492 = vld [vmem:[%s313 + $0xd4] sm:$0xf]
          %v493 = vld [vmem:[%s313 + $0xd8] sm:$0xf]
          %v494 = vld [vmem:[%s313 + $0xdc] sm:$0xf]
          %v495 = vld [vmem:[%s313 + $0xe0] sm:$0xf]
          %v496 = vld [vmem:[%s313 + $0xe4] sm:$0xf]
          %v497 = vld [vmem:[%s313 + $0xe8] sm:$0xf]
          %v498 = vld [vmem:[%s313 + $0xec] sm:$0xf]
          %v499 = vld [vmem:[%s313 + $0xf0] sm:$0xf]
          %v500 = vld [vmem:[%s313 + $0xf4] sm:$0xf]
          %v501 = vld [vmem:[%s313 + $0xf8] sm:$0xf]
          %v502 = vld [vmem:[%s313 + $0xfc] sm:$0xf]
          %v503 = vld [vmem:[%s313 + $0x100] sm:$0xf]
          %v504 = vld [vmem:[%s313 + $0x104] sm:$0xf]
          %v505 = vld [vmem:[%s313 + $0x108] sm:$0xf]
          %v506 = vld [vmem:[%s313 + $0x10c] sm:$0xf]
          %v507 = vld [vmem:[%s313 + $0x110] sm:$0xf]
          %v508 = vld [vmem:[%s313 + $0x114] sm:$0xf]
          %v509 = vld [vmem:[%s313 + $0x118] sm:$0xf]
          %v510 = vld [vmem:[%s313 + $0x11c] sm:$0xf]
          %v511 = vld [vmem:[%s313 + $0x120] sm:$0xf]
          %v512 = vld [vmem:[%s313 + $0x124] sm:$0xf]
          %v513 = vld [vmem:[%s313 + $0x128] sm:$0xf]
          %v514 = vld [vmem:[%s313 + $0x12c] sm:$0xf]
          %v515 = vld [vmem:[%s313 + $0x130] sm:$0xf]
          %v516 = vld [vmem:[%s313 + $0x134] sm:$0xf]
          %v517 = vld [vmem:[%s313 + $0x138] sm:$0xf]
          %v518 = vld [vmem:[%s313 + $0x13c] sm:$0xf]
          %v519 = vld [vmem:[%s313 + $0x140] sm:$0xf]
          %v520 = vld [vmem:[%s313 + $0x144] sm:$0xf]
          %v521 = vld [vmem:[%s313 + $0x148] sm:$0xf]
          %v522 = vld [vmem:[%s313 + $0x14c] sm:$0xf]
          %v523 = vld [vmem:[%s313 + $0x150] sm:$0xf]
          %v524 = vld [vmem:[%s313 + $0x154] sm:$0xf]
          %v525 = vld [vmem:[%s313 + $0x158] sm:$0xf]
          %v526 = vld [vmem:[%s313 + $0x15c] sm:$0xf]
          %v527 = vld [vmem:[%s313 + $0x160] sm:$0xf]
          %v528 = vld [vmem:[%s313 + $0x164] sm:$0xf]
          %v529 = vld [vmem:[%s313 + $0x168] sm:$0xf]
          %v530 = vld [vmem:[%s313 + $0x16c] sm:$0xf]
          %v531 = vld [vmem:[%s313 + $0x170] sm:$0xf]
          %v532 = vld [vmem:[%s313 + $0x174] sm:$0xf]
          %v533 = vld [vmem:[%s313 + $0x178] sm:$0xf]
          %v534 = vld [vmem:[%s313 + $0x17c] sm:$0xf]
          %v535 = vld [vmem:[%s313 + $0x180] sm:$0xf]
          %v536 = vld [vmem:[%s313 + $0x184] sm:$0xf]
          %v537 = vld [vmem:[%s313 + $0x188] sm:$0xf]
          %v538 = vld [vmem:[%s313 + $0x18c] sm:$0xf]
          %v539 = vld [vmem:[%s313 + $0x190] sm:$0xf]
          %v540 = vld [vmem:[%s313 + $0x194] sm:$0xf]
          %v541 = vld [vmem:[%s313 + $0x198] sm:$0xf]
          %v542 = vld [vmem:[%s313 + $0x19c] sm:$0xf]
          %v543 = vld [vmem:[%s313 + $0x1a0] sm:$0xf]
          %v544 = vld [vmem:[%s313 + $0x1a4] sm:$0xf]
          %v545 = vld [vmem:[%s313 + $0x1a8] sm:$0xf]
          %v546 = vld [vmem:[%s313 + $0x1ac] sm:$0xf]
          %v547 = vld [vmem:[%s313 + $0x1b0] sm:$0xf]
          %v548 = vld [vmem:[%s313 + $0x1b4] sm:$0xf]
          %v549 = vld [vmem:[%s313 + $0x1b8] sm:$0xf]
          %v550 = vld [vmem:[%s313 + $0x1bc] sm:$0xf]
          %v551 = vld [vmem:[%s313 + $0x1c0] sm:$0xf]
          %v552 = vld [vmem:[%s313 + $0x1c4] sm:$0xf]
          %v553 = vld [vmem:[%s313 + $0x1c8] sm:$0xf]
          %v554 = vld [vmem:[%s313 + $0x1cc] sm:$0xf]
          %v555 = vld [vmem:[%s313 + $0x1d0] sm:$0xf]
          %v556 = vld [vmem:[%s313 + $0x1d4] sm:$0xf]
          %v557 = vld [vmem:[%s313 + $0x1d8] sm:$0xf]
          %v558 = vld [vmem:[%s313 + $0x1dc] sm:$0xf]
          %v559 = vld [vmem:[%s313 + $0x1e0] sm:$0xf]
          %v560 = vld [vmem:[%s313 + $0x1e4] sm:$0xf]
          %v561 = vld [vmem:[%s313 + $0x1e8] sm:$0xf]
          %v562 = vld [vmem:[%s313 + $0x1ec] sm:$0xf]
          %v563 = vld [vmem:[%s313 + $0x1f0] sm:$0xf]
          %v564 = vld [vmem:[%s313 + $0x1f4] sm:$0xf]
          %v565 = vld [vmem:[%s313 + $0x1f8] sm:$0xf]
          %v566 = vld [vmem:[%s313 + $0x1fc] sm:$0xf]
          %v567 = vld [vmem:[%s295] sm:$0xff]
          %v584 = vunpack.c.l.b16 %v423
          %v585 = vunpack.c.l.b16 %v424
          %v586 = vunpack.c.l.b16 %v425
          %v587 = vunpack.c.l.b16 %v426
          %v588 = vunpack.c.l.b16 %v427
          %v589 = vunpack.c.l.b16 %v428
          %v590 = vunpack.c.l.b16 %v429
          %v591 = vunpack.c.l.b16 %v430
          %v592 = vunpack.c.l.b16 %v431
          %v593 = vunpack.c.l.b16 %v432
          %v594 = vunpack.c.l.b16 %v433
          %v595 = vunpack.c.l.b16 %v434
          %v596 = vunpack.c.l.b16 %v435
          %v597 = vunpack.c.l.b16 %v436
          %v598 = vunpack.c.l.b16 %v437
          %v599 = vunpack.c.l.b16 %v438
          %v600 = vpack.c.b16 %v585, %v584
          %v601 = vpack.c.b16 %v587, %v586
          %v602 = vpack.c.b16 %v589, %v588
          %v603 = vpack.c.b16 %v591, %v590
          %v604 = vpack.c.b16 %v593, %v592
          %v605 = vpack.c.b16 %v595, %v594
          %v606 = vpack.c.b16 %v597, %v596
          %v607 = vpack.c.b16 %v599, %v598
          %v744 = vunpack.c.l.b16 %v439
          %v745 = vunpack.c.l.b16 %v440
          %v746 = vunpack.c.l.b16 %v441
          %v747 = vunpack.c.l.b16 %v442
          %v748 = vunpack.c.l.b16 %v443
          %v749 = vunpack.c.l.b16 %v444
          %v750 = vunpack.c.l.b16 %v445
          %v751 = vunpack.c.l.b16 %v446
          %v752 = vunpack.c.l.b16 %v447
          %v753 = vunpack.c.l.b16 %v448
          %v754 = vunpack.c.l.b16 %v449
          %v755 = vunpack.c.l.b16 %v450
          %v756 = vunpack.c.l.b16 %v451
          %v757 = vunpack.c.l.b16 %v452
          %v758 = vunpack.c.l.b16 %v453
          %v759 = vunpack.c.l.b16 %v454
          %v760 = vunpack.c.l.b16 %v455
          %v761 = vunpack.c.l.b16 %v456
          %v762 = vunpack.c.l.b16 %v457
          %v763 = vunpack.c.l.b16 %v458
          %v764 = vunpack.c.l.b16 %v459
          %v765 = vunpack.c.l.b16 %v460
          %v766 = vunpack.c.l.b16 %v461
          %v767 = vunpack.c.l.b16 %v462
          %v768 = vunpack.c.l.b16 %v463
          %v769 = vunpack.c.l.b16 %v464
          %v770 = vunpack.c.l.b16 %v465
          %v771 = vunpack.c.l.b16 %v466
          %v772 = vunpack.c.l.b16 %v467
          %v773 = vunpack.c.l.b16 %v468
          %v774 = vunpack.c.l.b16 %v469
          %v775 = vunpack.c.l.b16 %v470
          %v776 = vunpack.c.l.b16 %v471
          %v777 = vunpack.c.l.b16 %v472
          %v778 = vunpack.c.l.b16 %v473
          %v779 = vunpack.c.l.b16 %v474
          %v780 = vunpack.c.l.b16 %v475
          %v781 = vunpack.c.l.b16 %v476
          %v782 = vunpack.c.l.b16 %v477
          %v783 = vunpack.c.l.b16 %v478
          %v784 = vunpack.c.l.b16 %v479
          %v785 = vunpack.c.l.b16 %v480
          %v786 = vunpack.c.l.b16 %v481
          %v787 = vunpack.c.l.b16 %v482
          %v788 = vunpack.c.l.b16 %v483
          %v789 = vunpack.c.l.b16 %v484
          %v790 = vunpack.c.l.b16 %v485
          %v791 = vunpack.c.l.b16 %v486
          %v792 = vunpack.c.l.b16 %v487
          %v793 = vunpack.c.l.b16 %v488
          %v794 = vunpack.c.l.b16 %v489
          %v795 = vunpack.c.l.b16 %v490
          %v796 = vunpack.c.l.b16 %v491
          %v797 = vunpack.c.l.b16 %v492
          %v798 = vunpack.c.l.b16 %v493
          %v799 = vunpack.c.l.b16 %v494
          %v800 = vunpack.c.l.b16 %v495
          %v801 = vunpack.c.l.b16 %v496
          %v802 = vunpack.c.l.b16 %v497
          %v803 = vunpack.c.l.b16 %v498
          %v804 = vunpack.c.l.b16 %v499
          %v805 = vunpack.c.l.b16 %v500
          %v806 = vunpack.c.l.b16 %v501
          %v807 = vunpack.c.l.b16 %v502
          %v808 = vunpack.c.l.b16 %v503
          %v809 = vunpack.c.l.b16 %v504
          %v810 = vunpack.c.l.b16 %v505
          %v811 = vunpack.c.l.b16 %v506
          %v812 = vunpack.c.l.b16 %v507
          %v813 = vunpack.c.l.b16 %v508
          %v814 = vunpack.c.l.b16 %v509
          %v815 = vunpack.c.l.b16 %v510
          %v816 = vunpack.c.l.b16 %v511
          %v817 = vunpack.c.l.b16 %v512
          %v818 = vunpack.c.l.b16 %v513
          %v819 = vunpack.c.l.b16 %v514
          %v820 = vunpack.c.l.b16 %v515
          %v821 = vunpack.c.l.b16 %v516
          %v822 = vunpack.c.l.b16 %v517
          %v823 = vunpack.c.l.b16 %v518
          %v824 = vunpack.c.l.b16 %v519
          %v825 = vunpack.c.l.b16 %v520
          %v826 = vunpack.c.l.b16 %v521
          %v827 = vunpack.c.l.b16 %v522
          %v828 = vunpack.c.l.b16 %v523
          %v829 = vunpack.c.l.b16 %v524
          %v830 = vunpack.c.l.b16 %v525
          %v831 = vunpack.c.l.b16 %v526
          %v832 = vunpack.c.l.b16 %v527
          %v833 = vunpack.c.l.b16 %v528
          %v834 = vunpack.c.l.b16 %v529
          %v835 = vunpack.c.l.b16 %v530
          %v836 = vunpack.c.l.b16 %v531
          %v837 = vunpack.c.l.b16 %v532
          %v838 = vunpack.c.l.b16 %v533
          %v839 = vunpack.c.l.b16 %v534
          %v840 = vunpack.c.l.b16 %v535
          %v841 = vunpack.c.l.b16 %v536
          %v842 = vunpack.c.l.b16 %v537
          %v843 = vunpack.c.l.b16 %v538
          %v844 = vunpack.c.l.b16 %v539
          %v845 = vunpack.c.l.b16 %v540
          %v846 = vunpack.c.l.b16 %v541
          %v847 = vunpack.c.l.b16 %v542
          %v848 = vunpack.c.l.b16 %v543
          %v849 = vunpack.c.l.b16 %v544
          %v850 = vunpack.c.l.b16 %v545
          %v851 = vunpack.c.l.b16 %v546
          %v852 = vunpack.c.l.b16 %v547
          %v853 = vunpack.c.l.b16 %v548
          %v854 = vunpack.c.l.b16 %v549
          %v855 = vunpack.c.l.b16 %v550
          %v856 = vunpack.c.l.b16 %v551
          %v857 = vunpack.c.l.b16 %v552
          %v858 = vunpack.c.l.b16 %v553
          %v859 = vunpack.c.l.b16 %v554
          %v860 = vunpack.c.l.b16 %v555
          %v861 = vunpack.c.l.b16 %v556
          %v862 = vunpack.c.l.b16 %v557
          %v863 = vunpack.c.l.b16 %v558
          %v864 = vunpack.c.l.b16 %v559
          %v865 = vunpack.c.l.b16 %v560
          %v866 = vunpack.c.l.b16 %v561
          %v867 = vunpack.c.l.b16 %v562
          %v868 = vunpack.c.l.b16 %v563
          %v869 = vunpack.c.l.b16 %v564
          %v870 = vunpack.c.l.b16 %v565
          %v871 = vunpack.c.l.b16 %v566
          %v872 = vpack.c.b16 %v745, %v744
          %v873 = vpack.c.b16 %v747, %v746
          %v874 = vpack.c.b16 %v749, %v748
          %v875 = vpack.c.b16 %v751, %v750
          %v876 = vpack.c.b16 %v753, %v752
          %v877 = vpack.c.b16 %v755, %v754
          %v878 = vpack.c.b16 %v757, %v756
          %v879 = vpack.c.b16 %v759, %v758
          %v880 = vpack.c.b16 %v761, %v760
          %v881 = vpack.c.b16 %v763, %v762
          %v882 = vpack.c.b16 %v765, %v764
          %v883 = vpack.c.b16 %v767, %v766
          %v884 = vpack.c.b16 %v769, %v768
          %v885 = vpack.c.b16 %v771, %v770
          %v886 = vpack.c.b16 %v773, %v772
          %v887 = vpack.c.b16 %v775, %v774
          %v888 = vpack.c.b16 %v777, %v776
          %v889 = vpack.c.b16 %v779, %v778
          %v890 = vpack.c.b16 %v781, %v780
          %v891 = vpack.c.b16 %v783, %v782
          %v892 = vpack.c.b16 %v785, %v784
          %v893 = vpack.c.b16 %v787, %v786
          %v894 = vpack.c.b16 %v789, %v788
          %v895 = vpack.c.b16 %v791, %v790
          %v896 = vpack.c.b16 %v793, %v792
          %v897 = vpack.c.b16 %v795, %v794
          %v898 = vpack.c.b16 %v797, %v796
          %v899 = vpack.c.b16 %v799, %v798
          %v900 = vpack.c.b16 %v801, %v800
          %v901 = vpack.c.b16 %v803, %v802
          %v902 = vpack.c.b16 %v805, %v804
          %v903 = vpack.c.b16 %v807, %v806
          %v904 = vpack.c.b16 %v809, %v808
          %v905 = vpack.c.b16 %v811, %v810
          %v906 = vpack.c.b16 %v813, %v812
          %v907 = vpack.c.b16 %v815, %v814
          %v908 = vpack.c.b16 %v817, %v816
          %v909 = vpack.c.b16 %v819, %v818
          %v910 = vpack.c.b16 %v821, %v820
          %v911 = vpack.c.b16 %v823, %v822
          %v912 = vpack.c.b16 %v825, %v824
          %v913 = vpack.c.b16 %v827, %v826
          %v914 = vpack.c.b16 %v829, %v828
          %v915 = vpack.c.b16 %v831, %v830
          %v916 = vpack.c.b16 %v833, %v832
          %v917 = vpack.c.b16 %v835, %v834
          %v918 = vpack.c.b16 %v837, %v836
          %v919 = vpack.c.b16 %v839, %v838
          %v920 = vpack.c.b16 %v841, %v840
          %v921 = vpack.c.b16 %v843, %v842
          %v922 = vpack.c.b16 %v845, %v844
          %v923 = vpack.c.b16 %v847, %v846
          %v924 = vpack.c.b16 %v849, %v848
          %v925 = vpack.c.b16 %v851, %v850
          %v926 = vpack.c.b16 %v853, %v852
          %v927 = vpack.c.b16 %v855, %v854
          %v928 = vpack.c.b16 %v857, %v856
          %v929 = vpack.c.b16 %v859, %v858
          %v930 = vpack.c.b16 %v861, %v860
          %v931 = vpack.c.b16 %v863, %v862
          %v932 = vpack.c.b16 %v865, %v864
          %v933 = vpack.c.b16 %v867, %v866
          %v934 = vpack.c.b16 %v869, %v868
          %v935 = vpack.c.b16 %v871, %v870
          %1000 = vmatprep.subr.bf16.mxu0 0
          %1001 = vmatpush1.bf16.xpose.msra.mxu0 %v872
          %1002 = vmatprep.subr.bf16.mxu0 0
          %1003 = vmatpush1.bf16.xpose.msra.mxu0 %v873
          %1004 = vmatprep.subr.bf16.mxu0 0
          %1005 = vmatpush1.bf16.xpose.msra.mxu0 %v874
          %1006 = vmatprep.subr.bf16.mxu0 0
          %1007 = vmatpush1.bf16.xpose.msra.mxu0 %v875
          %1008 = vmatprep.subr.bf16.mxu0 0
          %1009 = vmatpush1.bf16.xpose.msra.mxu0 %v876
          %1010 = vmatprep.subr.bf16.mxu0 0
          %1011 = vmatpush1.bf16.xpose.msra.mxu0 %v877
          %1012 = vmatprep.subr.bf16.mxu0 0
          %1013 = vmatpush1.bf16.xpose.msra.mxu0 %v878
          %1014 = vmatprep.subr.bf16.mxu0 0
          %1015 = vmatpush1.bf16.xpose.msra.mxu0 %v879
          %1016 = vmatprep.subr.bf16.mxu0 0
          %1017 = vmatpush1.bf16.xpose.msra.mxu0 %v880
          %1018 = vmatprep.subr.bf16.mxu0 0
          %1019 = vmatpush1.bf16.xpose.msra.mxu0 %v881
          %1020 = vmatprep.subr.bf16.mxu0 0
          %1021 = vmatpush1.bf16.xpose.msra.mxu0 %v882
          %1022 = vmatprep.subr.bf16.mxu0 0
          %1023 = vmatpush1.bf16.xpose.msra.mxu0 %v883
          %1024 = vmatprep.subr.bf16.mxu0 0
          %1025 = vmatpush1.bf16.xpose.msra.mxu0 %v884
          %1026 = vmatprep.subr.bf16.mxu0 0
          %1027 = vmatpush1.bf16.xpose.msra.mxu0 %v885
          %1028 = vmatprep.subr.bf16.mxu0 0
          %1029 = vmatpush1.bf16.xpose.msra.mxu0 %v886
          %1030 = vmatprep.subr.bf16.mxu0 0
          %1031 = vmatpush1.bf16.xpose.msra.mxu0 %v887
          %1032 = vmatprep.mubr.bf16.mxu0 0
          %1033 = vmatmul.mubr.bf16.gmra.mrb[0].mxu0 %v600
          %v1034 = vpop.f32.mrb[0].mxu0
          %v1035 = vadd.f32 0.0, %v1034
          %v1036 = vpop.f32.mrb[0].mxu0
          %v1037 = vadd.f32 0.0, %v1036
          %v1038 = vpop.f32.mrb[0].mxu0
          %v1039 = vadd.f32 0.0, %v1038
          %v1040 = vpop.f32.mrb[0].mxu0
          %v1041 = vadd.f32 0.0, %v1040
          %1042 = vmatprep.mubr.bf16.mxu0 0
          %1043 = vmatmul.mubr.bf16.gmra.mrb[0].mxu0 %v601
          %v1044 = vpop.f32.mrb[0].mxu0
          %v1045 = vadd.f32 0.0, %v1044
          %v1046 = vpop.f32.mrb[0].mxu0
          %v1047 = vadd.f32 0.0, %v1046
          %v1048 = vpop.f32.mrb[0].mxu0
          %v1049 = vadd.f32 0.0, %v1048
          %v1050 = vpop.f32.mrb[0].mxu0
          %v1051 = vadd.f32 0.0, %v1050
          %1052 = vmatprep.mubr.bf16.mxu0 0
          %1053 = vmatmul.mubr.bf16.gmra.mrb[0].mxu0 %v602
          %v1054 = vpop.f32.mrb[0].mxu0
          %v1055 = vadd.f32 0.0, %v1054
          %v1056 = vpop.f32.mrb[0].mxu0
          %v1057 = vadd.f32 0.0, %v1056
          %v1058 = vpop.f32.mrb[0].mxu0
          %v1059 = vadd.f32 0.0, %v1058
          %v1060 = vpop.f32.mrb[0].mxu0
          %v1061 = vadd.f32 0.0, %v1060
          %1062 = vmatprep.mubr.bf16.mxu0 0
          %1063 = vmatmul.mubr.bf16.gmra.mrb[0].mxu0 %v603
          %v1064 = vpop.f32.mrb[0].mxu0
          %v1065 = vadd.f32 0.0, %v1064
          %v1066 = vpop.f32.mrb[0].mxu0
          %v1067 = vadd.f32 0.0, %v1066
          %v1068 = vpop.f32.mrb[0].mxu0
          %v1069 = vadd.f32 0.0, %v1068
          %v1070 = vpop.f32.mrb[0].mxu0
          %v1071 = vadd.f32 0.0, %v1070
          %1072 = vmatprep.mubr.bf16.mxu0 0
          %1073 = vmatmul.mubr.bf16.gmra.mrb[0].mxu0 %v604
          %v1074 = vpop.f32.mrb[0].mxu0
          %v1075 = vadd.f32 0.0, %v1074
          %v1076 = vpop.f32.mrb[0].mxu0
          %v1077 = vadd.f32 0.0, %v1076
          %v1078 = vpop.f32.mrb[0].mxu0
          %v1079 = vadd.f32 0.0, %v1078
          %v1080 = vpop.f32.mrb[0].mxu0
          %v1081 = vadd.f32 0.0, %v1080
          %1082 = vmatprep.mubr.bf16.mxu0 0
          %1083 = vmatmul.mubr.bf16.gmra.mrb[0].mxu0 %v605
          %v1084 = vpop.f32.mrb[0].mxu0
          %v1085 = vadd.f32 0.0, %v1084
          %v1086 = vpop.f32.mrb[0].mxu0
          %v1087 = vadd.f32 0.0, %v1086
          %v1088 = vpop.f32.mrb[0].mxu0
          %v1089 = vadd.f32 0.0, %v1088
          %v1090 = vpop.f32.mrb[0].mxu0
          %v1091 = vadd.f32 0.0, %v1090
          %1092 = vmatprep.mubr.bf16.mxu0 0
          %1093 = vmatmul.mubr.bf16.gmra.mrb[0].mxu0 %v606
          %v1094 = vpop.f32.mrb[0].mxu0
          %v1095 = vadd.f32 0.0, %v1094
          %v1096 = vpop.f32.mrb[0].mxu0
          %v1097 = vadd.f32 0.0, %v1096
          %v1098 = vpop.f32.mrb[0].mxu0
          %v1099 = vadd.f32 0.0, %v1098
          %v1100 = vpop.f32.mrb[0].mxu0
          %v1101 = vadd.f32 0.0, %v1100
          %1102 = vmatprep.mubr.bf16.mxu0 0
          %1103 = vmatmul.mubr.bf16.gmra.mrb[0].mxu0 %v607
          %v1104 = vpop.f32.mrb[0].mxu0
          %v1105 = vadd.f32 0.0, %v1104
          %v1106 = vpop.f32.mrb[0].mxu0
          %v1107 = vadd.f32 0.0, %v1106
          %v1108 = vpop.f32.mrb[0].mxu0
          %v1109 = vadd.f32 0.0, %v1108
          %v1110 = vpop.f32.mrb[0].mxu0
          %v1111 = vadd.f32 0.0, %v1110
          %1112 = vdwg.mxu0
          %1113 = vmatprep.subr.bf16.mxu0 0
          %1114 = vmatpush1.bf16.xpose.msra.mxu0 %v888
          %1115 = vmatprep.subr.bf16.mxu0 0
          %1116 = vmatpush1.bf16.xpose.msra.mxu0 %v889
          %1117 = vmatprep.subr.bf16.mxu0 0
          %1118 = vmatpush1.bf16.xpose.msra.mxu0 %v890
          %1119 = vmatprep.subr.bf16.mxu0 0
          %1120 = vmatpush1.bf16.xpose.msra.mxu0 %v891
          %1121 = vmatprep.subr.bf16.mxu0 0
          %1122 = vmatpush1.bf16.xpose.msra.mxu0 %v892
          %1123 = vmatprep.subr.bf16.mxu0 0
          %1124 = vmatpush1.bf16.xpose.msra.mxu0 %v893
          %1125 = vmatprep.subr.bf16.mxu0 0
          %1126 = vmatpush1.bf16.xpose.msra.mxu0 %v894
          %1127 = vmatprep.subr.bf16.mxu0 0
          %1128 = vmatpush1.bf16.xpose.msra.mxu0 %v895
          %1129 = vmatprep.subr.bf16.mxu0 0
          %1130 = vmatpush1.bf16.xpose.msra.mxu0 %v896
          %1131 = vmatprep.subr.bf16.mxu0 0
          %1132 = vmatpush1.bf16.xpose.msra.mxu0 %v897
          %1133 = vmatprep.subr.bf16.mxu0 0
          %1134 = vmatpush1.bf16.xpose.msra.mxu0 %v898
          %1135 = vmatprep.subr.bf16.mxu0 0
          %1136 = vmatpush1.bf16.xpose.msra.mxu0 %v899
          %1137 = vmatprep.subr.bf16.mxu0 0
          %1138 = vmatpush1.bf16.xpose.msra.mxu0 %v900
          %1139 = vmatprep.subr.bf16.mxu0 0
          %1140 = vmatpush1.bf16.xpose.msra.mxu0 %v901
          %1141 = vmatprep.subr.bf16.mxu0 0
          %1142 = vmatpush1.bf16.xpose.msra.mxu0 %v902
          %1143 = vmatprep.subr.bf16.mxu0 0
          %1144 = vmatpush1.bf16.xpose.msra.mxu0 %v903
          %1145 = vmatprep.mubr.bf16.mxu0 0
          %1146 = vmatmul.mubr.bf16.gmra.mrb[0].mxu0 %v600
          %v1147 = vpop.f32.mrb[0].mxu0
          %v1148 = vadd.f32 0.0, %v1147
          %v1149 = vpop.f32.mrb[0].mxu0
          %v1150 = vadd.f32 0.0, %v1149
          %v1151 = vpop.f32.mrb[0].mxu0
          %v1152 = vadd.f32 0.0, %v1151
          %v1153 = vpop.f32.mrb[0].mxu0
          %v1154 = vadd.f32 0.0, %v1153
          %1155 = vmatprep.mubr.bf16.mxu0 0
          %1156 = vmatmul.mubr.bf16.gmra.mrb[0].mxu0 %v601
          %v1157 = vpop.f32.mrb[0].mxu0
          %v1158 = vadd.f32 0.0, %v1157
          %v1159 = vpop.f32.mrb[0].mxu0
          %v1160 = vadd.f32 0.0, %v1159
          %v1161 = vpop.f32.mrb[0].mxu0
          %v1162 = vadd.f32 0.0, %v1161
          %v1163 = vpop.f32.mrb[0].mxu0
          %v1164 = vadd.f32 0.0, %v1163
          %1165 = vmatprep.mubr.bf16.mxu0 0
          %1166 = vmatmul.mubr.bf16.gmra.mrb[0].mxu0 %v602
          %v1167 = vpop.f32.mrb[0].mxu0
          %v1168 = vadd.f32 0.0, %v1167
          %v1169 = vpop.f32.mrb[0].mxu0
          %v1170 = vadd.f32 0.0, %v1169
          %v1171 = vpop.f32.mrb[0].mxu0
          %v1172 = vadd.f32 0.0, %v1171
          %v1173 = vpop.f32.mrb[0].mxu0
          %v1174 = vadd.f32 0.0, %v1173
          %1175 = vmatprep.mubr.bf16.mxu0 0
          %1176 = vmatmul.mubr.bf16.gmra.mrb[0].mxu0 %v603
          %v1177 = vpop.f32.mrb[0].mxu0
          %v1178 = vadd.f32 0.0, %v1177
          %v1179 = vpop.f32.mrb[0].mxu0
          %v1180 = vadd.f32 0.0, %v1179
          %v1181 = vpop.f32.mrb[0].mxu0
          %v1182 = vadd.f32 0.0, %v1181
          %v1183 = vpop.f32.mrb[0].mxu0
          %v1184 = vadd.f32 0.0, %v1183
          %1185 = vmatprep.mubr.bf16.mxu0 0
          %1186 = vmatmul.mubr.bf16.gmra.mrb[0].mxu0 %v604
          %v1187 = vpop.f32.mrb[0].mxu0
          %v1188 = vadd.f32 0.0, %v1187
          %v1189 = vpop.f32.mrb[0].mxu0
          %v1190 = vadd.f32 0.0, %v1189
          %v1191 = vpop.f32.mrb[0].mxu0
          %v1192 = vadd.f32 0.0, %v1191
          %v1193 = vpop.f32.mrb[0].mxu0
          %v1194 = vadd.f32 0.0, %v1193
          %1195 = vmatprep.mubr.bf16.mxu0 0
          %1196 = vmatmul.mubr.bf16.gmra.mrb[0].mxu0 %v605
          %v1197 = vpop.f32.mrb[0].mxu0
          %v1198 = vadd.f32 0.0, %v1197
          %v1199 = vpop.f32.mrb[0].mxu0
          %v1200 = vadd.f32 0.0, %v1199
          %v1201 = vpop.f32.mrb[0].mxu0
          %v1202 = vadd.f32 0.0, %v1201
          %v1203 = vpop.f32.mrb[0].mxu0
          %v1204 = vadd.f32 0.0, %v1203
          %1205 = vmatprep.mubr.bf16.mxu0 0
          %1206 = vmatmul.mubr.bf16.gmra.mrb[0].mxu0 %v606
          %v1207 = vpop.f32.mrb[0].mxu0
          %v1208 = vadd.f32 0.0, %v1207
          %v1209 = vpop.f32.mrb[0].mxu0
          %v1210 = vadd.f32 0.0, %v1209
          %v1211 = vpop.f32.mrb[0].mxu0
          %v1212 = vadd.f32 0.0, %v1211
          %v1213 = vpop.f32.mrb[0].mxu0
          %v1214 = vadd.f32 0.0, %v1213
          %1215 = vmatprep.mubr.bf16.mxu0 0
          %1216 = vmatmul.mubr.bf16.gmra.mrb[0].mxu0 %v607
          %v1217 = vpop.f32.mrb[0].mxu0
          %v1218 = vadd.f32 0.0, %v1217
          %v1219 = vpop.f32.mrb[0].mxu0
          %v1220 = vadd.f32 0.0, %v1219
          %v1221 = vpop.f32.mrb[0].mxu0
          %v1222 = vadd.f32 0.0, %v1221
          %v1223 = vpop.f32.mrb[0].mxu0
          %v1224 = vadd.f32 0.0, %v1223
          %1225 = vdwg.mxu0
          %1226 = vmatprep.subr.bf16.mxu0 0
          %1227 = vmatpush1.bf16.xpose.msra.mxu0 %v904
          %1228 = vmatprep.subr.bf16.mxu0 0
          %1229 = vmatpush1.bf16.xpose.msra.mxu0 %v905
          %1230 = vmatprep.subr.bf16.mxu0 0
          %1231 = vmatpush1.bf16.xpose.msra.mxu0 %v906
          %1232 = vmatprep.subr.bf16.mxu0 0
          %1233 = vmatpush1.bf16.xpose.msra.mxu0 %v907
          %1234 = vmatprep.subr.bf16.mxu0 0
          %1235 = vmatpush1.bf16.xpose.msra.mxu0 %v908
          %1236 = vmatprep.subr.bf16.mxu0 0
          %1237 = vmatpush1.bf16.xpose.msra.mxu0 %v909
          %1238 = vmatprep.subr.bf16.mxu0 0
          %1239 = vmatpush1.bf16.xpose.msra.mxu0 %v910
          %1240 = vmatprep.subr.bf16.mxu0 0
          %1241 = vmatpush1.bf16.xpose.msra.mxu0 %v911
          %1242 = vmatprep.subr.bf16.mxu0 0
          %1243 = vmatpush1.bf16.xpose.msra.mxu0 %v912
          %1244 = vmatprep.subr.bf16.mxu0 0
          %1245 = vmatpush1.bf16.xpose.msra.mxu0 %v913
          %1246 = vmatprep.subr.bf16.mxu0 0
          %1247 = vmatpush1.bf16.xpose.msra.mxu0 %v914
          %1248 = vmatprep.subr.bf16.mxu0 0
          %1249 = vmatpush1.bf16.xpose.msra.mxu0 %v915
          %1250 = vmatprep.subr.bf16.mxu0 0
          %1251 = vmatpush1.bf16.xpose.msra.mxu0 %v916
          %1252 = vmatprep.subr.bf16.mxu0 0
          %1253 = vmatpush1.bf16.xpose.msra.mxu0 %v917
          %1254 = vmatprep.subr.bf16.mxu0 0
          %1255 = vmatpush1.bf16.xpose.msra.mxu0 %v918
          %1256 = vmatprep.subr.bf16.mxu0 0
          %1257 = vmatpush1.bf16.xpose.msra.mxu0 %v919
          %1258 = vmatprep.mubr.bf16.mxu0 0
          %1259 = vmatmul.mubr.bf16.gmra.mrb[0].mxu0 %v600
          %v1260 = vpop.f32.mrb[0].mxu0
          %v1261 = vadd.f32 0.0, %v1260
          %v1262 = vpop.f32.mrb[0].mxu0
          %v1263 = vadd.f32 0.0, %v1262
          %v1264 = vpop.f32.mrb[0].mxu0
          %v1265 = vadd.f32 0.0, %v1264
          %v1266 = vpop.f32.mrb[0].mxu0
          %v1267 = vadd.f32 0.0, %v1266
          %1268 = vmatprep.mubr.bf16.mxu0 0
          %1269 = vmatmul.mubr.bf16.gmra.mrb[0].mxu0 %v601
          %v1270 = vpop.f32.mrb[0].mxu0
          %v1271 = vadd.f32 0.0, %v1270
          %v1272 = vpop.f32.mrb[0].mxu0
          %v1273 = vadd.f32 0.0, %v1272
          %v1274 = vpop.f32.mrb[0].mxu0
          %v1275 = vadd.f32 0.0, %v1274
          %v1276 = vpop.f32.mrb[0].mxu0
          %v1277 = vadd.f32 0.0, %v1276
          %1278 = vmatprep.mubr.bf16.mxu0 0
          %1279 = vmatmul.mubr.bf16.gmra.mrb[0].mxu0 %v602
          %v1280 = vpop.f32.mrb[0].mxu0
          %v1281 = vadd.f32 0.0, %v1280
          %v1282 = vpop.f32.mrb[0].mxu0
          %v1283 = vadd.f32 0.0, %v1282
          %v1284 = vpop.f32.mrb[0].mxu0
          %v1285 = vadd.f32 0.0, %v1284
          %v1286 = vpop.f32.mrb[0].mxu0
          %v1287 = vadd.f32 0.0, %v1286
          %1288 = vmatprep.mubr.bf16.mxu0 0
          %1289 = vmatmul.mubr.bf16.gmra.mrb[0].mxu0 %v603
          %v1290 = vpop.f32.mrb[0].mxu0
          %v1291 = vadd.f32 0.0, %v1290
          %v1292 = vpop.f32.mrb[0].mxu0
          %v1293 = vadd.f32 0.0, %v1292
          %v1294 = vpop.f32.mrb[0].mxu0
          %v1295 = vadd.f32 0.0, %v1294
          %v1296 = vpop.f32.mrb[0].mxu0
          %v1297 = vadd.f32 0.0, %v1296
          %1298 = vmatprep.mubr.bf16.mxu0 0
          %1299 = vmatmul.mubr.bf16.gmra.mrb[0].mxu0 %v604
          %v1300 = vpop.f32.mrb[0].mxu0
          %v1301 = vadd.f32 0.0, %v1300
          %v1302 = vpop.f32.mrb[0].mxu0
          %v1303 = vadd.f32 0.0, %v1302
          %v1304 = vpop.f32.mrb[0].mxu0
          %v1305 = vadd.f32 0.0, %v1304
          %v1306 = vpop.f32.mrb[0].mxu0
          %v1307 = vadd.f32 0.0, %v1306
          %1308 = vmatprep.mubr.bf16.mxu0 0
          %1309 = vmatmul.mubr.bf16.gmra.mrb[0].mxu0 %v605
          %v1310 = vpop.f32.mrb[0].mxu0
          %v1311 = vadd.f32 0.0, %v1310
          %v1312 = vpop.f32.mrb[0].mxu0
          %v1313 = vadd.f32 0.0, %v1312
          %v1314 = vpop.f32.mrb[0].mxu0
          %v1315 = vadd.f32 0.0, %v1314
          %v1316 = vpop.f32.mrb[0].mxu0
          %v1317 = vadd.f32 0.0, %v1316
          %1318 = vmatprep.mubr.bf16.mxu0 0
          %1319 = vmatmul.mubr.bf16.gmra.mrb[0].mxu0 %v606
          %v1320 = vpop.f32.mrb[0].mxu0
          %v1321 = vadd.f32 0.0, %v1320
          %v1322 = vpop.f32.mrb[0].mxu0
          %v1323 = vadd.f32 0.0, %v1322
          %v1324 = vpop.f32.mrb[0].mxu0
          %v1325 = vadd.f32 0.0, %v1324
          %v1326 = vpop.f32.mrb[0].mxu0
          %v1327 = vadd.f32 0.0, %v1326
          %1328 = vmatprep.mubr.bf16.mxu0 0
          %1329 = vmatmul.mubr.bf16.gmra.mrb[0].mxu0 %v607
          %v1330 = vpop.f32.mrb[0].mxu0
          %v1331 = vadd.f32 0.0, %v1330
          %v1332 = vpop.f32.mrb[0].mxu0
          %v1333 = vadd.f32 0.0, %v1332
          %v1334 = vpop.f32.mrb[0].mxu0
          %v1335 = vadd.f32 0.0, %v1334
          %v1336 = vpop.f32.mrb[0].mxu0
          %v1337 = vadd.f32 0.0, %v1336
          %1338 = vdwg.mxu0
          %1339 = vmatprep.subr.bf16.mxu0 0
          %1340 = vmatpush1.bf16.xpose.msra.mxu0 %v920
          %1341 = vmatprep.subr.bf16.mxu0 0
          %1342 = vmatpush1.bf16.xpose.msra.mxu0 %v921
          %1343 = vmatprep.subr.bf16.mxu0 0
          %1344 = vmatpush1.bf16.xpose.msra.mxu0 %v922
          %1345 = vmatprep.subr.bf16.mxu0 0
          %1346 = vmatpush1.bf16.xpose.msra.mxu0 %v923
          %1347 = vmatprep.subr.bf16.mxu0 0
          %1348 = vmatpush1.bf16.xpose.msra.mxu0 %v924
          %1349 = vmatprep.subr.bf16.mxu0 0
          %1350 = vmatpush1.bf16.xpose.msra.mxu0 %v925
          %1351 = vmatprep.subr.bf16.mxu0 0
          %1352 = vmatpush1.bf16.xpose.msra.mxu0 %v926
          %1353 = vmatprep.subr.bf16.mxu0 0
          %1354 = vmatpush1.bf16.xpose.msra.mxu0 %v927
          %1355 = vmatprep.subr.bf16.mxu0 0
          %1356 = vmatpush1.bf16.xpose.msra.mxu0 %v928
          %1357 = vmatprep.subr.bf16.mxu0 0
          %1358 = vmatpush1.bf16.xpose.msra.mxu0 %v929
          %1359 = vmatprep.subr.bf16.mxu0 0
          %1360 = vmatpush1.bf16.xpose.msra.mxu0 %v930
          %1361 = vmatprep.subr.bf16.mxu0 0
          %1362 = vmatpush1.bf16.xpose.msra.mxu0 %v931
          %1363 = vmatprep.subr.bf16.mxu0 0
          %1364 = vmatpush1.bf16.xpose.msra.mxu0 %v932
          %1365 = vmatprep.subr.bf16.mxu0 0
          %1366 = vmatpush1.bf16.xpose.msra.mxu0 %v933
          %1367 = vmatprep.subr.bf16.mxu0 0
          %1368 = vmatpush1.bf16.xpose.msra.mxu0 %v934
          %1369 = vmatprep.subr.bf16.mxu0 0
          %1370 = vmatpush1.bf16.xpose.msra.mxu0 %v935
          %1371 = vmatprep.mubr.bf16.mxu0 0
          %1372 = vmatmul.mubr.bf16.gmra.mrb[0].mxu0 %v600
          %v1373 = vpop.f32.mrb[0].mxu0
          %v1374 = vadd.f32 0.0, %v1373
          %v1375 = vpop.f32.mrb[0].mxu0
          %v1376 = vadd.f32 0.0, %v1375
          %v1377 = vpop.f32.mrb[0].mxu0
          %v1378 = vadd.f32 0.0, %v1377
          %v1379 = vpop.f32.mrb[0].mxu0
          %v1380 = vadd.f32 0.0, %v1379
          %1381 = vmatprep.mubr.bf16.mxu0 0
          %1382 = vmatmul.mubr.bf16.gmra.mrb[0].mxu0 %v601
          %v1383 = vpop.f32.mrb[0].mxu0
          %v1384 = vadd.f32 0.0, %v1383
          %v1385 = vpop.f32.mrb[0].mxu0
          %v1386 = vadd.f32 0.0, %v1385
          %v1387 = vpop.f32.mrb[0].mxu0
          %v1388 = vadd.f32 0.0, %v1387
          %v1389 = vpop.f32.mrb[0].mxu0
          %v1390 = vadd.f32 0.0, %v1389
          %1391 = vmatprep.mubr.bf16.mxu0 0
          %1392 = vmatmul.mubr.bf16.gmra.mrb[0].mxu0 %v602
          %v1393 = vpop.f32.mrb[0].mxu0
          %v1394 = vadd.f32 0.0, %v1393
          %v1395 = vpop.f32.mrb[0].mxu0
          %v1396 = vadd.f32 0.0, %v1395
          %v1397 = vpop.f32.mrb[0].mxu0
          %v1398 = vadd.f32 0.0, %v1397
          %v1399 = vpop.f32.mrb[0].mxu0
          %v1400 = vadd.f32 0.0, %v1399
          %1401 = vmatprep.mubr.bf16.mxu0 0
          %1402 = vmatmul.mubr.bf16.gmra.mrb[0].mxu0 %v603
          %v1403 = vpop.f32.mrb[0].mxu0
          %v1404 = vadd.f32 0.0, %v1403
          %v1405 = vpop.f32.mrb[0].mxu0
          %v1406 = vadd.f32 0.0, %v1405
          %v1407 = vpop.f32.mrb[0].mxu0
          %v1408 = vadd.f32 0.0, %v1407
          %v1409 = vpop.f32.mrb[0].mxu0
          %v1410 = vadd.f32 0.0, %v1409
          %1411 = vmatprep.mubr.bf16.mxu0 0
          %1412 = vmatmul.mubr.bf16.gmra.mrb[0].mxu0 %v604
          %v1413 = vpop.f32.mrb[0].mxu0
          %v1414 = vadd.f32 0.0, %v1413
          %v1415 = vpop.f32.mrb[0].mxu0
          %v1416 = vadd.f32 0.0, %v1415
          %v1417 = vpop.f32.mrb[0].mxu0
          %v1418 = vadd.f32 0.0, %v1417
          %v1419 = vpop.f32.mrb[0].mxu0
          %v1420 = vadd.f32 0.0, %v1419
          %1421 = vmatprep.mubr.bf16.mxu0 0
          %1422 = vmatmul.mubr.bf16.gmra.mrb[0].mxu0 %v605
          %v1423 = vpop.f32.mrb[0].mxu0
          %v1424 = vadd.f32 0.0, %v1423
          %v1425 = vpop.f32.mrb[0].mxu0
          %v1426 = vadd.f32 0.0, %v1425
          %v1427 = vpop.f32.mrb[0].mxu0
          %v1428 = vadd.f32 0.0, %v1427
          %v1429 = vpop.f32.mrb[0].mxu0
          %v1430 = vadd.f32 0.0, %v1429
          %1431 = vmatprep.mubr.bf16.mxu0 0
          %1432 = vmatmul.mubr.bf16.gmra.mrb[0].mxu0 %v606
          %v1433 = vpop.f32.mrb[0].mxu0
          %v1434 = vadd.f32 0.0, %v1433
          %v1435 = vpop.f32.mrb[0].mxu0
          %v1436 = vadd.f32 0.0, %v1435
          %v1437 = vpop.f32.mrb[0].mxu0
          %v1438 = vadd.f32 0.0, %v1437
          %v1439 = vpop.f32.mrb[0].mxu0
          %v1440 = vadd.f32 0.0, %v1439
          %1441 = vmatprep.mubr.bf16.mxu0 0
          %1442 = vmatmul.mubr.bf16.gmra.mrb[0].mxu0 %v607
          %v1443 = vpop.f32.mrb[0].mxu0
          %v1444 = vadd.f32 0.0, %v1443
          %v1445 = vpop.f32.mrb[0].mxu0
          %v1446 = vadd.f32 0.0, %v1445
          %v1447 = vpop.f32.mrb[0].mxu0
          %v1448 = vadd.f32 0.0, %v1447
          %v1449 = vpop.f32.mrb[0].mxu0
          %v1450 = vadd.f32 0.0, %v1449
          %1451 = vdwg.mxu0
          %v1452 = vlaneseq
          %v1453 = vshrl.u32 %v1452, 7
          %v1454 = vadd.s32 %v1453, 8
          %v1455 = vadd.s32 %v1453, 16
          %v1456 = vadd.s32 %v1453, 24
          %v1457 = vadd.s32 %v1453, 32
          %v1458 = vadd.s32 %v1453, 40
          %v1459 = vadd.s32 %v1453, 48
          %v1460 = vadd.s32 %v1453, 56
          %v1461 = vadd.s32 %v1453, 64
          %v1462 = vadd.s32 %v1453, 72
          %v1463 = vadd.s32 %v1453, 80
          %v1464 = vadd.s32 %v1453, 88
          %v1465 = vadd.s32 %v1453, 96
          %v1466 = vadd.s32 %v1453, 104
          %v1467 = vadd.s32 %v1453, 112
          %v1468 = vadd.s32 %v1453, 120
          %s1469 = smul.u32 %s39, 128
          %v1470 = vstv %s1469
          %v1471 = vsub.s32 %v567, %v1470
          %v1472 = vlaneseq
          %v1473 = vshrl.u32 %v1472, 7
          %v1474 = vsub.s32 0, %v1473
          %v1475 = vrot.slane %v1471, %v1474
          %v1476 = vlaneseq
          %v1477 = vshrl.u32 %v1476, 7
          %v1478 = vsub.s32 1, %v1477
          %v1479 = vrot.slane %v1471, %v1478
          %v1480 = vlaneseq
          %v1481 = vshrl.u32 %v1480, 7
          %v1482 = vsub.s32 2, %v1481
          %v1483 = vrot.slane %v1471, %v1482
          %v1484 = vlaneseq
          %v1485 = vshrl.u32 %v1484, 7
          %v1486 = vsub.s32 3, %v1485
          %v1487 = vrot.slane %v1471, %v1486
          %v1488 = vlaneseq
          %v1489 = vshrl.u32 %v1488, 7
          %v1490 = vsub.s32 4, %v1489
          %v1491 = vrot.slane %v1471, %v1490
          %v1492 = vlaneseq
          %v1493 = vshrl.u32 %v1492, 7
          %v1494 = vsub.s32 5, %v1493
          %v1495 = vrot.slane %v1471, %v1494
          %v1496 = vlaneseq
          %v1497 = vshrl.u32 %v1496, 7
          %v1498 = vsub.s32 6, %v1497
          %v1499 = vrot.slane %v1471, %v1498
          %v1500 = vlaneseq
          %v1501 = vshrl.u32 %v1500, 7
          %v1502 = vsub.s32 7, %v1501
          %v1503 = vrot.slane %v1471, %v1502
          %vm1504 = vcmp.eq.s32.totalorder %v1453, %v1475
          %vm1505 = vcmp.eq.s32.totalorder %v1453, %v1479
          %vm1506 = vcmp.eq.s32.totalorder %v1453, %v1483
          %vm1507 = vcmp.eq.s32.totalorder %v1453, %v1487
          %vm1508 = vcmp.eq.s32.totalorder %v1453, %v1491
          %vm1509 = vcmp.eq.s32.totalorder %v1453, %v1495
          %vm1510 = vcmp.eq.s32.totalorder %v1453, %v1499
          %vm1511 = vcmp.eq.s32.totalorder %v1453, %v1503
          %vm1512 = vcmp.eq.s32.totalorder %v1454, %v1475
          %vm1513 = vcmp.eq.s32.totalorder %v1454, %v1479
          %vm1514 = vcmp.eq.s32.totalorder %v1454, %v1483
          %vm1515 = vcmp.eq.s32.totalorder %v1454, %v1487
          %vm1516 = vcmp.eq.s32.totalorder %v1454, %v1491
          %vm1517 = vcmp.eq.s32.totalorder %v1454, %v1495
          %vm1518 = vcmp.eq.s32.totalorder %v1454, %v1499
          %vm1519 = vcmp.eq.s32.totalorder %v1454, %v1503
          %vm1520 = vcmp.eq.s32.totalorder %v1455, %v1475
          %vm1521 = vcmp.eq.s32.totalorder %v1455, %v1479
          %vm1522 = vcmp.eq.s32.totalorder %v1455, %v1483
          %vm1523 = vcmp.eq.s32.totalorder %v1455, %v1487
          %vm1524 = vcmp.eq.s32.totalorder %v1455, %v1491
          %vm1525 = vcmp.eq.s32.totalorder %v1455, %v1495
          %vm1526 = vcmp.eq.s32.totalorder %v1455, %v1499
          %vm1527 = vcmp.eq.s32.totalorder %v1455, %v1503
          %vm1528 = vcmp.eq.s32.totalorder %v1456, %v1475
          %vm1529 = vcmp.eq.s32.totalorder %v1456, %v1479
          %vm1530 = vcmp.eq.s32.totalorder %v1456, %v1483
          %vm1531 = vcmp.eq.s32.totalorder %v1456, %v1487
          %vm1532 = vcmp.eq.s32.totalorder %v1456, %v1491
          %vm1533 = vcmp.eq.s32.totalorder %v1456, %v1495
          %vm1534 = vcmp.eq.s32.totalorder %v1456, %v1499
          %vm1535 = vcmp.eq.s32.totalorder %v1456, %v1503
          %vm1536 = vcmp.eq.s32.totalorder %v1457, %v1475
          %vm1537 = vcmp.eq.s32.totalorder %v1457, %v1479
          %vm1538 = vcmp.eq.s32.totalorder %v1457, %v1483
          %vm1539 = vcmp.eq.s32.totalorder %v1457, %v1487
          %vm1540 = vcmp.eq.s32.totalorder %v1457, %v1491
          %vm1541 = vcmp.eq.s32.totalorder %v1457, %v1495
          %vm1542 = vcmp.eq.s32.totalorder %v1457, %v1499
          %vm1543 = vcmp.eq.s32.totalorder %v1457, %v1503
          %vm1544 = vcmp.eq.s32.totalorder %v1458, %v1475
          %vm1545 = vcmp.eq.s32.totalorder %v1458, %v1479
          %vm1546 = vcmp.eq.s32.totalorder %v1458, %v1483
          %vm1547 = vcmp.eq.s32.totalorder %v1458, %v1487
          %vm1548 = vcmp.eq.s32.totalorder %v1458, %v1491
          %vm1549 = vcmp.eq.s32.totalorder %v1458, %v1495
          %vm1550 = vcmp.eq.s32.totalorder %v1458, %v1499
          %vm1551 = vcmp.eq.s32.totalorder %v1458, %v1503
          %vm1552 = vcmp.eq.s32.totalorder %v1459, %v1475
          %vm1553 = vcmp.eq.s32.totalorder %v1459, %v1479
          %vm1554 = vcmp.eq.s32.totalorder %v1459, %v1483
          %vm1555 = vcmp.eq.s32.totalorder %v1459, %v1487
          %vm1556 = vcmp.eq.s32.totalorder %v1459, %v1491
          %vm1557 = vcmp.eq.s32.totalorder %v1459, %v1495
          %vm1558 = vcmp.eq.s32.totalorder %v1459, %v1499
          %vm1559 = vcmp.eq.s32.totalorder %v1459, %v1503
          %vm1560 = vcmp.eq.s32.totalorder %v1460, %v1475
          %vm1561 = vcmp.eq.s32.totalorder %v1460, %v1479
          %vm1562 = vcmp.eq.s32.totalorder %v1460, %v1483
          %vm1563 = vcmp.eq.s32.totalorder %v1460, %v1487
          %vm1564 = vcmp.eq.s32.totalorder %v1460, %v1491
          %vm1565 = vcmp.eq.s32.totalorder %v1460, %v1495
          %vm1566 = vcmp.eq.s32.totalorder %v1460, %v1499
          %vm1567 = vcmp.eq.s32.totalorder %v1460, %v1503
          %vm1568 = vcmp.eq.s32.totalorder %v1461, %v1475
          %vm1569 = vcmp.eq.s32.totalorder %v1461, %v1479
          %vm1570 = vcmp.eq.s32.totalorder %v1461, %v1483
          %vm1571 = vcmp.eq.s32.totalorder %v1461, %v1487
          %vm1572 = vcmp.eq.s32.totalorder %v1461, %v1491
          %vm1573 = vcmp.eq.s32.totalorder %v1461, %v1495
          %vm1574 = vcmp.eq.s32.totalorder %v1461, %v1499
          %vm1575 = vcmp.eq.s32.totalorder %v1461, %v1503
          %vm1576 = vcmp.eq.s32.totalorder %v1462, %v1475
          %vm1577 = vcmp.eq.s32.totalorder %v1462, %v1479
          %vm1578 = vcmp.eq.s32.totalorder %v1462, %v1483
          %vm1579 = vcmp.eq.s32.totalorder %v1462, %v1487
          %vm1580 = vcmp.eq.s32.totalorder %v1462, %v1491
          %vm1581 = vcmp.eq.s32.totalorder %v1462, %v1495
          %vm1582 = vcmp.eq.s32.totalorder %v1462, %v1499
          %vm1583 = vcmp.eq.s32.totalorder %v1462, %v1503
          %vm1584 = vcmp.eq.s32.totalorder %v1463, %v1475
          %vm1585 = vcmp.eq.s32.totalorder %v1463, %v1479
          %vm1586 = vcmp.eq.s32.totalorder %v1463, %v1483
          %vm1587 = vcmp.eq.s32.totalorder %v1463, %v1487
          %vm1588 = vcmp.eq.s32.totalorder %v1463, %v1491
          %vm1589 = vcmp.eq.s32.totalorder %v1463, %v1495
          %vm1590 = vcmp.eq.s32.totalorder %v1463, %v1499
          %vm1591 = vcmp.eq.s32.totalorder %v1463, %v1503
          %vm1592 = vcmp.eq.s32.totalorder %v1464, %v1475
          %vm1593 = vcmp.eq.s32.totalorder %v1464, %v1479
          %vm1594 = vcmp.eq.s32.totalorder %v1464, %v1483
          %vm1595 = vcmp.eq.s32.totalorder %v1464, %v1487
          %vm1596 = vcmp.eq.s32.totalorder %v1464, %v1491
          %vm1597 = vcmp.eq.s32.totalorder %v1464, %v1495
          %vm1598 = vcmp.eq.s32.totalorder %v1464, %v1499
          %vm1599 = vcmp.eq.s32.totalorder %v1464, %v1503
          %vm1600 = vcmp.eq.s32.totalorder %v1465, %v1475
          %vm1601 = vcmp.eq.s32.totalorder %v1465, %v1479
          %vm1602 = vcmp.eq.s32.totalorder %v1465, %v1483
          %vm1603 = vcmp.eq.s32.totalorder %v1465, %v1487
          %vm1604 = vcmp.eq.s32.totalorder %v1465, %v1491
          %vm1605 = vcmp.eq.s32.totalorder %v1465, %v1495
          %vm1606 = vcmp.eq.s32.totalorder %v1465, %v1499
          %vm1607 = vcmp.eq.s32.totalorder %v1465, %v1503
          %vm1608 = vcmp.eq.s32.totalorder %v1466, %v1475
          %vm1609 = vcmp.eq.s32.totalorder %v1466, %v1479
          %vm1610 = vcmp.eq.s32.totalorder %v1466, %v1483
          %vm1611 = vcmp.eq.s32.totalorder %v1466, %v1487
          %vm1612 = vcmp.eq.s32.totalorder %v1466, %v1491
          %vm1613 = vcmp.eq.s32.totalorder %v1466, %v1495
          %vm1614 = vcmp.eq.s32.totalorder %v1466, %v1499
          %vm1615 = vcmp.eq.s32.totalorder %v1466, %v1503
          %vm1616 = vcmp.eq.s32.totalorder %v1467, %v1475
          %vm1617 = vcmp.eq.s32.totalorder %v1467, %v1479
          %vm1618 = vcmp.eq.s32.totalorder %v1467, %v1483
          %vm1619 = vcmp.eq.s32.totalorder %v1467, %v1487
          %vm1620 = vcmp.eq.s32.totalorder %v1467, %v1491
          %vm1621 = vcmp.eq.s32.totalorder %v1467, %v1495
          %vm1622 = vcmp.eq.s32.totalorder %v1467, %v1499
          %vm1623 = vcmp.eq.s32.totalorder %v1467, %v1503
          %vm1624 = vcmp.eq.s32.totalorder %v1468, %v1475
          %vm1625 = vcmp.eq.s32.totalorder %v1468, %v1479
          %vm1626 = vcmp.eq.s32.totalorder %v1468, %v1483
          %vm1627 = vcmp.eq.s32.totalorder %v1468, %v1487
          %vm1628 = vcmp.eq.s32.totalorder %v1468, %v1491
          %vm1629 = vcmp.eq.s32.totalorder %v1468, %v1495
          %vm1630 = vcmp.eq.s32.totalorder %v1468, %v1499
          %vm1631 = vcmp.eq.s32.totalorder %v1468, %v1503
          %v1632 = vsel %vm1504, %v1035, -1e+30
          %v1633 = vsel %vm1505, %v1037, -1e+30
          %v1634 = vsel %vm1506, %v1148, -1e+30
          %v1635 = vsel %vm1507, %v1150, -1e+30
          %v1636 = vsel %vm1508, %v1261, -1e+30
          %v1637 = vsel %vm1509, %v1263, -1e+30
          %v1638 = vsel %vm1510, %v1374, -1e+30
          %v1639 = vsel %vm1511, %v1376, -1e+30
          %v1640 = vsel %vm1512, %v1039, -1e+30
          %v1641 = vsel %vm1513, %v1041, -1e+30
          %v1642 = vsel %vm1514, %v1152, -1e+30
          %v1643 = vsel %vm1515, %v1154, -1e+30
          %v1644 = vsel %vm1516, %v1265, -1e+30
          %v1645 = vsel %vm1517, %v1267, -1e+30
          %v1646 = vsel %vm1518, %v1378, -1e+30
          %v1647 = vsel %vm1519, %v1380, -1e+30
          %v1648 = vsel %vm1520, %v1045, -1e+30
          %v1649 = vsel %vm1521, %v1047, -1e+30
          %v1650 = vsel %vm1522, %v1158, -1e+30
          %v1651 = vsel %vm1523, %v1160, -1e+30
          %v1652 = vsel %vm1524, %v1271, -1e+30
          %v1653 = vsel %vm1525, %v1273, -1e+30
          %v1654 = vsel %vm1526, %v1384, -1e+30
          %v1655 = vsel %vm1527, %v1386, -1e+30
          %v1656 = vsel %vm1528, %v1049, -1e+30
          %v1657 = vsel %vm1529, %v1051, -1e+30
          %v1658 = vsel %vm1530, %v1162, -1e+30
          %v1659 = vsel %vm1531, %v1164, -1e+30
          %v1660 = vsel %vm1532, %v1275, -1e+30
          %v1661 = vsel %vm1533, %v1277, -1e+30
          %v1662 = vsel %vm1534, %v1388, -1e+30
          %v1663 = vsel %vm1535, %v1390, -1e+30
          %v1664 = vsel %vm1536, %v1055, -1e+30
          %v1665 = vsel %vm1537, %v1057, -1e+30
          %v1666 = vsel %vm1538, %v1168, -1e+30
          %v1667 = vsel %vm1539, %v1170, -1e+30
          %v1668 = vsel %vm1540, %v1281, -1e+30
          %v1669 = vsel %vm1541, %v1283, -1e+30
          %v1670 = vsel %vm1542, %v1394, -1e+30
          %v1671 = vsel %vm1543, %v1396, -1e+30
          %v1672 = vsel %vm1544, %v1059, -1e+30
          %v1673 = vsel %vm1545, %v1061, -1e+30
          %v1674 = vsel %vm1546, %v1172, -1e+30
          %v1675 = vsel %vm1547, %v1174, -1e+30
          %v1676 = vsel %vm1548, %v1285, -1e+30
          %v1677 = vsel %vm1549, %v1287, -1e+30
          %v1678 = vsel %vm1550, %v1398, -1e+30
          %v1679 = vsel %vm1551, %v1400, -1e+30
          %v1680 = vsel %vm1552, %v1065, -1e+30
          %v1681 = vsel %vm1553, %v1067, -1e+30
          %v1682 = vsel %vm1554, %v1178, -1e+30
          %v1683 = vsel %vm1555, %v1180, -1e+30
          %v1684 = vsel %vm1556, %v1291, -1e+30
          %v1685 = vsel %vm1557, %v1293, -1e+30
          %v1686 = vsel %vm1558, %v1404, -1e+30
          %v1687 = vsel %vm1559, %v1406, -1e+30
          %v1688 = vsel %vm1560, %v1069, -1e+30
          %v1689 = vsel %vm1561, %v1071, -1e+30
          %v1690 = vsel %vm1562, %v1182, -1e+30
          %v1691 = vsel %vm1563, %v1184, -1e+30
          %v1692 = vsel %vm1564, %v1295, -1e+30
          %v1693 = vsel %vm1565, %v1297, -1e+30
          %v1694 = vsel %vm1566, %v1408, -1e+30
          %v1695 = vsel %vm1567, %v1410, -1e+30
          %v1696 = vsel %vm1568, %v1075, -1e+30
          %v1697 = vsel %vm1569, %v1077, -1e+30
          %v1698 = vsel %vm1570, %v1188, -1e+30
          %v1699 = vsel %vm1571, %v1190, -1e+30
          %v1700 = vsel %vm1572, %v1301, -1e+30
          %v1701 = vsel %vm1573, %v1303, -1e+30
          %v1702 = vsel %vm1574, %v1414, -1e+30
          %v1703 = vsel %vm1575, %v1416, -1e+30
          %v1704 = vsel %vm1576, %v1079, -1e+30
          %v1705 = vsel %vm1577, %v1081, -1e+30
          %v1706 = vsel %vm1578, %v1192, -1e+30
          %v1707 = vsel %vm1579, %v1194, -1e+30
          %v1708 = vsel %vm1580, %v1305, -1e+30
          %v1709 = vsel %vm1581, %v1307, -1e+30
          %v1710 = vsel %vm1582, %v1418, -1e+30
          %v1711 = vsel %vm1583, %v1420, -1e+30
          %v1712 = vsel %vm1584, %v1085, -1e+30
          %v1713 = vsel %vm1585, %v1087, -1e+30
          %v1714 = vsel %vm1586, %v1198, -1e+30
          %v1715 = vsel %vm1587, %v1200, -1e+30
          %v1716 = vsel %vm1588, %v1311, -1e+30
          %v1717 = vsel %vm1589, %v1313, -1e+30
          %v1718 = vsel %vm1590, %v1424, -1e+30
          %v1719 = vsel %vm1591, %v1426, -1e+30
          %v1720 = vsel %vm1592, %v1089, -1e+30
          %v1721 = vsel %vm1593, %v1091, -1e+30
          %v1722 = vsel %vm1594, %v1202, -1e+30
          %v1723 = vsel %vm1595, %v1204, -1e+30
          %v1724 = vsel %vm1596, %v1315, -1e+30
          %v1725 = vsel %vm1597, %v1317, -1e+30
          %v1726 = vsel %vm1598, %v1428, -1e+30
          %v1727 = vsel %vm1599, %v1430, -1e+30
          %v1728 = vsel %vm1600, %v1095, -1e+30
          %v1729 = vsel %vm1601, %v1097, -1e+30
          %v1730 = vsel %vm1602, %v1208, -1e+30
          %v1731 = vsel %vm1603, %v1210, -1e+30
          %v1732 = vsel %vm1604, %v1321, -1e+30
          %v1733 = vsel %vm1605, %v1323, -1e+30
          %v1734 = vsel %vm1606, %v1434, -1e+30
          %v1735 = vsel %vm1607, %v1436, -1e+30
          %v1736 = vsel %vm1608, %v1099, -1e+30
          %v1737 = vsel %vm1609, %v1101, -1e+30
          %v1738 = vsel %vm1610, %v1212, -1e+30
          %v1739 = vsel %vm1611, %v1214, -1e+30
          %v1740 = vsel %vm1612, %v1325, -1e+30
          %v1741 = vsel %vm1613, %v1327, -1e+30
          %v1742 = vsel %vm1614, %v1438, -1e+30
          %v1743 = vsel %vm1615, %v1440, -1e+30
          %v1744 = vsel %vm1616, %v1105, -1e+30
          %v1745 = vsel %vm1617, %v1107, -1e+30
          %v1746 = vsel %vm1618, %v1218, -1e+30
          %v1747 = vsel %vm1619, %v1220, -1e+30
          %v1748 = vsel %vm1620, %v1331, -1e+30
          %v1749 = vsel %vm1621, %v1333, -1e+30
          %v1750 = vsel %vm1622, %v1444, -1e+30
          %v1751 = vsel %vm1623, %v1446, -1e+30
          %v1752 = vsel %vm1624, %v1109, -1e+30
          %v1753 = vsel %vm1625, %v1111, -1e+30
          %v1754 = vsel %vm1626, %v1222, -1e+30
          %v1755 = vsel %vm1627, %v1224, -1e+30
          %v1756 = vsel %vm1628, %v1335, -1e+30
          %v1757 = vsel %vm1629, %v1337, -1e+30
          %v1758 = vsel %vm1630, %v1448, -1e+30
          %v1759 = vsel %vm1631, %v1450, -1e+30
          %v1760 = vmax.f32 %v1632, %v1633
          %v1761 = vmax.f32 %v1760, %v1634
          %v1762 = vmax.f32 %v1761, %v1635
          %v1763 = vmax.f32 %v1762, %v1636
          %v1764 = vmax.f32 %v1763, %v1637
          %v1765 = vmax.f32 %v1764, %v1638
          %v1766 = vmax.f32 %v1765, %v1639
          %1767 = vmax.xlane.f32.xlu0 %v1766
          %v1768 = vpop.xlane.xlu0 %1767
          %v1769 = vmax.f32 %v1640, %v1641
          %v1770 = vmax.f32 %v1769, %v1642
          %v1771 = vmax.f32 %v1770, %v1643
          %v1772 = vmax.f32 %v1771, %v1644
          %v1773 = vmax.f32 %v1772, %v1645
          %v1774 = vmax.f32 %v1773, %v1646
          %v1775 = vmax.f32 %v1774, %v1647
          %1776 = vmax.xlane.f32.xlu0 %v1775
          %v1777 = vpop.xlane.xlu0 %1776
          %v1778 = vmax.f32 %v1648, %v1649
          %v1779 = vmax.f32 %v1778, %v1650
          %v1780 = vmax.f32 %v1779, %v1651
          %v1781 = vmax.f32 %v1780, %v1652
          %v1782 = vmax.f32 %v1781, %v1653
          %v1783 = vmax.f32 %v1782, %v1654
          %v1784 = vmax.f32 %v1783, %v1655
          %1785 = vmax.xlane.f32.xlu0 %v1784
          %v1786 = vpop.xlane.xlu0 %1785
          %v1787 = vmax.f32 %v1656, %v1657
          %v1788 = vmax.f32 %v1787, %v1658
          %v1789 = vmax.f32 %v1788, %v1659
          %v1790 = vmax.f32 %v1789, %v1660
          %v1791 = vmax.f32 %v1790, %v1661
          %v1792 = vmax.f32 %v1791, %v1662
          %v1793 = vmax.f32 %v1792, %v1663
          %1794 = vmax.xlane.f32.xlu0 %v1793
          %v1795 = vpop.xlane.xlu0 %1794
          %v1796 = vmax.f32 %v1664, %v1665
          %v1797 = vmax.f32 %v1796, %v1666
          %v1798 = vmax.f32 %v1797, %v1667
          %v1799 = vmax.f32 %v1798, %v1668
          %v1800 = vmax.f32 %v1799, %v1669
          %v1801 = vmax.f32 %v1800, %v1670
          %v1802 = vmax.f32 %v1801, %v1671
          %1803 = vmax.xlane.f32.xlu0 %v1802
          %v1804 = vpop.xlane.xlu0 %1803
          %v1805 = vmax.f32 %v1672, %v1673
          %v1806 = vmax.f32 %v1805, %v1674
          %v1807 = vmax.f32 %v1806, %v1675
          %v1808 = vmax.f32 %v1807, %v1676
          %v1809 = vmax.f32 %v1808, %v1677
          %v1810 = vmax.f32 %v1809, %v1678
          %v1811 = vmax.f32 %v1810, %v1679
          %1812 = vmax.xlane.f32.xlu0 %v1811
          %v1813 = vpop.xlane.xlu0 %1812
          %v1814 = vmax.f32 %v1680, %v1681
          %v1815 = vmax.f32 %v1814, %v1682
          %v1816 = vmax.f32 %v1815, %v1683
          %v1817 = vmax.f32 %v1816, %v1684
          %v1818 = vmax.f32 %v1817, %v1685
          %v1819 = vmax.f32 %v1818, %v1686
          %v1820 = vmax.f32 %v1819, %v1687
          %1821 = vmax.xlane.f32.xlu0 %v1820
          %v1822 = vpop.xlane.xlu0 %1821
          %v1823 = vmax.f32 %v1688, %v1689
          %v1824 = vmax.f32 %v1823, %v1690
          %v1825 = vmax.f32 %v1824, %v1691
          %v1826 = vmax.f32 %v1825, %v1692
          %v1827 = vmax.f32 %v1826, %v1693
          %v1828 = vmax.f32 %v1827, %v1694
          %v1829 = vmax.f32 %v1828, %v1695
          %1830 = vmax.xlane.f32.xlu0 %v1829
          %v1831 = vpop.xlane.xlu0 %1830
          %v1832 = vmax.f32 %v1696, %v1697
          %v1833 = vmax.f32 %v1832, %v1698
          %v1834 = vmax.f32 %v1833, %v1699
          %v1835 = vmax.f32 %v1834, %v1700
          %v1836 = vmax.f32 %v1835, %v1701
          %v1837 = vmax.f32 %v1836, %v1702
          %v1838 = vmax.f32 %v1837, %v1703
          %1839 = vmax.xlane.f32.xlu0 %v1838
          %v1840 = vpop.xlane.xlu0 %1839
          %v1841 = vmax.f32 %v1704, %v1705
          %v1842 = vmax.f32 %v1841, %v1706
          %v1843 = vmax.f32 %v1842, %v1707
          %v1844 = vmax.f32 %v1843, %v1708
          %v1845 = vmax.f32 %v1844, %v1709
          %v1846 = vmax.f32 %v1845, %v1710
          %v1847 = vmax.f32 %v1846, %v1711
          %1848 = vmax.xlane.f32.xlu0 %v1847
          %v1849 = vpop.xlane.xlu0 %1848
          %v1850 = vmax.f32 %v1712, %v1713
          %v1851 = vmax.f32 %v1850, %v1714
          %v1852 = vmax.f32 %v1851, %v1715
          %v1853 = vmax.f32 %v1852, %v1716
          %v1854 = vmax.f32 %v1853, %v1717
          %v1855 = vmax.f32 %v1854, %v1718
          %v1856 = vmax.f32 %v1855, %v1719
          %1857 = vmax.xlane.f32.xlu0 %v1856
          %v1858 = vpop.xlane.xlu0 %1857
          %v1859 = vmax.f32 %v1720, %v1721
          %v1860 = vmax.f32 %v1859, %v1722
          %v1861 = vmax.f32 %v1860, %v1723
          %v1862 = vmax.f32 %v1861, %v1724
          %v1863 = vmax.f32 %v1862, %v1725
          %v1864 = vmax.f32 %v1863, %v1726
          %v1865 = vmax.f32 %v1864, %v1727
          %1866 = vmax.xlane.f32.xlu0 %v1865
          %v1867 = vpop.xlane.xlu0 %1866
          %v1868 = vmax.f32 %v1728, %v1729
          %v1869 = vmax.f32 %v1868, %v1730
          %v1870 = vmax.f32 %v1869, %v1731
          %v1871 = vmax.f32 %v1870, %v1732
          %v1872 = vmax.f32 %v1871, %v1733
          %v1873 = vmax.f32 %v1872, %v1734
          %v1874 = vmax.f32 %v1873, %v1735
          %1875 = vmax.xlane.f32.xlu0 %v1874
          %v1876 = vpop.xlane.xlu0 %1875
          %v1877 = vmax.f32 %v1736, %v1737
          %v1878 = vmax.f32 %v1877, %v1738
          %v1879 = vmax.f32 %v1878, %v1739
          %v1880 = vmax.f32 %v1879, %v1740
          %v1881 = vmax.f32 %v1880, %v1741
          %v1882 = vmax.f32 %v1881, %v1742
          %v1883 = vmax.f32 %v1882, %v1743
          %1884 = vmax.xlane.f32.xlu0 %v1883
          %v1885 = vpop.xlane.xlu0 %1884
          %v1886 = vmax.f32 %v1744, %v1745
          %v1887 = vmax.f32 %v1886, %v1746
          %v1888 = vmax.f32 %v1887, %v1747
          %v1889 = vmax.f32 %v1888, %v1748
          %v1890 = vmax.f32 %v1889, %v1749
          %v1891 = vmax.f32 %v1890, %v1750
          %v1892 = vmax.f32 %v1891, %v1751
          %1893 = vmax.xlane.f32.xlu0 %v1892
          %v1894 = vpop.xlane.xlu0 %1893
          %v1895 = vmax.f32 %v1752, %v1753
          %v1896 = vmax.f32 %v1895, %v1754
          %v1897 = vmax.f32 %v1896, %v1755
          %v1898 = vmax.f32 %v1897, %v1756
          %v1899 = vmax.f32 %v1898, %v1757
          %v1900 = vmax.f32 %v1899, %v1758
          %v1901 = vmax.f32 %v1900, %v1759
          %1902 = vmax.xlane.f32.xlu0 %v1901
          %v1903 = vpop.xlane.xlu0 %1902
          %v1904 = vld [vmem:[#allocation2] sm:$0xff]
          %v1905 = vld [vmem:[#allocation2 + $0x8] sm:$0xff]
          %v1906 = vld [vmem:[#allocation2 + $0x10] sm:$0xff]
          %v1907 = vld [vmem:[#allocation2 + $0x18] sm:$0xff]
          %v1908 = vld [vmem:[#allocation2 + $0x20] sm:$0xff]
          %v1909 = vld [vmem:[#allocation2 + $0x28] sm:$0xff]
          %v1910 = vld [vmem:[#allocation2 + $0x30] sm:$0xff]
          %v1911 = vld [vmem:[#allocation2 + $0x38] sm:$0xff]
          %v1912 = vld [vmem:[#allocation2 + $0x40] sm:$0xff]
          %v1913 = vld [vmem:[#allocation2 + $0x48] sm:$0xff]
          %v1914 = vld [vmem:[#allocation2 + $0x50] sm:$0xff]
          %v1915 = vld [vmem:[#allocation2 + $0x58] sm:$0xff]
          %v1916 = vld [vmem:[#allocation2 + $0x60] sm:$0xff]
          %v1917 = vld [vmem:[#allocation2 + $0x68] sm:$0xff]
          %v1918 = vld [vmem:[#allocation2 + $0x70] sm:$0xff]
          %v1919 = vld [vmem:[#allocation2 + $0x78] sm:$0xff]
          %v1920 = vmax.f32 %v1904, %v1768
          %v1921 = vmax.f32 %v1905, %v1777
          %v1922 = vmax.f32 %v1906, %v1786
          %v1923 = vmax.f32 %v1907, %v1795
          %v1924 = vmax.f32 %v1908, %v1804
          %v1925 = vmax.f32 %v1909, %v1813
          %v1926 = vmax.f32 %v1910, %v1822
          %v1927 = vmax.f32 %v1911, %v1831
          %v1928 = vmax.f32 %v1912, %v1840
          %v1929 = vmax.f32 %v1913, %v1849
          %v1930 = vmax.f32 %v1914, %v1858
          %v1931 = vmax.f32 %v1915, %v1867
          %v1932 = vmax.f32 %v1916, %v1876
          %v1933 = vmax.f32 %v1917, %v1885
          %v1934 = vmax.f32 %v1918, %v1894
          %v1935 = vmax.f32 %v1919, %v1903
          %vm1936 = vcmp.lt.f32.partialorder %v1920, -1e+29
          %vm1937 = vcmp.lt.f32.partialorder %v1921, -1e+29
          %vm1938 = vcmp.lt.f32.partialorder %v1922, -1e+29
          %vm1939 = vcmp.lt.f32.partialorder %v1923, -1e+29
          %vm1940 = vcmp.lt.f32.partialorder %v1924, -1e+29
          %vm1941 = vcmp.lt.f32.partialorder %v1925, -1e+29
          %vm1942 = vcmp.lt.f32.partialorder %v1926, -1e+29
          %vm1943 = vcmp.lt.f32.partialorder %v1927, -1e+29
          %vm1944 = vcmp.lt.f32.partialorder %v1928, -1e+29
          %vm1945 = vcmp.lt.f32.partialorder %v1929, -1e+29
          %vm1946 = vcmp.lt.f32.partialorder %v1930, -1e+29
          %vm1947 = vcmp.lt.f32.partialorder %v1931, -1e+29
          %vm1948 = vcmp.lt.f32.partialorder %v1932, -1e+29
          %vm1949 = vcmp.lt.f32.partialorder %v1933, -1e+29
          %vm1950 = vcmp.lt.f32.partialorder %v1934, -1e+29
          %vm1951 = vcmp.lt.f32.partialorder %v1935, -1e+29
          %v1952 = vsel %vm1936, 0.0, %v1920
          %v1953 = vsel %vm1937, 0.0, %v1921
          %v1954 = vsel %vm1938, 0.0, %v1922
          %v1955 = vsel %vm1939, 0.0, %v1923
          %v1956 = vsel %vm1940, 0.0, %v1924
          %v1957 = vsel %vm1941, 0.0, %v1925
          %v1958 = vsel %vm1942, 0.0, %v1926
          %v1959 = vsel %vm1943, 0.0, %v1927
          %v1960 = vsel %vm1944, 0.0, %v1928
          %v1961 = vsel %vm1945, 0.0, %v1929
          %v1962 = vsel %vm1946, 0.0, %v1930
          %v1963 = vsel %vm1947, 0.0, %v1931
          %v1964 = vsel %vm1948, 0.0, %v1932
          %v1965 = vsel %vm1949, 0.0, %v1933
          %v1966 = vsel %vm1950, 0.0, %v1934
          %v1967 = vsel %vm1951, 0.0, %v1935
          %v1968 = vsub.f32 %v1904, %v1920
          %v1969 = vsub.f32 %v1905, %v1921
          %v1970 = vsub.f32 %v1906, %v1922
          %v1971 = vsub.f32 %v1907, %v1923
          %v1972 = vsub.f32 %v1908, %v1924
          %v1973 = vsub.f32 %v1909, %v1925
          %v1974 = vsub.f32 %v1910, %v1926
          %v1975 = vsub.f32 %v1911, %v1927
          %v1976 = vsub.f32 %v1912, %v1928
          %v1977 = vsub.f32 %v1913, %v1929
          %v1978 = vsub.f32 %v1914, %v1930
          %v1979 = vsub.f32 %v1915, %v1931
          %v1980 = vsub.f32 %v1916, %v1932
          %v1981 = vsub.f32 %v1917, %v1933
          %v1982 = vsub.f32 %v1918, %v1934
          %v1983 = vsub.f32 %v1919, %v1935
          %v1984 = vmul.f32 %v1968, 1.442695
          %v1985 = vpow.pop %v1984
          %v1986 = vmul.f32 %v1969, 1.442695
          %v1987 = vpow.pop %v1986
          %v1988 = vmul.f32 %v1970, 1.442695
          %v1989 = vpow.pop %v1988
          %v1990 = vmul.f32 %v1971, 1.442695
          %v1991 = vpow.pop %v1990
          %v1992 = vmul.f32 %v1972, 1.442695
          %v1993 = vpow.pop %v1992
          %v1994 = vmul.f32 %v1973, 1.442695
          %v1995 = vpow.pop %v1994
          %v1996 = vmul.f32 %v1974, 1.442695
          %v1997 = vpow.pop %v1996
          %v1998 = vmul.f32 %v1975, 1.442695
          %v1999 = vpow.pop %v1998
          %v2000 = vmul.f32 %v1976, 1.442695
          %v2001 = vpow.pop %v2000
          %v2002 = vmul.f32 %v1977, 1.442695
          %v2003 = vpow.pop %v2002
          %v2004 = vmul.f32 %v1978, 1.442695
          %v2005 = vpow.pop %v2004
          %v2006 = vmul.f32 %v1979, 1.442695
          %v2007 = vpow.pop %v2006
          %v2008 = vmul.f32 %v1980, 1.442695
          %v2009 = vpow.pop %v2008
          %v2010 = vmul.f32 %v1981, 1.442695
          %v2011 = vpow.pop %v2010
          %v2012 = vmul.f32 %v1982, 1.442695
          %v2013 = vpow.pop %v2012
          %v2014 = vmul.f32 %v1983, 1.442695
          %v2015 = vpow.pop %v2014
          %2017 = vset.pattern.permute.xlu0 0
          %2018 = vperm.xlu0 %2017, %v1952
          %v2019 = vpop.permute.xlu0 %2018
          %2022 = vset.pattern.permute.xlu0 0
          %2023 = vperm.xlu0 %2022, %v1953
          %v2024 = vpop.permute.xlu0 %2023
          %2027 = vset.pattern.permute.xlu0 0
          %2028 = vperm.xlu0 %2027, %v1954
          %v2029 = vpop.permute.xlu0 %2028
          %2032 = vset.pattern.permute.xlu0 0
          %2033 = vperm.xlu0 %2032, %v1955
          %v2034 = vpop.permute.xlu0 %2033
          %2037 = vset.pattern.permute.xlu0 0
          %2038 = vperm.xlu0 %2037, %v1956
          %v2039 = vpop.permute.xlu0 %2038
          %2042 = vset.pattern.permute.xlu0 0
          %2043 = vperm.xlu0 %2042, %v1957
          %v2044 = vpop.permute.xlu0 %2043
          %2047 = vset.pattern.permute.xlu0 0
          %2048 = vperm.xlu0 %2047, %v1958
          %v2049 = vpop.permute.xlu0 %2048
          %2052 = vset.pattern.permute.xlu0 0
          %2053 = vperm.xlu0 %2052, %v1959
          %v2054 = vpop.permute.xlu0 %2053
          %2057 = vset.pattern.permute.xlu0 0
          %2058 = vperm.xlu0 %2057, %v1960
          %v2059 = vpop.permute.xlu0 %2058
          %2062 = vset.pattern.permute.xlu0 0
          %2063 = vperm.xlu0 %2062, %v1961
          %v2064 = vpop.permute.xlu0 %2063
          %2067 = vset.pattern.permute.xlu0 0
          %2068 = vperm.xlu0 %2067, %v1962
          %v2069 = vpop.permute.xlu0 %2068
          %2072 = vset.pattern.permute.xlu0 0
          %2073 = vperm.xlu0 %2072, %v1963
          %v2074 = vpop.permute.xlu0 %2073
          %2077 = vset.pattern.permute.xlu0 0
          %2078 = vperm.xlu0 %2077, %v1964
          %v2079 = vpop.permute.xlu0 %2078
          %2082 = vset.pattern.permute.xlu0 0
          %2083 = vperm.xlu0 %2082, %v1965
          %v2084 = vpop.permute.xlu0 %2083
          %2087 = vset.pattern.permute.xlu0 0
          %2088 = vperm.xlu0 %2087, %v1966
          %v2089 = vpop.permute.xlu0 %2088
          %2092 = vset.pattern.permute.xlu0 0
          %2093 = vperm.xlu0 %2092, %v1967
          %v2094 = vpop.permute.xlu0 %2093
          %v2096 = vsub.f32 %v1632, %v2019
          %v2097 = vsub.f32 %v1633, %v2019
          %v2098 = vsub.f32 %v1634, %v2019
          %v2099 = vsub.f32 %v1635, %v2019
          %v2100 = vsub.f32 %v1636, %v2019
          %v2101 = vsub.f32 %v1637, %v2019
          %v2102 = vsub.f32 %v1638, %v2019
          %v2103 = vsub.f32 %v1639, %v2019
          %v2104 = vsub.f32 %v1640, %v2024
          %v2105 = vsub.f32 %v1641, %v2024
          %v2106 = vsub.f32 %v1642, %v2024
          %v2107 = vsub.f32 %v1643, %v2024
          %v2108 = vsub.f32 %v1644, %v2024
          %v2109 = vsub.f32 %v1645, %v2024
          %v2110 = vsub.f32 %v1646, %v2024
          %v2111 = vsub.f32 %v1647, %v2024
          %v2112 = vsub.f32 %v1648, %v2029
          %v2113 = vsub.f32 %v1649, %v2029
          %v2114 = vsub.f32 %v1650, %v2029
          %v2115 = vsub.f32 %v1651, %v2029
          %v2116 = vsub.f32 %v1652, %v2029
          %v2117 = vsub.f32 %v1653, %v2029
          %v2118 = vsub.f32 %v1654, %v2029
          %v2119 = vsub.f32 %v1655, %v2029
          %v2120 = vsub.f32 %v1656, %v2034
          %v2121 = vsub.f32 %v1657, %v2034
          %v2122 = vsub.f32 %v1658, %v2034
          %v2123 = vsub.f32 %v1659, %v2034
          %v2124 = vsub.f32 %v1660, %v2034
          %v2125 = vsub.f32 %v1661, %v2034
          %v2126 = vsub.f32 %v1662, %v2034
          %v2127 = vsub.f32 %v1663, %v2034
          %v2128 = vsub.f32 %v1664, %v2039
          %v2129 = vsub.f32 %v1665, %v2039
          %v2130 = vsub.f32 %v1666, %v2039
          %v2131 = vsub.f32 %v1667, %v2039
          %v2132 = vsub.f32 %v1668, %v2039
          %v2133 = vsub.f32 %v1669, %v2039
          %v2134 = vsub.f32 %v1670, %v2039
          %v2135 = vsub.f32 %v1671, %v2039
          %v2136 = vsub.f32 %v1672, %v2044
          %v2137 = vsub.f32 %v1673, %v2044
          %v2138 = vsub.f32 %v1674, %v2044
          %v2139 = vsub.f32 %v1675, %v2044
          %v2140 = vsub.f32 %v1676, %v2044
          %v2141 = vsub.f32 %v1677, %v2044
          %v2142 = vsub.f32 %v1678, %v2044
          %v2143 = vsub.f32 %v1679, %v2044
          %v2144 = vsub.f32 %v1680, %v2049
          %v2145 = vsub.f32 %v1681, %v2049
          %v2146 = vsub.f32 %v1682, %v2049
          %v2147 = vsub.f32 %v1683, %v2049
          %v2148 = vsub.f32 %v1684, %v2049
          %v2149 = vsub.f32 %v1685, %v2049
          %v2150 = vsub.f32 %v1686, %v2049
          %v2151 = vsub.f32 %v1687, %v2049
          %v2152 = vsub.f32 %v1688, %v2054
          %v2153 = vsub.f32 %v1689, %v2054
          %v2154 = vsub.f32 %v1690, %v2054
          %v2155 = vsub.f32 %v1691, %v2054
          %v2156 = vsub.f32 %v1692, %v2054
          %v2157 = vsub.f32 %v1693, %v2054
          %v2158 = vsub.f32 %v1694, %v2054
          %v2159 = vsub.f32 %v1695, %v2054
          %v2160 = vsub.f32 %v1696, %v2059
          %v2161 = vsub.f32 %v1697, %v2059
          %v2162 = vsub.f32 %v1698, %v2059
          %v2163 = vsub.f32 %v1699, %v2059
          %v2164 = vsub.f32 %v1700, %v2059
          %v2165 = vsub.f32 %v1701, %v2059
          %v2166 = vsub.f32 %v1702, %v2059
          %v2167 = vsub.f32 %v1703, %v2059
          %v2168 = vsub.f32 %v1704, %v2064
          %v2169 = vsub.f32 %v1705, %v2064
          %v2170 = vsub.f32 %v1706, %v2064
          %v2171 = vsub.f32 %v1707, %v2064
          %v2172 = vsub.f32 %v1708, %v2064
          %v2173 = vsub.f32 %v1709, %v2064
          %v2174 = vsub.f32 %v1710, %v2064
          %v2175 = vsub.f32 %v1711, %v2064
          %v2176 = vsub.f32 %v1712, %v2069
          %v2177 = vsub.f32 %v1713, %v2069
          %v2178 = vsub.f32 %v1714, %v2069
          %v2179 = vsub.f32 %v1715, %v2069
          %v2180 = vsub.f32 %v1716, %v2069
          %v2181 = vsub.f32 %v1717, %v2069
          %v2182 = vsub.f32 %v1718, %v2069
          %v2183 = vsub.f32 %v1719, %v2069
          %v2184 = vsub.f32 %v1720, %v2074
          %v2185 = vsub.f32 %v1721, %v2074
          %v2186 = vsub.f32 %v1722, %v2074
          %v2187 = vsub.f32 %v1723, %v2074
          %v2188 = vsub.f32 %v1724, %v2074
          %v2189 = vsub.f32 %v1725, %v2074
          %v2190 = vsub.f32 %v1726, %v2074
          %v2191 = vsub.f32 %v1727, %v2074
          %v2192 = vsub.f32 %v1728, %v2079
          %v2193 = vsub.f32 %v1729, %v2079
          %v2194 = vsub.f32 %v1730, %v2079
          %v2195 = vsub.f32 %v1731, %v2079
          %v2196 = vsub.f32 %v1732, %v2079
          %v2197 = vsub.f32 %v1733, %v2079
          %v2198 = vsub.f32 %v1734, %v2079
          %v2199 = vsub.f32 %v1735, %v2079
          %v2200 = vsub.f32 %v1736, %v2084
          %v2201 = vsub.f32 %v1737, %v2084
          %v2202 = vsub.f32 %v1738, %v2084
          %v2203 = vsub.f32 %v1739, %v2084
          %v2204 = vsub.f32 %v1740, %v2084
          %v2205 = vsub.f32 %v1741, %v2084
          %v2206 = vsub.f32 %v1742, %v2084
          %v2207 = vsub.f32 %v1743, %v2084
          %v2208 = vsub.f32 %v1744, %v2089
          %v2209 = vsub.f32 %v1745, %v2089
          %v2210 = vsub.f32 %v1746, %v2089
          %v2211 = vsub.f32 %v1747, %v2089
          %v2212 = vsub.f32 %v1748, %v2089
          %v2213 = vsub.f32 %v1749, %v2089
          %v2214 = vsub.f32 %v1750, %v2089
          %v2215 = vsub.f32 %v1751, %v2089
          %v2216 = vsub.f32 %v1752, %v2094
          %v2217 = vsub.f32 %v1753, %v2094
          %v2218 = vsub.f32 %v1754, %v2094
          %v2219 = vsub.f32 %v1755, %v2094
          %v2220 = vsub.f32 %v1756, %v2094
          %v2221 = vsub.f32 %v1757, %v2094
          %v2222 = vsub.f32 %v1758, %v2094
          %v2223 = vsub.f32 %v1759, %v2094
          %v2224 = vmul.f32 %v2096, 1.442695
          %v2225 = vpow.pop %v2224
          %v2226 = vmul.f32 %v2097, 1.442695
          %v2227 = vpow.pop %v2226
          %v2228 = vmul.f32 %v2098, 1.442695
          %v2229 = vpow.pop %v2228
          %v2230 = vmul.f32 %v2099, 1.442695
          %v2231 = vpow.pop %v2230
          %v2232 = vmul.f32 %v2100, 1.442695
          %v2233 = vpow.pop %v2232
          %v2234 = vmul.f32 %v2101, 1.442695
          %v2235 = vpow.pop %v2234
          %v2236 = vmul.f32 %v2102, 1.442695
          %v2237 = vpow.pop %v2236
          %v2238 = vmul.f32 %v2103, 1.442695
          %v2239 = vpow.pop %v2238
          %v2240 = vmul.f32 %v2104, 1.442695
          %v2241 = vpow.pop %v2240
          %v2242 = vmul.f32 %v2105, 1.442695
          %v2243 = vpow.pop %v2242
          %v2244 = vmul.f32 %v2106, 1.442695
          %v2245 = vpow.pop %v2244
          %v2246 = vmul.f32 %v2107, 1.442695
          %v2247 = vpow.pop %v2246
          %v2248 = vmul.f32 %v2108, 1.442695
          %v2249 = vpow.pop %v2248
          %v2250 = vmul.f32 %v2109, 1.442695
          %v2251 = vpow.pop %v2250
          %v2252 = vmul.f32 %v2110, 1.442695
          %v2253 = vpow.pop %v2252
          %v2254 = vmul.f32 %v2111, 1.442695
          %v2255 = vpow.pop %v2254
          %v2256 = vmul.f32 %v2112, 1.442695
          %v2257 = vpow.pop %v2256
          %v2258 = vmul.f32 %v2113, 1.442695
          %v2259 = vpow.pop %v2258
          %v2260 = vmul.f32 %v2114, 1.442695
          %v2261 = vpow.pop %v2260
          %v2262 = vmul.f32 %v2115, 1.442695
          %v2263 = vpow.pop %v2262
          %v2264 = vmul.f32 %v2116, 1.442695
          %v2265 = vpow.pop %v2264
          %v2266 = vmul.f32 %v2117, 1.442695
          %v2267 = vpow.pop %v2266
          %v2268 = vmul.f32 %v2118, 1.442695
          %v2269 = vpow.pop %v2268
          %v2270 = vmul.f32 %v2119, 1.442695
          %v2271 = vpow.pop %v2270
          %v2272 = vmul.f32 %v2120, 1.442695
          %v2273 = vpow.pop %v2272
          %v2274 = vmul.f32 %v2121, 1.442695
          %v2275 = vpow.pop %v2274
          %v2276 = vmul.f32 %v2122, 1.442695
          %v2277 = vpow.pop %v2276
          %v2278 = vmul.f32 %v2123, 1.442695
          %v2279 = vpow.pop %v2278
          %v2280 = vmul.f32 %v2124, 1.442695
          %v2281 = vpow.pop %v2280
          %v2282 = vmul.f32 %v2125, 1.442695
          %v2283 = vpow.pop %v2282
          %v2284 = vmul.f32 %v2126, 1.442695
          %v2285 = vpow.pop %v2284
          %v2286 = vmul.f32 %v2127, 1.442695
          %v2287 = vpow.pop %v2286
          %v2288 = vmul.f32 %v2128, 1.442695
          %v2289 = vpow.pop %v2288
          %v2290 = vmul.f32 %v2129, 1.442695
          %v2291 = vpow.pop %v2290
          %v2292 = vmul.f32 %v2130, 1.442695
          %v2293 = vpow.pop %v2292
          %v2294 = vmul.f32 %v2131, 1.442695
          %v2295 = vpow.pop %v2294
          %v2296 = vmul.f32 %v2132, 1.442695
          %v2297 = vpow.pop %v2296
          %v2298 = vmul.f32 %v2133, 1.442695
          %v2299 = vpow.pop %v2298
          %v2300 = vmul.f32 %v2134, 1.442695
          %v2301 = vpow.pop %v2300
          %v2302 = vmul.f32 %v2135, 1.442695
          %v2303 = vpow.pop %v2302
          %v2304 = vmul.f32 %v2136, 1.442695
          %v2305 = vpow.pop %v2304
          %v2306 = vmul.f32 %v2137, 1.442695
          %v2307 = vpow.pop %v2306
          %v2308 = vmul.f32 %v2138, 1.442695
          %v2309 = vpow.pop %v2308
          %v2310 = vmul.f32 %v2139, 1.442695
          %v2311 = vpow.pop %v2310
          %v2312 = vmul.f32 %v2140, 1.442695
          %v2313 = vpow.pop %v2312
          %v2314 = vmul.f32 %v2141, 1.442695
          %v2315 = vpow.pop %v2314
          %v2316 = vmul.f32 %v2142, 1.442695
          %v2317 = vpow.pop %v2316
          %v2318 = vmul.f32 %v2143, 1.442695
          %v2319 = vpow.pop %v2318
          %v2320 = vmul.f32 %v2144, 1.442695
          %v2321 = vpow.pop %v2320
          %v2322 = vmul.f32 %v2145, 1.442695
          %v2323 = vpow.pop %v2322
          %v2324 = vmul.f32 %v2146, 1.442695
          %v2325 = vpow.pop %v2324
          %v2326 = vmul.f32 %v2147, 1.442695
          %v2327 = vpow.pop %v2326
          %v2328 = vmul.f32 %v2148, 1.442695
          %v2329 = vpow.pop %v2328
          %v2330 = vmul.f32 %v2149, 1.442695
          %v2331 = vpow.pop %v2330
          %v2332 = vmul.f32 %v2150, 1.442695
          %v2333 = vpow.pop %v2332
          %v2334 = vmul.f32 %v2151, 1.442695
          %v2335 = vpow.pop %v2334
          %v2336 = vmul.f32 %v2152, 1.442695
          %v2337 = vpow.pop %v2336
          %v2338 = vmul.f32 %v2153, 1.442695
          %v2339 = vpow.pop %v2338
          %v2340 = vmul.f32 %v2154, 1.442695
          %v2341 = vpow.pop %v2340
          %v2342 = vmul.f32 %v2155, 1.442695
          %v2343 = vpow.pop %v2342
          %v2344 = vmul.f32 %v2156, 1.442695
          %v2345 = vpow.pop %v2344
          %v2346 = vmul.f32 %v2157, 1.442695
          %v2347 = vpow.pop %v2346
          %v2348 = vmul.f32 %v2158, 1.442695
          %v2349 = vpow.pop %v2348
          %v2350 = vmul.f32 %v2159, 1.442695
          %v2351 = vpow.pop %v2350
          %v2352 = vmul.f32 %v2160, 1.442695
          %v2353 = vpow.pop %v2352
          %v2354 = vmul.f32 %v2161, 1.442695
          %v2355 = vpow.pop %v2354
          %v2356 = vmul.f32 %v2162, 1.442695
          %v2357 = vpow.pop %v2356
          %v2358 = vmul.f32 %v2163, 1.442695
          %v2359 = vpow.pop %v2358
          %v2360 = vmul.f32 %v2164, 1.442695
          %v2361 = vpow.pop %v2360
          %v2362 = vmul.f32 %v2165, 1.442695
          %v2363 = vpow.pop %v2362
          %v2364 = vmul.f32 %v2166, 1.442695
          %v2365 = vpow.pop %v2364
          %v2366 = vmul.f32 %v2167, 1.442695
          %v2367 = vpow.pop %v2366
          %v2368 = vmul.f32 %v2168, 1.442695
          %v2369 = vpow.pop %v2368
          %v2370 = vmul.f32 %v2169, 1.442695
          %v2371 = vpow.pop %v2370
          %v2372 = vmul.f32 %v2170, 1.442695
          %v2373 = vpow.pop %v2372
          %v2374 = vmul.f32 %v2171, 1.442695
          %v2375 = vpow.pop %v2374
          %v2376 = vmul.f32 %v2172, 1.442695
          %v2377 = vpow.pop %v2376
          %v2378 = vmul.f32 %v2173, 1.442695
          %v2379 = vpow.pop %v2378
          %v2380 = vmul.f32 %v2174, 1.442695
          %v2381 = vpow.pop %v2380
          %v2382 = vmul.f32 %v2175, 1.442695
          %v2383 = vpow.pop %v2382
          %v2384 = vmul.f32 %v2176, 1.442695
          %v2385 = vpow.pop %v2384
          %v2386 = vmul.f32 %v2177, 1.442695
          %v2387 = vpow.pop %v2386
          %v2388 = vmul.f32 %v2178, 1.442695
          %v2389 = vpow.pop %v2388
          %v2390 = vmul.f32 %v2179, 1.442695
          %v2391 = vpow.pop %v2390
          %v2392 = vmul.f32 %v2180, 1.442695
          %v2393 = vpow.pop %v2392
          %v2394 = vmul.f32 %v2181, 1.442695
          %v2395 = vpow.pop %v2394
          %v2396 = vmul.f32 %v2182, 1.442695
          %v2397 = vpow.pop %v2396
          %v2398 = vmul.f32 %v2183, 1.442695
          %v2399 = vpow.pop %v2398
          %v2400 = vmul.f32 %v2184, 1.442695
          %v2401 = vpow.pop %v2400
          %v2402 = vmul.f32 %v2185, 1.442695
          %v2403 = vpow.pop %v2402
          %v2404 = vmul.f32 %v2186, 1.442695
          %v2405 = vpow.pop %v2404
          %v2406 = vmul.f32 %v2187, 1.442695
          %v2407 = vpow.pop %v2406
          %v2408 = vmul.f32 %v2188, 1.442695
          %v2409 = vpow.pop %v2408
          %v2410 = vmul.f32 %v2189, 1.442695
          %v2411 = vpow.pop %v2410
          %v2412 = vmul.f32 %v2190, 1.442695
          %v2413 = vpow.pop %v2412
          %v2414 = vmul.f32 %v2191, 1.442695
          %v2415 = vpow.pop %v2414
          %v2416 = vmul.f32 %v2192, 1.442695
          %v2417 = vpow.pop %v2416
          %v2418 = vmul.f32 %v2193, 1.442695
          %v2419 = vpow.pop %v2418
          %v2420 = vmul.f32 %v2194, 1.442695
          %v2421 = vpow.pop %v2420
          %v2422 = vmul.f32 %v2195, 1.442695
          %v2423 = vpow.pop %v2422
          %v2424 = vmul.f32 %v2196, 1.442695
          %v2425 = vpow.pop %v2424
          %v2426 = vmul.f32 %v2197, 1.442695
          %v2427 = vpow.pop %v2426
          %v2428 = vmul.f32 %v2198, 1.442695
          %v2429 = vpow.pop %v2428
          %v2430 = vmul.f32 %v2199, 1.442695
          %v2431 = vpow.pop %v2430
          %v2432 = vmul.f32 %v2200, 1.442695
          %v2433 = vpow.pop %v2432
          %v2434 = vmul.f32 %v2201, 1.442695
          %v2435 = vpow.pop %v2434
          %v2436 = vmul.f32 %v2202, 1.442695
          %v2437 = vpow.pop %v2436
          %v2438 = vmul.f32 %v2203, 1.442695
          %v2439 = vpow.pop %v2438
          %v2440 = vmul.f32 %v2204, 1.442695
          %v2441 = vpow.pop %v2440
          %v2442 = vmul.f32 %v2205, 1.442695
          %v2443 = vpow.pop %v2442
          %v2444 = vmul.f32 %v2206, 1.442695
          %v2445 = vpow.pop %v2444
          %v2446 = vmul.f32 %v2207, 1.442695
          %v2447 = vpow.pop %v2446
          %v2448 = vmul.f32 %v2208, 1.442695
          %v2449 = vpow.pop %v2448
          %v2450 = vmul.f32 %v2209, 1.442695
          %v2451 = vpow.pop %v2450
          %v2452 = vmul.f32 %v2210, 1.442695
          %v2453 = vpow.pop %v2452
          %v2454 = vmul.f32 %v2211, 1.442695
          %v2455 = vpow.pop %v2454
          %v2456 = vmul.f32 %v2212, 1.442695
          %v2457 = vpow.pop %v2456
          %v2458 = vmul.f32 %v2213, 1.442695
          %v2459 = vpow.pop %v2458
          %v2460 = vmul.f32 %v2214, 1.442695
          %v2461 = vpow.pop %v2460
          %v2462 = vmul.f32 %v2215, 1.442695
          %v2463 = vpow.pop %v2462
          %v2464 = vmul.f32 %v2216, 1.442695
          %v2465 = vpow.pop %v2464
          %v2466 = vmul.f32 %v2217, 1.442695
          %v2467 = vpow.pop %v2466
          %v2468 = vmul.f32 %v2218, 1.442695
          %v2469 = vpow.pop %v2468
          %v2470 = vmul.f32 %v2219, 1.442695
          %v2471 = vpow.pop %v2470
          %v2472 = vmul.f32 %v2220, 1.442695
          %v2473 = vpow.pop %v2472
          %v2474 = vmul.f32 %v2221, 1.442695
          %v2475 = vpow.pop %v2474
          %v2476 = vmul.f32 %v2222, 1.442695
          %v2477 = vpow.pop %v2476
          %v2478 = vmul.f32 %v2223, 1.442695
          %v2479 = vpow.pop %v2478
          %v2480 = vld [vmem:[#allocation3] sm:$0xff]
          %v2481 = vld [vmem:[#allocation3 + $0x8] sm:$0xff]
          %v2482 = vld [vmem:[#allocation3 + $0x10] sm:$0xff]
          %v2483 = vld [vmem:[#allocation3 + $0x18] sm:$0xff]
          %v2484 = vld [vmem:[#allocation3 + $0x20] sm:$0xff]
          %v2485 = vld [vmem:[#allocation3 + $0x28] sm:$0xff]
          %v2486 = vld [vmem:[#allocation3 + $0x30] sm:$0xff]
          %v2487 = vld [vmem:[#allocation3 + $0x38] sm:$0xff]
          %v2488 = vld [vmem:[#allocation3 + $0x40] sm:$0xff]
          %v2489 = vld [vmem:[#allocation3 + $0x48] sm:$0xff]
          %v2490 = vld [vmem:[#allocation3 + $0x50] sm:$0xff]
          %v2491 = vld [vmem:[#allocation3 + $0x58] sm:$0xff]
          %v2492 = vld [vmem:[#allocation3 + $0x60] sm:$0xff]
          %v2493 = vld [vmem:[#allocation3 + $0x68] sm:$0xff]
          %v2494 = vld [vmem:[#allocation3 + $0x70] sm:$0xff]
          %v2495 = vld [vmem:[#allocation3 + $0x78] sm:$0xff]
          %v2496 = vmul.f32 %v1985, %v2480
          %v2497 = vmul.f32 %v1987, %v2481
          %v2498 = vmul.f32 %v1989, %v2482
          %v2499 = vmul.f32 %v1991, %v2483
          %v2500 = vmul.f32 %v1993, %v2484
          %v2501 = vmul.f32 %v1995, %v2485
          %v2502 = vmul.f32 %v1997, %v2486
          %v2503 = vmul.f32 %v1999, %v2487
          %v2504 = vmul.f32 %v2001, %v2488
          %v2505 = vmul.f32 %v2003, %v2489
          %v2506 = vmul.f32 %v2005, %v2490
          %v2507 = vmul.f32 %v2007, %v2491
          %v2508 = vmul.f32 %v2009, %v2492
          %v2509 = vmul.f32 %v2011, %v2493
          %v2510 = vmul.f32 %v2013, %v2494
          %v2511 = vmul.f32 %v2015, %v2495
          %v2512 = vadd.f32 %v2225, %v2227
          %v2513 = vadd.f32 %v2512, %v2229
          %v2514 = vadd.f32 %v2513, %v2231
          %v2515 = vadd.f32 %v2514, %v2233
          %v2516 = vadd.f32 %v2515, %v2235
          %v2517 = vadd.f32 %v2516, %v2237
          %v2518 = vadd.f32 %v2517, %v2239
          %2519 = vadd.xlane.f32.xlu0 %v2518
          %v2520 = vpop.xlane.xlu0 %2519
          %v2521 = vadd.f32 %v2241, %v2243
          %v2522 = vadd.f32 %v2521, %v2245
          %v2523 = vadd.f32 %v2522, %v2247
          %v2524 = vadd.f32 %v2523, %v2249
          %v2525 = vadd.f32 %v2524, %v2251
          %v2526 = vadd.f32 %v2525, %v2253
          %v2527 = vadd.f32 %v2526, %v2255
          %2528 = vadd.xlane.f32.xlu0 %v2527
          %v2529 = vpop.xlane.xlu0 %2528
          %v2530 = vadd.f32 %v2257, %v2259
          %v2531 = vadd.f32 %v2530, %v2261
          %v2532 = vadd.f32 %v2531, %v2263
          %v2533 = vadd.f32 %v2532, %v2265
          %v2534 = vadd.f32 %v2533, %v2267
          %v2535 = vadd.f32 %v2534, %v2269
          %v2536 = vadd.f32 %v2535, %v2271
          %2537 = vadd.xlane.f32.xlu0 %v2536
          %v2538 = vpop.xlane.xlu0 %2537
          %v2539 = vadd.f32 %v2273, %v2275
          %v2540 = vadd.f32 %v2539, %v2277
          %v2541 = vadd.f32 %v2540, %v2279
          %v2542 = vadd.f32 %v2541, %v2281
          %v2543 = vadd.f32 %v2542, %v2283
          %v2544 = vadd.f32 %v2543, %v2285
          %v2545 = vadd.f32 %v2544, %v2287
          %2546 = vadd.xlane.f32.xlu0 %v2545
          %v2547 = vpop.xlane.xlu0 %2546
          %v2548 = vadd.f32 %v2289, %v2291
          %v2549 = vadd.f32 %v2548, %v2293
          %v2550 = vadd.f32 %v2549, %v2295
          %v2551 = vadd.f32 %v2550, %v2297
          %v2552 = vadd.f32 %v2551, %v2299
          %v2553 = vadd.f32 %v2552, %v2301
          %v2554 = vadd.f32 %v2553, %v2303
          %2555 = vadd.xlane.f32.xlu0 %v2554
          %v2556 = vpop.xlane.xlu0 %2555
          %v2557 = vadd.f32 %v2305, %v2307
          %v2558 = vadd.f32 %v2557, %v2309
          %v2559 = vadd.f32 %v2558, %v2311
          %v2560 = vadd.f32 %v2559, %v2313
          %v2561 = vadd.f32 %v2560, %v2315
          %v2562 = vadd.f32 %v2561, %v2317
          %v2563 = vadd.f32 %v2562, %v2319
          %2564 = vadd.xlane.f32.xlu0 %v2563
          %v2565 = vpop.xlane.xlu0 %2564
          %v2566 = vadd.f32 %v2321, %v2323
          %v2567 = vadd.f32 %v2566, %v2325
          %v2568 = vadd.f32 %v2567, %v2327
          %v2569 = vadd.f32 %v2568, %v2329
          %v2570 = vadd.f32 %v2569, %v2331
          %v2571 = vadd.f32 %v2570, %v2333
          %v2572 = vadd.f32 %v2571, %v2335
          %2573 = vadd.xlane.f32.xlu0 %v2572
          %v2574 = vpop.xlane.xlu0 %2573
          %v2575 = vadd.f32 %v2337, %v2339
          %v2576 = vadd.f32 %v2575, %v2341
          %v2577 = vadd.f32 %v2576, %v2343
          %v2578 = vadd.f32 %v2577, %v2345
          %v2579 = vadd.f32 %v2578, %v2347
          %v2580 = vadd.f32 %v2579, %v2349
          %v2581 = vadd.f32 %v2580, %v2351
          %2582 = vadd.xlane.f32.xlu0 %v2581
          %v2583 = vpop.xlane.xlu0 %2582
          %v2584 = vadd.f32 %v2353, %v2355
          %v2585 = vadd.f32 %v2584, %v2357
          %v2586 = vadd.f32 %v2585, %v2359
          %v2587 = vadd.f32 %v2586, %v2361
          %v2588 = vadd.f32 %v2587, %v2363
          %v2589 = vadd.f32 %v2588, %v2365
          %v2590 = vadd.f32 %v2589, %v2367
          %2591 = vadd.xlane.f32.xlu0 %v2590
          %v2592 = vpop.xlane.xlu0 %2591
          %v2593 = vadd.f32 %v2369, %v2371
          %v2594 = vadd.f32 %v2593, %v2373
          %v2595 = vadd.f32 %v2594, %v2375
          %v2596 = vadd.f32 %v2595, %v2377
          %v2597 = vadd.f32 %v2596, %v2379
          %v2598 = vadd.f32 %v2597, %v2381
          %v2599 = vadd.f32 %v2598, %v2383
          %2600 = vadd.xlane.f32.xlu0 %v2599
          %v2601 = vpop.xlane.xlu0 %2600
          %v2602 = vadd.f32 %v2385, %v2387
          %v2603 = vadd.f32 %v2602, %v2389
          %v2604 = vadd.f32 %v2603, %v2391
          %v2605 = vadd.f32 %v2604, %v2393
          %v2606 = vadd.f32 %v2605, %v2395
          %v2607 = vadd.f32 %v2606, %v2397
          %v2608 = vadd.f32 %v2607, %v2399
          %2609 = vadd.xlane.f32.xlu0 %v2608
          %v2610 = vpop.xlane.xlu0 %2609
          %v2611 = vadd.f32 %v2401, %v2403
          %v2612 = vadd.f32 %v2611, %v2405
          %v2613 = vadd.f32 %v2612, %v2407
          %v2614 = vadd.f32 %v2613, %v2409
          %v2615 = vadd.f32 %v2614, %v2411
          %v2616 = vadd.f32 %v2615, %v2413
          %v2617 = vadd.f32 %v2616, %v2415
          %2618 = vadd.xlane.f32.xlu0 %v2617
          %v2619 = vpop.xlane.xlu0 %2618
          %v2620 = vadd.f32 %v2417, %v2419
          %v2621 = vadd.f32 %v2620, %v2421
          %v2622 = vadd.f32 %v2621, %v2423
          %v2623 = vadd.f32 %v2622, %v2425
          %v2624 = vadd.f32 %v2623, %v2427
          %v2625 = vadd.f32 %v2624, %v2429
          %v2626 = vadd.f32 %v2625, %v2431
          %2627 = vadd.xlane.f32.xlu0 %v2626
          %v2628 = vpop.xlane.xlu0 %2627
          %v2629 = vadd.f32 %v2433, %v2435
          %v2630 = vadd.f32 %v2629, %v2437
          %v2631 = vadd.f32 %v2630, %v2439
          %v2632 = vadd.f32 %v2631, %v2441
          %v2633 = vadd.f32 %v2632, %v2443
          %v2634 = vadd.f32 %v2633, %v2445
          %v2635 = vadd.f32 %v2634, %v2447
          %2636 = vadd.xlane.f32.xlu0 %v2635
          %v2637 = vpop.xlane.xlu0 %2636
          %v2638 = vadd.f32 %v2449, %v2451
          %v2639 = vadd.f32 %v2638, %v2453
          %v2640 = vadd.f32 %v2639, %v2455
          %v2641 = vadd.f32 %v2640, %v2457
          %v2642 = vadd.f32 %v2641, %v2459
          %v2643 = vadd.f32 %v2642, %v2461
          %v2644 = vadd.f32 %v2643, %v2463
          %2645 = vadd.xlane.f32.xlu0 %v2644
          %v2646 = vpop.xlane.xlu0 %2645
          %v2647 = vadd.f32 %v2465, %v2467
          %v2648 = vadd.f32 %v2647, %v2469
          %v2649 = vadd.f32 %v2648, %v2471
          %v2650 = vadd.f32 %v2649, %v2473
          %v2651 = vadd.f32 %v2650, %v2475
          %v2652 = vadd.f32 %v2651, %v2477
          %v2653 = vadd.f32 %v2652, %v2479
          %2654 = vadd.xlane.f32.xlu0 %v2653
          %v2655 = vpop.xlane.xlu0 %2654
          %v2656 = vadd.f32 %v2496, %v2520
          %v2657 = vadd.f32 %v2497, %v2529
          %v2658 = vadd.f32 %v2498, %v2538
          %v2659 = vadd.f32 %v2499, %v2547
          %v2660 = vadd.f32 %v2500, %v2556
          %v2661 = vadd.f32 %v2501, %v2565
          %v2662 = vadd.f32 %v2502, %v2574
          %v2663 = vadd.f32 %v2503, %v2583
          %v2664 = vadd.f32 %v2504, %v2592
          %v2665 = vadd.f32 %v2505, %v2601
          %v2666 = vadd.f32 %v2506, %v2610
          %v2667 = vadd.f32 %v2507, %v2619
          %v2668 = vadd.f32 %v2508, %v2628
          %v2669 = vadd.f32 %v2509, %v2637
          %v2670 = vadd.f32 %v2510, %v2646
          %v2671 = vadd.f32 %v2511, %v2655
          %vm2672 = vcmask 7168
          %2673 = vst.msk [vmem:[#allocation3] sm:$0xff] %vm2672, %v2656
          %2674 = vst.msk [vmem:[#allocation3 + $0x8] sm:$0xff] %vm2672, %v2657
          %2675 = vst.msk [vmem:[#allocation3 + $0x10] sm:$0xff] %vm2672, %v2658
          %2676 = vst.msk [vmem:[#allocation3 + $0x18] sm:$0xff] %vm2672, %v2659
          %2677 = vst.msk [vmem:[#allocation3 + $0x20] sm:$0xff] %vm2672, %v2660
          %2678 = vst.msk [vmem:[#allocation3 + $0x28] sm:$0xff] %vm2672, %v2661
          %2679 = vst.msk [vmem:[#allocation3 + $0x30] sm:$0xff] %vm2672, %v2662
          %2680 = vst.msk [vmem:[#allocation3 + $0x38] sm:$0xff] %vm2672, %v2663
          %2681 = vst.msk [vmem:[#allocation3 + $0x40] sm:$0xff] %vm2672, %v2664
          %2682 = vst.msk [vmem:[#allocation3 + $0x48] sm:$0xff] %vm2672, %v2665
          %2683 = vst.msk [vmem:[#allocation3 + $0x50] sm:$0xff] %vm2672, %v2666
          %2684 = vst.msk [vmem:[#allocation3 + $0x58] sm:$0xff] %vm2672, %v2667
          %2685 = vst.msk [vmem:[#allocation3 + $0x60] sm:$0xff] %vm2672, %v2668
          %2686 = vst.msk [vmem:[#allocation3 + $0x68] sm:$0xff] %vm2672, %v2669
          %2687 = vst.msk [vmem:[#allocation3 + $0x70] sm:$0xff] %vm2672, %v2670
          %2688 = vst.msk [vmem:[#allocation3 + $0x78] sm:$0xff] %vm2672, %v2671
          %v2689 = vld [vmem:[#allocation4] sm:$0xff]
          %v2690 = vld [vmem:[#allocation4 + $0x8] sm:$0xff]
          %v2691 = vld [vmem:[#allocation4 + $0x10] sm:$0xff]
          %v2692 = vld [vmem:[#allocation4 + $0x18] sm:$0xff]
          %v2693 = vld [vmem:[#allocation4 + $0x20] sm:$0xff]
          %v2694 = vld [vmem:[#allocation4 + $0x28] sm:$0xff]
          %v2695 = vld [vmem:[#allocation4 + $0x30] sm:$0xff]
          %v2696 = vld [vmem:[#allocation4 + $0x38] sm:$0xff]
          %v2697 = vld [vmem:[#allocation4 + $0x40] sm:$0xff]
          %v2698 = vld [vmem:[#allocation4 + $0x48] sm:$0xff]
          %v2699 = vld [vmem:[#allocation4 + $0x50] sm:$0xff]
          %v2700 = vld [vmem:[#allocation4 + $0x58] sm:$0xff]
          %v2701 = vld [vmem:[#allocation4 + $0x60] sm:$0xff]
          %v2702 = vld [vmem:[#allocation4 + $0x68] sm:$0xff]
          %v2703 = vld [vmem:[#allocation4 + $0x70] sm:$0xff]
          %v2704 = vld [vmem:[#allocation4 + $0x78] sm:$0xff]
          %2706 = vset.pattern.permute.xlu0 0
          %2707 = vperm.xlu0 %2706, %v1985
          %v2708 = vpop.permute.xlu0 %2707
          %2711 = vset.pattern.permute.xlu0 0
          %2712 = vperm.xlu0 %2711, %v1987
          %v2713 = vpop.permute.xlu0 %2712
          %2716 = vset.pattern.permute.xlu0 0
          %2717 = vperm.xlu0 %2716, %v1989
          %v2718 = vpop.permute.xlu0 %2717
          %2721 = vset.pattern.permute.xlu0 0
          %2722 = vperm.xlu0 %2721, %v1991
          %v2723 = vpop.permute.xlu0 %2722
          %2726 = vset.pattern.permute.xlu0 0
          %2727 = vperm.xlu0 %2726, %v1993
          %v2728 = vpop.permute.xlu0 %2727
          %2731 = vset.pattern.permute.xlu0 0
          %2732 = vperm.xlu0 %2731, %v1995
          %v2733 = vpop.permute.xlu0 %2732
          %2736 = vset.pattern.permute.xlu0 0
          %2737 = vperm.xlu0 %2736, %v1997
          %v2738 = vpop.permute.xlu0 %2737
          %2741 = vset.pattern.permute.xlu0 0
          %2742 = vperm.xlu0 %2741, %v1999
          %v2743 = vpop.permute.xlu0 %2742
          %2746 = vset.pattern.permute.xlu0 0
          %2747 = vperm.xlu0 %2746, %v2001
          %v2748 = vpop.permute.xlu0 %2747
          %2751 = vset.pattern.permute.xlu0 0
          %2752 = vperm.xlu0 %2751, %v2003
          %v2753 = vpop.permute.xlu0 %2752
          %2756 = vset.pattern.permute.xlu0 0
          %2757 = vperm.xlu0 %2756, %v2005
          %v2758 = vpop.permute.xlu0 %2757
          %2761 = vset.pattern.permute.xlu0 0
          %2762 = vperm.xlu0 %2761, %v2007
          %v2763 = vpop.permute.xlu0 %2762
          %2766 = vset.pattern.permute.xlu0 0
          %2767 = vperm.xlu0 %2766, %v2009
          %v2768 = vpop.permute.xlu0 %2767
          %2771 = vset.pattern.permute.xlu0 0
          %2772 = vperm.xlu0 %2771, %v2011
          %v2773 = vpop.permute.xlu0 %2772
          %2776 = vset.pattern.permute.xlu0 0
          %2777 = vperm.xlu0 %2776, %v2013
          %v2778 = vpop.permute.xlu0 %2777
          %2781 = vset.pattern.permute.xlu0 0
          %2782 = vperm.xlu0 %2781, %v2015
          %v2783 = vpop.permute.xlu0 %2782
          %v2785 = vmul.f32 %v2708, %v2689
          %v2786 = vmul.f32 %v2713, %v2690
          %v2787 = vmul.f32 %v2718, %v2691
          %v2788 = vmul.f32 %v2723, %v2692
          %v2789 = vmul.f32 %v2728, %v2693
          %v2790 = vmul.f32 %v2733, %v2694
          %v2791 = vmul.f32 %v2738, %v2695
          %v2792 = vmul.f32 %v2743, %v2696
          %v2793 = vmul.f32 %v2748, %v2697
          %v2794 = vmul.f32 %v2753, %v2698
          %v2795 = vmul.f32 %v2758, %v2699
          %v2796 = vmul.f32 %v2763, %v2700
          %v2797 = vmul.f32 %v2768, %v2701
          %v2798 = vmul.f32 %v2773, %v2702
          %v2799 = vmul.f32 %v2778, %v2703
          %v2800 = vmul.f32 %v2783, %v2704
          %v2801 = vpack.c.bf16 %v2241, %v2225
          %v2802 = vpack.c.bf16 %v2243, %v2227
          %v2803 = vpack.c.bf16 %v2245, %v2229
          %v2804 = vpack.c.bf16 %v2247, %v2231
          %v2805 = vpack.c.bf16 %v2249, %v2233
          %v2806 = vpack.c.bf16 %v2251, %v2235
          %v2807 = vpack.c.bf16 %v2253, %v2237
          %v2808 = vpack.c.bf16 %v2255, %v2239
          %v2809 = vpack.c.bf16 %v2273, %v2257
          %v2810 = vpack.c.bf16 %v2275, %v2259
          %v2811 = vpack.c.bf16 %v2277, %v2261
          %v2812 = vpack.c.bf16 %v2279, %v2263
          %v2813 = vpack.c.bf16 %v2281, %v2265
          %v2814 = vpack.c.bf16 %v2283, %v2267
          %v2815 = vpack.c.bf16 %v2285, %v2269
          %v2816 = vpack.c.bf16 %v2287, %v2271
          %v2817 = vpack.c.bf16 %v2305, %v2289
          %v2818 = vpack.c.bf16 %v2307, %v2291
          %v2819 = vpack.c.bf16 %v2309, %v2293
          %v2820 = vpack.c.bf16 %v2311, %v2295
          %v2821 = vpack.c.bf16 %v2313, %v2297
          %v2822 = vpack.c.bf16 %v2315, %v2299
          %v2823 = vpack.c.bf16 %v2317, %v2301
          %v2824 = vpack.c.bf16 %v2319, %v2303
          %v2825 = vpack.c.bf16 %v2337, %v2321
          %v2826 = vpack.c.bf16 %v2339, %v2323
          %v2827 = vpack.c.bf16 %v2341, %v2325
          %v2828 = vpack.c.bf16 %v2343, %v2327
          %v2829 = vpack.c.bf16 %v2345, %v2329
          %v2830 = vpack.c.bf16 %v2347, %v2331
          %v2831 = vpack.c.bf16 %v2349, %v2333
          %v2832 = vpack.c.bf16 %v2351, %v2335
          %v2833 = vpack.c.bf16 %v2369, %v2353
          %v2834 = vpack.c.bf16 %v2371, %v2355
          %v2835 = vpack.c.bf16 %v2373, %v2357
          %v2836 = vpack.c.bf16 %v2375, %v2359
          %v2837 = vpack.c.bf16 %v2377, %v2361
          %v2838 = vpack.c.bf16 %v2379, %v2363
          %v2839 = vpack.c.bf16 %v2381, %v2365
          %v2840 = vpack.c.bf16 %v2383, %v2367
          %v2841 = vpack.c.bf16 %v2401, %v2385
          %v2842 = vpack.c.bf16 %v2403, %v2387
          %v2843 = vpack.c.bf16 %v2405, %v2389
          %v2844 = vpack.c.bf16 %v2407, %v2391
          %v2845 = vpack.c.bf16 %v2409, %v2393
          %v2846 = vpack.c.bf16 %v2411, %v2395
          %v2847 = vpack.c.bf16 %v2413, %v2397
          %v2848 = vpack.c.bf16 %v2415, %v2399
          %v2849 = vpack.c.bf16 %v2433, %v2417
          %v2850 = vpack.c.bf16 %v2435, %v2419
          %v2851 = vpack.c.bf16 %v2437, %v2421
          %v2852 = vpack.c.bf16 %v2439, %v2423
          %v2853 = vpack.c.bf16 %v2441, %v2425
          %v2854 = vpack.c.bf16 %v2443, %v2427
          %v2855 = vpack.c.bf16 %v2445, %v2429
          %v2856 = vpack.c.bf16 %v2447, %v2431
          %v2857 = vpack.c.bf16 %v2465, %v2449
          %v2858 = vpack.c.bf16 %v2467, %v2451
          %v2859 = vpack.c.bf16 %v2469, %v2453
          %v2860 = vpack.c.bf16 %v2471, %v2455
          %v2861 = vpack.c.bf16 %v2473, %v2457
          %v2862 = vpack.c.bf16 %v2475, %v2459
          %v2863 = vpack.c.bf16 %v2477, %v2461
          %v2864 = vpack.c.bf16 %v2479, %v2463
          %2865 = vmatprep.subr.bf16.mxu0 0
          %2866 = vmatpush1.bf16.msra.mxu0 %v872
          %2867 = vmatprep.subr.bf16.mxu0 0
          %2868 = vmatpush1.bf16.msra.mxu0 %v873
          %2869 = vmatprep.subr.bf16.mxu0 0
          %2870 = vmatpush1.bf16.msra.mxu0 %v874
          %2871 = vmatprep.subr.bf16.mxu0 0
          %2872 = vmatpush1.bf16.msra.mxu0 %v875
          %2873 = vmatprep.subr.bf16.mxu0 0
          %2874 = vmatpush1.bf16.msra.mxu0 %v876
          %2875 = vmatprep.subr.bf16.mxu0 0
          %2876 = vmatpush1.bf16.msra.mxu0 %v877
          %2877 = vmatprep.subr.bf16.mxu0 0
          %2878 = vmatpush1.bf16.msra.mxu0 %v878
          %2879 = vmatprep.subr.bf16.mxu0 0
          %2880 = vmatpush1.bf16.msra.mxu0 %v879
          %2881 = vmatprep.subr.bf16.mxu0 0
          %2882 = vmatpush1.bf16.msra.mxu0 %v880
          %2883 = vmatprep.subr.bf16.mxu0 0
          %2884 = vmatpush1.bf16.msra.mxu0 %v881
          %2885 = vmatprep.subr.bf16.mxu0 0
          %2886 = vmatpush1.bf16.msra.mxu0 %v882
          %2887 = vmatprep.subr.bf16.mxu0 0
          %2888 = vmatpush1.bf16.msra.mxu0 %v883
          %2889 = vmatprep.subr.bf16.mxu0 0
          %2890 = vmatpush1.bf16.msra.mxu0 %v884
          %2891 = vmatprep.subr.bf16.mxu0 0
          %2892 = vmatpush1.bf16.msra.mxu0 %v885
          %2893 = vmatprep.subr.bf16.mxu0 0
          %2894 = vmatpush1.bf16.msra.mxu0 %v886
          %2895 = vmatprep.subr.bf16.mxu0 0
          %2896 = vmatpush1.bf16.msra.mxu0 %v887
          %2897 = vmatprep.mubr.bf16.mxu0 %v2802
          %2898 = vmatmul.mubr.bf16.gmra.mrb[0].mxu0 %v2801
          %v2899 = vpop.f32.mrb[0].mxu0
          %v2900 = vadd.f32 0.0, %v2899
          %v2901 = vpop.f32.mrb[0].mxu0
          %v2902 = vpop.f32.mrb[0].mxu0
          %v2903 = vadd.f32 0.0, %v2902
          %v2904 = vpop.f32.mrb[0].mxu0
          %2905 = vmatprep.mubr.bf16.mxu0 %v2810
          %2906 = vmatmul.mubr.bf16.gmra.mrb[0].mxu0 %v2809
          %v2907 = vpop.f32.mrb[0].mxu0
          %v2908 = vadd.f32 0.0, %v2907
          %v2909 = vpop.f32.mrb[0].mxu0
          %v2910 = vpop.f32.mrb[0].mxu0
          %v2911 = vadd.f32 0.0, %v2910
          %v2912 = vpop.f32.mrb[0].mxu0
          %2913 = vmatprep.mubr.bf16.mxu0 %v2818
          %2914 = vmatmul.mubr.bf16.gmra.mrb[0].mxu0 %v2817
          %v2915 = vpop.f32.mrb[0].mxu0
          %v2916 = vadd.f32 0.0, %v2915
          %v2917 = vpop.f32.mrb[0].mxu0
          %v2918 = vpop.f32.mrb[0].mxu0
          %v2919 = vadd.f32 0.0, %v2918
          %v2920 = vpop.f32.mrb[0].mxu0
          %2921 = vmatprep.mubr.bf16.mxu0 %v2826
          %2922 = vmatmul.mubr.bf16.gmra.mrb[0].mxu0 %v2825
          %v2923 = vpop.f32.mrb[0].mxu0
          %v2924 = vadd.f32 0.0, %v2923
          %v2925 = vpop.f32.mrb[0].mxu0
          %v2926 = vpop.f32.mrb[0].mxu0
          %v2927 = vadd.f32 0.0, %v2926
          %v2928 = vpop.f32.mrb[0].mxu0
          %2929 = vmatprep.mubr.bf16.mxu0 %v2834
          %2930 = vmatmul.mubr.bf16.gmra.mrb[0].mxu0 %v2833
          %v2931 = vpop.f32.mrb[0].mxu0
          %v2932 = vadd.f32 0.0, %v2931
          %v2933 = vpop.f32.mrb[0].mxu0
          %v2934 = vpop.f32.mrb[0].mxu0
          %v2935 = vadd.f32 0.0, %v2934
          %v2936 = vpop.f32.mrb[0].mxu0
          %2937 = vmatprep.mubr.bf16.mxu0 %v2842
          %2938 = vmatmul.mubr.bf16.gmra.mrb[0].mxu0 %v2841
          %v2939 = vpop.f32.mrb[0].mxu0
          %v2940 = vadd.f32 0.0, %v2939
          %v2941 = vpop.f32.mrb[0].mxu0
          %v2942 = vpop.f32.mrb[0].mxu0
          %v2943 = vadd.f32 0.0, %v2942
          %v2944 = vpop.f32.mrb[0].mxu0
          %2945 = vmatprep.mubr.bf16.mxu0 %v2850
          %2946 = vmatmul.mubr.bf16.gmra.mrb[0].mxu0 %v2849
          %v2947 = vpop.f32.mrb[0].mxu0
          %v2948 = vadd.f32 0.0, %v2947
          %v2949 = vpop.f32.mrb[0].mxu0
          %v2950 = vpop.f32.mrb[0].mxu0
          %v2951 = vadd.f32 0.0, %v2950
          %v2952 = vpop.f32.mrb[0].mxu0
          %2953 = vmatprep.mubr.bf16.mxu0 %v2858
          %2954 = vmatmul.mubr.bf16.gmra.mrb[0].mxu0 %v2857
          %v2955 = vpop.f32.mrb[0].mxu0
          %v2956 = vadd.f32 0.0, %v2955
          %v2957 = vpop.f32.mrb[0].mxu0
          %v2958 = vpop.f32.mrb[0].mxu0
          %v2959 = vadd.f32 0.0, %v2958
          %v2960 = vpop.f32.mrb[0].mxu0
          %2961 = vdwg.mxu0
          %2962 = vmatprep.subr.bf16.mxu0 0
          %2963 = vmatpush1.bf16.msra.mxu0 %v888
          %2964 = vmatprep.subr.bf16.mxu0 0
          %2965 = vmatpush1.bf16.msra.mxu0 %v889
          %2966 = vmatprep.subr.bf16.mxu0 0
          %2967 = vmatpush1.bf16.msra.mxu0 %v890
          %2968 = vmatprep.subr.bf16.mxu0 0
          %2969 = vmatpush1.bf16.msra.mxu0 %v891
          %2970 = vmatprep.subr.bf16.mxu0 0
          %2971 = vmatpush1.bf16.msra.mxu0 %v892
          %2972 = vmatprep.subr.bf16.mxu0 0
          %2973 = vmatpush1.bf16.msra.mxu0 %v893
          %2974 = vmatprep.subr.bf16.mxu0 0
          %2975 = vmatpush1.bf16.msra.mxu0 %v894
          %2976 = vmatprep.subr.bf16.mxu0 0
          %2977 = vmatpush1.bf16.msra.mxu0 %v895
          %2978 = vmatprep.subr.bf16.mxu0 0
          %2979 = vmatpush1.bf16.msra.mxu0 %v896
          %2980 = vmatprep.subr.bf16.mxu0 0
          %2981 = vmatpush1.bf16.msra.mxu0 %v897
          %2982 = vmatprep.subr.bf16.mxu0 0
          %2983 = vmatpush1.bf16.msra.mxu0 %v898
          %2984 = vmatprep.subr.bf16.mxu0 0
          %2985 = vmatpush1.bf16.msra.mxu0 %v899
          %2986 = vmatprep.subr.bf16.mxu0 0
          %2987 = vmatpush1.bf16.msra.mxu0 %v900
          %2988 = vmatprep.subr.bf16.mxu0 0
          %2989 = vmatpush1.bf16.msra.mxu0 %v901
          %2990 = vmatprep.subr.bf16.mxu0 0
          %2991 = vmatpush1.bf16.msra.mxu0 %v902
          %2992 = vmatprep.subr.bf16.mxu0 0
          %2993 = vmatpush1.bf16.msra.mxu0 %v903
          %2994 = vmatprep.mubr.bf16.mxu0 %v2804
          %2995 = vmatmul.mubr.bf16.gmra.mrb[0].mxu0 %v2803
          %v2996 = vpop.f32.mrb[0].mxu0
          %v2997 = vadd.f32 %v2900, %v2996
          %v2998 = vpop.f32.mrb[0].mxu0
          %v2999 = vpop.f32.mrb[0].mxu0
          %v3000 = vadd.f32 %v2903, %v2999
          %v3001 = vpop.f32.mrb[0].mxu0
          %3002 = vmatprep.mubr.bf16.mxu0 %v2812
          %3003 = vmatmul.mubr.bf16.gmra.mrb[0].mxu0 %v2811
          %v3004 = vpop.f32.mrb[0].mxu0
          %v3005 = vadd.f32 %v2908, %v3004
          %v3006 = vpop.f32.mrb[0].mxu0
          %v3007 = vpop.f32.mrb[0].mxu0
          %v3008 = vadd.f32 %v2911, %v3007
          %v3009 = vpop.f32.mrb[0].mxu0
          %3010 = vmatprep.mubr.bf16.mxu0 %v2820
          %3011 = vmatmul.mubr.bf16.gmra.mrb[0].mxu0 %v2819
          %v3012 = vpop.f32.mrb[0].mxu0
          %v3013 = vadd.f32 %v2916, %v3012
          %v3014 = vpop.f32.mrb[0].mxu0
          %v3015 = vpop.f32.mrb[0].mxu0
          %v3016 = vadd.f32 %v2919, %v3015
          %v3017 = vpop.f32.mrb[0].mxu0
          %3018 = vmatprep.mubr.bf16.mxu0 %v2828
          %3019 = vmatmul.mubr.bf16.gmra.mrb[0].mxu0 %v2827
          %v3020 = vpop.f32.mrb[0].mxu0
          %v3021 = vadd.f32 %v2924, %v3020
          %v3022 = vpop.f32.mrb[0].mxu0
          %v3023 = vpop.f32.mrb[0].mxu0
          %v3024 = vadd.f32 %v2927, %v3023
          %v3025 = vpop.f32.mrb[0].mxu0
          %3026 = vmatprep.mubr.bf16.mxu0 %v2836
          %3027 = vmatmul.mubr.bf16.gmra.mrb[0].mxu0 %v2835
          %v3028 = vpop.f32.mrb[0].mxu0
          %v3029 = vadd.f32 %v2932, %v3028
          %v3030 = vpop.f32.mrb[0].mxu0
          %v3031 = vpop.f32.mrb[0].mxu0
          %v3032 = vadd.f32 %v2935, %v3031
          %v3033 = vpop.f32.mrb[0].mxu0
          %3034 = vmatprep.mubr.bf16.mxu0 %v2844
          %3035 = vmatmul.mubr.bf16.gmra.mrb[0].mxu0 %v2843
          %v3036 = vpop.f32.mrb[0].mxu0
          %v3037 = vadd.f32 %v2940, %v3036
          %v3038 = vpop.f32.mrb[0].mxu0
          %v3039 = vpop.f32.mrb[0].mxu0
          %v3040 = vadd.f32 %v2943, %v3039
          %v3041 = vpop.f32.mrb[0].mxu0
          %3042 = vmatprep.mubr.bf16.mxu0 %v2852
          %3043 = vmatmul.mubr.bf16.gmra.mrb[0].mxu0 %v2851
          %v3044 = vpop.f32.mrb[0].mxu0
          %v3045 = vadd.f32 %v2948, %v3044
          %v3046 = vpop.f32.mrb[0].mxu0
          %v3047 = vpop.f32.mrb[0].mxu0
          %v3048 = vadd.f32 %v2951, %v3047
          %v3049 = vpop.f32.mrb[0].mxu0
          %3050 = vmatprep.mubr.bf16.mxu0 %v2860
          %3051 = vmatmul.mubr.bf16.gmra.mrb[0].mxu0 %v2859
          %v3052 = vpop.f32.mrb[0].mxu0
          %v3053 = vadd.f32 %v2956, %v3052
          %v3054 = vpop.f32.mrb[0].mxu0
          %v3055 = vpop.f32.mrb[0].mxu0
          %v3056 = vadd.f32 %v2959, %v3055
          %v3057 = vpop.f32.mrb[0].mxu0
          %3058 = vdwg.mxu0
          %3059 = vmatprep.subr.bf16.mxu0 0
          %3060 = vmatpush1.bf16.msra.mxu0 %v904
          %3061 = vmatprep.subr.bf16.mxu0 0
          %3062 = vmatpush1.bf16.msra.mxu0 %v905
          %3063 = vmatprep.subr.bf16.mxu0 0
          %3064 = vmatpush1.bf16.msra.mxu0 %v906
          %3065 = vmatprep.subr.bf16.mxu0 0
          %3066 = vmatpush1.bf16.msra.mxu0 %v907
          %3067 = vmatprep.subr.bf16.mxu0 0
          %3068 = vmatpush1.bf16.msra.mxu0 %v908
          %3069 = vmatprep.subr.bf16.mxu0 0
          %3070 = vmatpush1.bf16.msra.mxu0 %v909
          %3071 = vmatprep.subr.bf16.mxu0 0
          %3072 = vmatpush1.bf16.msra.mxu0 %v910
          %3073 = vmatprep.subr.bf16.mxu0 0
          %3074 = vmatpush1.bf16.msra.mxu0 %v911
          %3075 = vmatprep.subr.bf16.mxu0 0
          %3076 = vmatpush1.bf16.msra.mxu0 %v912
          %3077 = vmatprep.subr.bf16.mxu0 0
          %3078 = vmatpush1.bf16.msra.mxu0 %v913
          %3079 = vmatprep.subr.bf16.mxu0 0
          %3080 = vmatpush1.bf16.msra.mxu0 %v914
          %3081 = vmatprep.subr.bf16.mxu0 0
          %3082 = vmatpush1.bf16.msra.mxu0 %v915
          %3083 = vmatprep.subr.bf16.mxu0 0
          %3084 = vmatpush1.bf16.msra.mxu0 %v916
          %3085 = vmatprep.subr.bf16.mxu0 0
          %3086 = vmatpush1.bf16.msra.mxu0 %v917
          %3087 = vmatprep.subr.bf16.mxu0 0
          %3088 = vmatpush1.bf16.msra.mxu0 %v918
          %3089 = vmatprep.subr.bf16.mxu0 0
          %3090 = vmatpush1.bf16.msra.mxu0 %v919
          %3091 = vmatprep.mubr.bf16.mxu0 %v2806
          %3092 = vmatmul.mubr.bf16.gmra.mrb[0].mxu0 %v2805
          %v3093 = vpop.f32.mrb[0].mxu0
          %v3094 = vadd.f32 %v2997, %v3093
          %v3095 = vpop.f32.mrb[0].mxu0
          %v3096 = vpop.f32.mrb[0].mxu0
          %v3097 = vadd.f32 %v3000, %v3096
          %v3098 = vpop.f32.mrb[0].mxu0
          %3099 = vmatprep.mubr.bf16.mxu0 %v2814
          %3100 = vmatmul.mubr.bf16.gmra.mrb[0].mxu0 %v2813
          %v3101 = vpop.f32.mrb[0].mxu0
          %v3102 = vadd.f32 %v3005, %v3101
          %v3103 = vpop.f32.mrb[0].mxu0
          %v3104 = vpop.f32.mrb[0].mxu0
          %v3105 = vadd.f32 %v3008, %v3104
          %v3106 = vpop.f32.mrb[0].mxu0
          %3107 = vmatprep.mubr.bf16.mxu0 %v2822
          %3108 = vmatmul.mubr.bf16.gmra.mrb[0].mxu0 %v2821
          %v3109 = vpop.f32.mrb[0].mxu0
          %v3110 = vadd.f32 %v3013, %v3109
          %v3111 = vpop.f32.mrb[0].mxu0
          %v3112 = vpop.f32.mrb[0].mxu0
          %v3113 = vadd.f32 %v3016, %v3112
          %v3114 = vpop.f32.mrb[0].mxu0
          %3115 = vmatprep.mubr.bf16.mxu0 %v2830
          %3116 = vmatmul.mubr.bf16.gmra.mrb[0].mxu0 %v2829
          %v3117 = vpop.f32.mrb[0].mxu0
          %v3118 = vadd.f32 %v3021, %v3117
          %v3119 = vpop.f32.mrb[0].mxu0
          %v3120 = vpop.f32.mrb[0].mxu0
          %v3121 = vadd.f32 %v3024, %v3120
          %v3122 = vpop.f32.mrb[0].mxu0
          %3123 = vmatprep.mubr.bf16.mxu0 %v2838
          %3124 = vmatmul.mubr.bf16.gmra.mrb[0].mxu0 %v2837
          %v3125 = vpop.f32.mrb[0].mxu0
          %v3126 = vadd.f32 %v3029, %v3125
          %v3127 = vpop.f32.mrb[0].mxu0
          %v3128 = vpop.f32.mrb[0].mxu0
          %v3129 = vadd.f32 %v3032, %v3128
          %v3130 = vpop.f32.mrb[0].mxu0
          %3131 = vmatprep.mubr.bf16.mxu0 %v2846
          %3132 = vmatmul.mubr.bf16.gmra.mrb[0].mxu0 %v2845
          %v3133 = vpop.f32.mrb[0].mxu0
          %v3134 = vadd.f32 %v3037, %v3133
          %v3135 = vpop.f32.mrb[0].mxu0
          %v3136 = vpop.f32.mrb[0].mxu0
          %v3137 = vadd.f32 %v3040, %v3136
          %v3138 = vpop.f32.mrb[0].mxu0
          %3139 = vmatprep.mubr.bf16.mxu0 %v2854
          %3140 = vmatmul.mubr.bf16.gmra.mrb[0].mxu0 %v2853
          %v3141 = vpop.f32.mrb[0].mxu0
          %v3142 = vadd.f32 %v3045, %v3141
          %v3143 = vpop.f32.mrb[0].mxu0
          %v3144 = vpop.f32.mrb[0].mxu0
          %v3145 = vadd.f32 %v3048, %v3144
          %v3146 = vpop.f32.mrb[0].mxu0
          %3147 = vmatprep.mubr.bf16.mxu0 %v2862
          %3148 = vmatmul.mubr.bf16.gmra.mrb[0].mxu0 %v2861
          %v3149 = vpop.f32.mrb[0].mxu0
          %v3150 = vadd.f32 %v3053, %v3149
          %v3151 = vpop.f32.mrb[0].mxu0
          %v3152 = vpop.f32.mrb[0].mxu0
          %v3153 = vadd.f32 %v3056, %v3152
          %v3154 = vpop.f32.mrb[0].mxu0
          %3155 = vdwg.mxu0
          %3156 = vmatprep.subr.bf16.mxu0 0
          %3157 = vmatpush1.bf16.msra.mxu0 %v920
          %3158 = vmatprep.subr.bf16.mxu0 0
          %3159 = vmatpush1.bf16.msra.mxu0 %v921
          %3160 = vmatprep.subr.bf16.mxu0 0
          %3161 = vmatpush1.bf16.msra.mxu0 %v922
          %3162 = vmatprep.subr.bf16.mxu0 0
          %3163 = vmatpush1.bf16.msra.mxu0 %v923
          %3164 = vmatprep.subr.bf16.mxu0 0
          %3165 = vmatpush1.bf16.msra.mxu0 %v924
          %3166 = vmatprep.subr.bf16.mxu0 0
          %3167 = vmatpush1.bf16.msra.mxu0 %v925
          %3168 = vmatprep.subr.bf16.mxu0 0
          %3169 = vmatpush1.bf16.msra.mxu0 %v926
          %3170 = vmatprep.subr.bf16.mxu0 0
          %3171 = vmatpush1.bf16.msra.mxu0 %v927
          %3172 = vmatprep.subr.bf16.mxu0 0
          %3173 = vmatpush1.bf16.msra.mxu0 %v928
          %3174 = vmatprep.subr.bf16.mxu0 0
          %3175 = vmatpush1.bf16.msra.mxu0 %v929
          %3176 = vmatprep.subr.bf16.mxu0 0
          %3177 = vmatpush1.bf16.msra.mxu0 %v930
          %3178 = vmatprep.subr.bf16.mxu0 0
          %3179 = vmatpush1.bf16.msra.mxu0 %v931
          %3180 = vmatprep.subr.bf16.mxu0 0
          %3181 = vmatpush1.bf16.msra.mxu0 %v932
          %3182 = vmatprep.subr.bf16.mxu0 0
          %3183 = vmatpush1.bf16.msra.mxu0 %v933
          %3184 = vmatprep.subr.bf16.mxu0 0
          %3185 = vmatpush1.bf16.msra.mxu0 %v934
          %3186 = vmatprep.subr.bf16.mxu0 0
          %3187 = vmatpush1.bf16.msra.mxu0 %v935
          %3188 = vmatprep.mubr.bf16.mxu0 %v2808
          %3189 = vmatmul.mubr.bf16.gmra.mrb[0].mxu0 %v2807
          %v3190 = vpop.f32.mrb[0].mxu0
          %v3191 = vadd.f32 %v3094, %v3190
          %v3192 = vpop.f32.mrb[0].mxu0
          %v3193 = vpop.f32.mrb[0].mxu0
          %v3194 = vadd.f32 %v3097, %v3193
          %v3195 = vpop.f32.mrb[0].mxu0
          %3196 = vmatprep.mubr.bf16.mxu0 %v2816
          %3197 = vmatmul.mubr.bf16.gmra.mrb[0].mxu0 %v2815
          %v3198 = vpop.f32.mrb[0].mxu0
          %v3199 = vadd.f32 %v3102, %v3198
          %v3200 = vpop.f32.mrb[0].mxu0
          %v3201 = vpop.f32.mrb[0].mxu0
          %v3202 = vadd.f32 %v3105, %v3201
          %v3203 = vpop.f32.mrb[0].mxu0
          %3204 = vmatprep.mubr.bf16.mxu0 %v2824
          %3205 = vmatmul.mubr.bf16.gmra.mrb[0].mxu0 %v2823
          %v3206 = vpop.f32.mrb[0].mxu0
          %v3207 = vadd.f32 %v3110, %v3206
          %v3208 = vpop.f32.mrb[0].mxu0
          %v3209 = vpop.f32.mrb[0].mxu0
          %v3210 = vadd.f32 %v3113, %v3209
          %v3211 = vpop.f32.mrb[0].mxu0
          %3212 = vmatprep.mubr.bf16.mxu0 %v2832
          %3213 = vmatmul.mubr.bf16.gmra.mrb[0].mxu0 %v2831
          %v3214 = vpop.f32.mrb[0].mxu0
          %v3215 = vadd.f32 %v3118, %v3214
          %v3216 = vpop.f32.mrb[0].mxu0
          %v3217 = vpop.f32.mrb[0].mxu0
          %v3218 = vadd.f32 %v3121, %v3217
          %v3219 = vpop.f32.mrb[0].mxu0
          %3220 = vmatprep.mubr.bf16.mxu0 %v2840
          %3221 = vmatmul.mubr.bf16.gmra.mrb[0].mxu0 %v2839
          %v3222 = vpop.f32.mrb[0].mxu0
          %v3223 = vadd.f32 %v3126, %v3222
          %v3224 = vpop.f32.mrb[0].mxu0
          %v3225 = vpop.f32.mrb[0].mxu0
          %v3226 = vadd.f32 %v3129, %v3225
          %v3227 = vpop.f32.mrb[0].mxu0
          %3228 = vmatprep.mubr.bf16.mxu0 %v2848
          %3229 = vmatmul.mubr.bf16.gmra.mrb[0].mxu0 %v2847
          %v3230 = vpop.f32.mrb[0].mxu0
          %v3231 = vadd.f32 %v3134, %v3230
          %v3232 = vpop.f32.mrb[0].mxu0
          %v3233 = vpop.f32.mrb[0].mxu0
          %v3234 = vadd.f32 %v3137, %v3233
          %v3235 = vpop.f32.mrb[0].mxu0
          %3236 = vmatprep.mubr.bf16.mxu0 %v2856
          %3237 = vmatmul.mubr.bf16.gmra.mrb[0].mxu0 %v2855
          %v3238 = vpop.f32.mrb[0].mxu0
          %v3239 = vadd.f32 %v3142, %v3238
          %v3240 = vpop.f32.mrb[0].mxu0
          %v3241 = vpop.f32.mrb[0].mxu0
          %v3242 = vadd.f32 %v3145, %v3241
          %v3243 = vpop.f32.mrb[0].mxu0
          %3244 = vmatprep.mubr.bf16.mxu0 %v2864
          %3245 = vmatmul.mubr.bf16.gmra.mrb[0].mxu0 %v2863
          %v3246 = vpop.f32.mrb[0].mxu0
          %v3247 = vadd.f32 %v3150, %v3246
          %v3248 = vpop.f32.mrb[0].mxu0
          %v3249 = vpop.f32.mrb[0].mxu0
          %v3250 = vadd.f32 %v3153, %v3249
          %v3251 = vpop.f32.mrb[0].mxu0
          %3252 = vdwg.mxu0
          %v3253 = vadd.f32 %v2785, %v3191
          %v3254 = vadd.f32 %v2786, %v3194
          %v3255 = vadd.f32 %v2787, %v3199
          %v3256 = vadd.f32 %v2788, %v3202
          %v3257 = vadd.f32 %v2789, %v3207
          %v3258 = vadd.f32 %v2790, %v3210
          %v3259 = vadd.f32 %v2791, %v3215
          %v3260 = vadd.f32 %v2792, %v3218
          %v3261 = vadd.f32 %v2793, %v3223
          %v3262 = vadd.f32 %v2794, %v3226
          %v3263 = vadd.f32 %v2795, %v3231
          %v3264 = vadd.f32 %v2796, %v3234
          %v3265 = vadd.f32 %v2797, %v3239
          %v3266 = vadd.f32 %v2798, %v3242
          %v3267 = vadd.f32 %v2799, %v3247
          %v3268 = vadd.f32 %v2800, %v3250
          %3269 = vst [vmem:[#allocation4] sm:$0xff] %v3253
          %3270 = vst [vmem:[#allocation4 + $0x8] sm:$0xff] %v3254
          %3271 = vst [vmem:[#allocation4 + $0x10] sm:$0xff] %v3255
          %3272 = vst [vmem:[#allocation4 + $0x18] sm:$0xff] %v3256
          %3273 = vst [vmem:[#allocation4 + $0x20] sm:$0xff] %v3257
          %3274 = vst [vmem:[#allocation4 + $0x28] sm:$0xff] %v3258
          %3275 = vst [vmem:[#allocation4 + $0x30] sm:$0xff] %v3259
          %3276 = vst [vmem:[#allocation4 + $0x38] sm:$0xff] %v3260
          %3277 = vst [vmem:[#allocation4 + $0x40] sm:$0xff] %v3261
          %3278 = vst [vmem:[#allocation4 + $0x48] sm:$0xff] %v3262
          %3279 = vst [vmem:[#allocation4 + $0x50] sm:$0xff] %v3263
          %3280 = vst [vmem:[#allocation4 + $0x58] sm:$0xff] %v3264
          %3281 = vst [vmem:[#allocation4 + $0x60] sm:$0xff] %v3265
          %3282 = vst [vmem:[#allocation4 + $0x68] sm:$0xff] %v3266
          %3283 = vst [vmem:[#allocation4 + $0x70] sm:$0xff] %v3267
          %3284 = vst [vmem:[#allocation4 + $0x78] sm:$0xff] %v3268
          %3285 = vst.msk [vmem:[#allocation2] sm:$0xff] %vm2672, %v1920
          %3286 = vst.msk [vmem:[#allocation2 + $0x8] sm:$0xff] %vm2672, %v1921
          %3287 = vst.msk [vmem:[#allocation2 + $0x10] sm:$0xff] %vm2672, %v1922
          %3288 = vst.msk [vmem:[#allocation2 + $0x18] sm:$0xff] %vm2672, %v1923
          %3289 = vst.msk [vmem:[#allocation2 + $0x20] sm:$0xff] %vm2672, %v1924
          %3290 = vst.msk [vmem:[#allocation2 + $0x28] sm:$0xff] %vm2672, %v1925
          %3291 = vst.msk [vmem:[#allocation2 + $0x30] sm:$0xff] %vm2672, %v1926
          %3292 = vst.msk [vmem:[#allocation2 + $0x38] sm:$0xff] %vm2672, %v1927
          %3293 = vst.msk [vmem:[#allocation2 + $0x40] sm:$0xff] %vm2672, %v1928
          %3294 = vst.msk [vmem:[#allocation2 + $0x48] sm:$0xff] %vm2672, %v1929
          %3295 = vst.msk [vmem:[#allocation2 + $0x50] sm:$0xff] %vm2672, %v1930
          %3296 = vst.msk [vmem:[#allocation2 + $0x58] sm:$0xff] %vm2672, %v1931
          %3297 = vst.msk [vmem:[#allocation2 + $0x60] sm:$0xff] %vm2672, %v1932
          %3298 = vst.msk [vmem:[#allocation2 + $0x68] sm:$0xff] %vm2672, %v1933
          %3299 = vst.msk [vmem:[#allocation2 + $0x70] sm:$0xff] %vm2672, %v1934
          %3300 = vst.msk [vmem:[#allocation2 + $0x78] sm:$0xff] %vm2672, %v1935
        $region60: #{tpu_custom_call.1} parent=35 // pred_fallthru
          _
        // Predicated region
        $region61: #{tpu_custom_call.1} parent=35 // pred_check
          %p3301 = pneg %p365
        $region62: #{tpu_custom_call.1} parent=35 // pred_check_branch
          %3303 = sbr.rel (%p3301) target = $region64
        $region63: #{tpu_custom_call.1} parent=35 // pred_region
          %v3304 = vld [vmem:[#allocation3] sm:$0xff]
          %v3305 = vld [vmem:[#allocation3 + $0x8] sm:$0xff]
          %v3306 = vld [vmem:[#allocation3 + $0x10] sm:$0xff]
          %v3307 = vld [vmem:[#allocation3 + $0x18] sm:$0xff]
          %v3308 = vld [vmem:[#allocation3 + $0x20] sm:$0xff]
          %v3309 = vld [vmem:[#allocation3 + $0x28] sm:$0xff]
          %v3310 = vld [vmem:[#allocation3 + $0x30] sm:$0xff]
          %v3311 = vld [vmem:[#allocation3 + $0x38] sm:$0xff]
          %v3312 = vld [vmem:[#allocation3 + $0x40] sm:$0xff]
          %v3313 = vld [vmem:[#allocation3 + $0x48] sm:$0xff]
          %v3314 = vld [vmem:[#allocation3 + $0x50] sm:$0xff]
          %v3315 = vld [vmem:[#allocation3 + $0x58] sm:$0xff]
          %v3316 = vld [vmem:[#allocation3 + $0x60] sm:$0xff]
          %v3317 = vld [vmem:[#allocation3 + $0x68] sm:$0xff]
          %v3318 = vld [vmem:[#allocation3 + $0x70] sm:$0xff]
          %v3319 = vld [vmem:[#allocation3 + $0x78] sm:$0xff]
          %vm3320 = vcmp.eq.f32.partialorder %v3304, 0.0
          %vm3321 = vcmp.eq.f32.partialorder %v3305, 0.0
          %vm3322 = vcmp.eq.f32.partialorder %v3306, 0.0
          %vm3323 = vcmp.eq.f32.partialorder %v3307, 0.0
          %vm3324 = vcmp.eq.f32.partialorder %v3308, 0.0
          %vm3325 = vcmp.eq.f32.partialorder %v3309, 0.0
          %vm3326 = vcmp.eq.f32.partialorder %v3310, 0.0
          %vm3327 = vcmp.eq.f32.partialorder %v3311, 0.0
          %vm3328 = vcmp.eq.f32.partialorder %v3312, 0.0
          %vm3329 = vcmp.eq.f32.partialorder %v3313, 0.0
          %vm3330 = vcmp.eq.f32.partialorder %v3314, 0.0
          %vm3331 = vcmp.eq.f32.partialorder %v3315, 0.0
          %vm3332 = vcmp.eq.f32.partialorder %v3316, 0.0
          %vm3333 = vcmp.eq.f32.partialorder %v3317, 0.0
          %vm3334 = vcmp.eq.f32.partialorder %v3318, 0.0
          %vm3335 = vcmp.eq.f32.partialorder %v3319, 0.0
          %v3336 = vsel %vm3320, 1.0, %v3304
          %v3337 = vsel %vm3321, 1.0, %v3305
          %v3338 = vsel %vm3322, 1.0, %v3306
          %v3339 = vsel %vm3323, 1.0, %v3307
          %v3340 = vsel %vm3324, 1.0, %v3308
          %v3341 = vsel %vm3325, 1.0, %v3309
          %v3342 = vsel %vm3326, 1.0, %v3310
          %v3343 = vsel %vm3327, 1.0, %v3311
          %v3344 = vsel %vm3328, 1.0, %v3312
          %v3345 = vsel %vm3329, 1.0, %v3313
          %v3346 = vsel %vm3330, 1.0, %v3314
          %v3347 = vsel %vm3331, 1.0, %v3315
          %v3348 = vsel %vm3332, 1.0, %v3316
          %v3349 = vsel %vm3333, 1.0, %v3317
          %v3350 = vsel %vm3334, 1.0, %v3318
          %v3351 = vsel %vm3335, 1.0, %v3319
          %v3352 = vld [vmem:[#allocation4] sm:$0xff]
          %v3353 = vld [vmem:[#allocation4 + $0x8] sm:$0xff]
          %v3354 = vld [vmem:[#allocation4 + $0x10] sm:$0xff]
          %v3355 = vld [vmem:[#allocation4 + $0x18] sm:$0xff]
          %v3356 = vld [vmem:[#allocation4 + $0x20] sm:$0xff]
          %v3357 = vld [vmem:[#allocation4 + $0x28] sm:$0xff]
          %v3358 = vld [vmem:[#allocation4 + $0x30] sm:$0xff]
          %v3359 = vld [vmem:[#allocation4 + $0x38] sm:$0xff]
          %v3360 = vld [vmem:[#allocation4 + $0x40] sm:$0xff]
          %v3361 = vld [vmem:[#allocation4 + $0x48] sm:$0xff]
          %v3362 = vld [vmem:[#allocation4 + $0x50] sm:$0xff]
          %v3363 = vld [vmem:[#allocation4 + $0x58] sm:$0xff]
          %v3364 = vld [vmem:[#allocation4 + $0x60] sm:$0xff]
          %v3365 = vld [vmem:[#allocation4 + $0x68] sm:$0xff]
          %v3366 = vld [vmem:[#allocation4 + $0x70] sm:$0xff]
          %v3367 = vld [vmem:[#allocation4 + $0x78] sm:$0xff]
          %v3368 = vrcp.pop %v3336
          %v3369 = vrcp.pop %v3337
          %v3370 = vrcp.pop %v3338
          %v3371 = vrcp.pop %v3339
          %v3372 = vrcp.pop %v3340
          %v3373 = vrcp.pop %v3341
          %v3374 = vrcp.pop %v3342
          %v3375 = vrcp.pop %v3343
          %v3376 = vrcp.pop %v3344
          %v3377 = vrcp.pop %v3345
          %v3378 = vrcp.pop %v3346
          %v3379 = vrcp.pop %v3347
          %v3380 = vrcp.pop %v3348
          %v3381 = vrcp.pop %v3349
          %v3382 = vrcp.pop %v3350
          %v3383 = vrcp.pop %v3351
          %3385 = vset.pattern.permute.xlu0 0
          %3386 = vperm.xlu0 %3385, %v3368
          %v3387 = vpop.permute.xlu0 %3386
          %3390 = vset.pattern.permute.xlu0 0
          %3391 = vperm.xlu0 %3390, %v3369
          %v3392 = vpop.permute.xlu0 %3391
          %3395 = vset.pattern.permute.xlu0 0
          %3396 = vperm.xlu0 %3395, %v3370
          %v3397 = vpop.permute.xlu0 %3396
          %3400 = vset.pattern.permute.xlu0 0
          %3401 = vperm.xlu0 %3400, %v3371
          %v3402 = vpop.permute.xlu0 %3401
          %3405 = vset.pattern.permute.xlu0 0
          %3406 = vperm.xlu0 %3405, %v3372
          %v3407 = vpop.permute.xlu0 %3406
          %3410 = vset.pattern.permute.xlu0 0
          %3411 = vperm.xlu0 %3410, %v3373
          %v3412 = vpop.permute.xlu0 %3411
          %3415 = vset.pattern.permute.xlu0 0
          %3416 = vperm.xlu0 %3415, %v3374
          %v3417 = vpop.permute.xlu0 %3416
          %3420 = vset.pattern.permute.xlu0 0
          %3421 = vperm.xlu0 %3420, %v3375
          %v3422 = vpop.permute.xlu0 %3421
          %3425 = vset.pattern.permute.xlu0 0
          %3426 = vperm.xlu0 %3425, %v3376
          %v3427 = vpop.permute.xlu0 %3426
          %3430 = vset.pattern.permute.xlu0 0
          %3431 = vperm.xlu0 %3430, %v3377
          %v3432 = vpop.permute.xlu0 %3431
          %3435 = vset.pattern.permute.xlu0 0
          %3436 = vperm.xlu0 %3435, %v3378
          %v3437 = vpop.permute.xlu0 %3436
          %3440 = vset.pattern.permute.xlu0 0
          %3441 = vperm.xlu0 %3440, %v3379
          %v3442 = vpop.permute.xlu0 %3441
          %3445 = vset.pattern.permute.xlu0 0
          %3446 = vperm.xlu0 %3445, %v3380
          %v3447 = vpop.permute.xlu0 %3446
          %3450 = vset.pattern.permute.xlu0 0
          %3451 = vperm.xlu0 %3450, %v3381
          %v3452 = vpop.permute.xlu0 %3451
          %3455 = vset.pattern.permute.xlu0 0
          %3456 = vperm.xlu0 %3455, %v3382
          %v3457 = vpop.permute.xlu0 %3456
          %3460 = vset.pattern.permute.xlu0 0
          %3461 = vperm.xlu0 %3460, %v3383
          %v3462 = vpop.permute.xlu0 %3461
          %v3464 = vmul.f32 %v3352, %v3387
          %v3465 = vmul.f32 %v3353, %v3392
          %v3466 = vmul.f32 %v3354, %v3397
          %v3467 = vmul.f32 %v3355, %v3402
          %v3468 = vmul.f32 %v3356, %v3407
          %v3469 = vmul.f32 %v3357, %v3412
          %v3470 = vmul.f32 %v3358, %v3417
          %v3471 = vmul.f32 %v3359, %v3422
          %v3472 = vmul.f32 %v3360, %v3427
          %v3473 = vmul.f32 %v3361, %v3432
          %v3474 = vmul.f32 %v3362, %v3437
          %v3475 = vmul.f32 %v3363, %v3442
          %v3476 = vmul.f32 %v3364, %v3447
          %v3477 = vmul.f32 %v3365, %v3452
          %v3478 = vmul.f32 %v3366, %v3457
          %v3479 = vmul.f32 %v3367, %v3462
          %v3480 = vpack.c.bf16 %v3465, %v3464
          %v3481 = vpack.c.bf16 %v3467, %v3466
          %v3482 = vpack.c.bf16 %v3469, %v3468
          %v3483 = vpack.c.bf16 %v3471, %v3470
          %v3484 = vpack.c.bf16 %v3473, %v3472
          %v3485 = vpack.c.bf16 %v3475, %v3474
          %v3486 = vpack.c.bf16 %v3477, %v3476
          %v3487 = vpack.c.bf16 %v3479, %v3478
          %v3488 = vld [vmem:[#allocation14] sm:$0xf]
          %v3489 = vld [vmem:[#allocation14 + $0x4] sm:$0xf]
          %v3490 = vld [vmem:[#allocation14 + $0x8] sm:$0xf]
          %v3491 = vld [vmem:[#allocation14 + $0xc] sm:$0xf]
          %v3492 = vld [vmem:[#allocation14 + $0x10] sm:$0xf]
          %v3493 = vld [vmem:[#allocation14 + $0x14] sm:$0xf]
          %v3494 = vld [vmem:[#allocation14 + $0x18] sm:$0xf]
          %v3495 = vld [vmem:[#allocation14 + $0x1c] sm:$0xf]
          %v3496 = vld [vmem:[#allocation14 + $0x20] sm:$0xf]
          %v3497 = vld [vmem:[#allocation14 + $0x24] sm:$0xf]
          %v3498 = vld [vmem:[#allocation14 + $0x28] sm:$0xf]
          %v3499 = vld [vmem:[#allocation14 + $0x2c] sm:$0xf]
          %v3500 = vld [vmem:[#allocation14 + $0x30] sm:$0xf]
          %v3501 = vld [vmem:[#allocation14 + $0x34] sm:$0xf]
          %v3502 = vld [vmem:[#allocation14 + $0x38] sm:$0xf]
          %v3503 = vld [vmem:[#allocation14 + $0x3c] sm:$0xf]
          %v3520 = vunpack.c.l.b16 %v3488
          %v3521 = vunpack.c.l.b16 %v3489
          %v3522 = vunpack.c.l.b16 %v3490
          %v3523 = vunpack.c.l.b16 %v3491
          %v3524 = vunpack.c.l.b16 %v3492
          %v3525 = vunpack.c.l.b16 %v3493
          %v3526 = vunpack.c.l.b16 %v3494
          %v3527 = vunpack.c.l.b16 %v3495
          %v3528 = vunpack.c.l.b16 %v3496
          %v3529 = vunpack.c.l.b16 %v3497
          %v3530 = vunpack.c.l.b16 %v3498
          %v3531 = vunpack.c.l.b16 %v3499
          %v3532 = vunpack.c.l.b16 %v3500
          %v3533 = vunpack.c.l.b16 %v3501
          %v3534 = vunpack.c.l.b16 %v3502
          %v3535 = vunpack.c.l.b16 %v3503
          %v3536 = vpack.c.b16 %v3521, %v3520
          %v3537 = vpack.c.b16 %v3523, %v3522
          %v3538 = vpack.c.b16 %v3525, %v3524
          %v3539 = vpack.c.b16 %v3527, %v3526
          %v3540 = vpack.c.b16 %v3529, %v3528
          %v3541 = vpack.c.b16 %v3531, %v3530
          %v3542 = vpack.c.b16 %v3533, %v3532
          %v3543 = vpack.c.b16 %v3535, %v3534
          %3552 = vmatprep.subr.bf16.mxu0 0
          %3553 = vmatpush1.bf16.msra.mxu0 %v3536
          %3554 = vmatprep.subr.bf16.mxu0 0
          %3555 = vmatpush1.bf16.msra.mxu0 %v3537
          %3556 = vmatprep.subr.bf16.mxu0 0
          %3557 = vmatpush1.bf16.msra.mxu0 %v3538
          %3558 = vmatprep.subr.bf16.mxu0 0
          %3559 = vmatpush1.bf16.msra.mxu0 %v3539
          %3560 = vmatprep.subr.bf16.mxu0 0
          %3561 = vmatpush1.bf16.msra.mxu0 %v3540
          %3562 = vmatprep.subr.bf16.mxu0 0
          %3563 = vmatpush1.bf16.msra.mxu0 %v3541
          %3564 = vmatprep.subr.bf16.mxu0 0
          %3565 = vmatpush1.bf16.msra.mxu0 %v3542
          %3566 = vmatprep.subr.bf16.mxu0 0
          %3567 = vmatpush1.bf16.msra.mxu0 %v3543
          %3568 = vmatprep.subr.bf16.mxu0 0
          %3569 = vmatpush1.bf16.msra.mxu0 0
          %3570 = vmatprep.subr.bf16.mxu0 0
          %3571 = vmatpush1.bf16.msra.mxu0 0
          %3572 = vmatprep.subr.bf16.mxu0 0
          %3573 = vmatpush1.bf16.msra.mxu0 0
          %3574 = vmatprep.subr.bf16.mxu0 0
          %3575 = vmatpush1.bf16.msra.mxu0 0
          %3576 = vmatprep.subr.bf16.mxu0 0
          %3577 = vmatpush1.bf16.msra.mxu0 0
          %3578 = vmatprep.subr.bf16.mxu0 0
          %3579 = vmatpush1.bf16.msra.mxu0 0
          %3580 = vmatprep.subr.bf16.mxu0 0
          %3581 = vmatpush1.bf16.msra.mxu0 0
          %3582 = vmatprep.subr.bf16.mxu0 0
          %3583 = vmatpush1.bf16.msra.mxu0 0
          %3584 = vmatprep.mubr.bf16.mxu0 0
          %3585 = vmatmul.mubr.bf16.gmra.mrb[0].mxu0 %v3480
          %v3586 = vpop.f32.mrb[0].mxu0
          %v3587 = vadd.f32 0.0, %v3586
          %v3588 = vpop.f32.mrb[0].mxu0
          %v3589 = vpop.f32.mrb[0].mxu0
          %v3590 = vadd.f32 0.0, %v3589
          %v3591 = vpop.f32.mrb[0].mxu0
          %3592 = vmatprep.mubr.bf16.mxu0 0
          %3593 = vmatmul.mubr.bf16.gmra.mrb[0].mxu0 %v3481
          %v3594 = vpop.f32.mrb[0].mxu0
          %v3595 = vadd.f32 0.0, %v3594
          %v3596 = vpop.f32.mrb[0].mxu0
          %v3597 = vpop.f32.mrb[0].mxu0
          %v3598 = vadd.f32 0.0, %v3597
          %v3599 = vpop.f32.mrb[0].mxu0
          %3600 = vmatprep.mubr.bf16.mxu0 0
          %3601 = vmatmul.mubr.bf16.gmra.mrb[0].mxu0 %v3482
          %v3602 = vpop.f32.mrb[0].mxu0
          %v3603 = vadd.f32 0.0, %v3602
          %v3604 = vpop.f32.mrb[0].mxu0
          %v3605 = vpop.f32.mrb[0].mxu0
          %v3606 = vadd.f32 0.0, %v3605
          %v3607 = vpop.f32.mrb[0].mxu0
          %3608 = vmatprep.mubr.bf16.mxu0 0
          %3609 = vmatmul.mubr.bf16.gmra.mrb[0].mxu0 %v3483
          %v3610 = vpop.f32.mrb[0].mxu0
          %v3611 = vadd.f32 0.0, %v3610
          %v3612 = vpop.f32.mrb[0].mxu0
          %v3613 = vpop.f32.mrb[0].mxu0
          %v3614 = vadd.f32 0.0, %v3613
          %v3615 = vpop.f32.mrb[0].mxu0
          %3616 = vmatprep.mubr.bf16.mxu0 0
          %3617 = vmatmul.mubr.bf16.gmra.mrb[0].mxu0 %v3484
          %v3618 = vpop.f32.mrb[0].mxu0
          %v3619 = vadd.f32 0.0, %v3618
          %v3620 = vpop.f32.mrb[0].mxu0
          %v3621 = vpop.f32.mrb[0].mxu0
          %v3622 = vadd.f32 0.0, %v3621
          %v3623 = vpop.f32.mrb[0].mxu0
          %3624 = vmatprep.mubr.bf16.mxu0 0
          %3625 = vmatmul.mubr.bf16.gmra.mrb[0].mxu0 %v3485
          %v3626 = vpop.f32.mrb[0].mxu0
          %v3627 = vadd.f32 0.0, %v3626
          %v3628 = vpop.f32.mrb[0].mxu0
          %v3629 = vpop.f32.mrb[0].mxu0
          %v3630 = vadd.f32 0.0, %v3629
          %v3631 = vpop.f32.mrb[0].mxu0
          %3632 = vmatprep.mubr.bf16.mxu0 0
          %3633 = vmatmul.mubr.bf16.gmra.mrb[0].mxu0 %v3486
          %v3634 = vpop.f32.mrb[0].mxu0
          %v3635 = vadd.f32 0.0, %v3634
          %v3636 = vpop.f32.mrb[0].mxu0
          %v3637 = vpop.f32.mrb[0].mxu0
          %v3638 = vadd.f32 0.0, %v3637
          %v3639 = vpop.f32.mrb[0].mxu0
          %3640 = vmatprep.mubr.bf16.mxu0 0
          %3641 = vmatmul.mubr.bf16.gmra.mrb[0].mxu0 %v3487
          %v3642 = vpop.f32.mrb[0].mxu0
          %v3643 = vadd.f32 0.0, %v3642
          %v3644 = vpop.f32.mrb[0].mxu0
          %v3645 = vpop.f32.mrb[0].mxu0
          %v3646 = vadd.f32 0.0, %v3645
          %v3647 = vpop.f32.mrb[0].mxu0
          %3648 = vdwg.mxu0
          %v3649 = vtanh.pop %v3587
          %v3650 = vtanh.pop %v3590
          %v3651 = vtanh.pop %v3595
          %v3652 = vtanh.pop %v3598
          %v3653 = vtanh.pop %v3603
          %v3654 = vtanh.pop %v3606
          %v3655 = vtanh.pop %v3611
          %v3656 = vtanh.pop %v3614
          %v3657 = vtanh.pop %v3619
          %v3658 = vtanh.pop %v3622
          %v3659 = vtanh.pop %v3627
          %v3660 = vtanh.pop %v3630
          %v3661 = vtanh.pop %v3635
          %v3662 = vtanh.pop %v3638
          %v3663 = vtanh.pop %v3643
          %v3664 = vtanh.pop %v3646
          %3665 = vst [vmem:[%s351] sm:$0xff] %v3649
          %3666 = vst [vmem:[%s351 + $0x8] sm:$0xff] %v3650
          %3667 = vst [vmem:[%s351 + $0x10] sm:$0xff] %v3651
          %3668 = vst [vmem:[%s351 + $0x18] sm:$0xff] %v3652
          %3669 = vst [vmem:[%s351 + $0x20] sm:$0xff] %v3653
          %3670 = vst [vmem:[%s351 + $0x28] sm:$0xff] %v3654
          %3671 = vst [vmem:[%s351 + $0x30] sm:$0xff] %v3655
          %3672 = vst [vmem:[%s351 + $0x38] sm:$0xff] %v3656
          %3673 = vst [vmem:[%s351 + $0x40] sm:$0xff] %v3657
          %3674 = vst [vmem:[%s351 + $0x48] sm:$0xff] %v3658
          %3675 = vst [vmem:[%s351 + $0x50] sm:$0xff] %v3659
          %3676 = vst [vmem:[%s351 + $0x58] sm:$0xff] %v3660
          %3677 = vst [vmem:[%s351 + $0x60] sm:$0xff] %v3661
          %3678 = vst [vmem:[%s351 + $0x68] sm:$0xff] %v3662
          %3679 = vst [vmem:[%s351 + $0x70] sm:$0xff] %v3663
          %3680 = vst [vmem:[%s351 + $0x78] sm:$0xff] %v3664
        $region64: #{tpu_custom_call.1} parent=35 // pred_fallthru
          _
        %s3681 = sand.u32 %s170, 1
        %s3682 = scalar_lea.sflag [#allocation10], %s3681
        %s3683 = sand.u32 %s170, 1
        %s3684 = smul.addr %s3683, 128
        %s3685 = scalar_lea.vmem [#allocation16], %s3684
        // Predicated region
        $region65: #{tpu_custom_call.1} parent=35 // pred_check
          %p3686 = pneg %p180
        $region66: #{tpu_custom_call.1} parent=35 // pred_check_branch
          %3688 = sbr.rel (%p3686) target = $region68
        $region67: #{tpu_custom_call.1} parent=35 // pred_region
          %s3689 = smul.u32 16, %s39
          %s3691 = ssub.s32 2048, 2048
          %3692 = vsyncadd %s3682, %s3691
          %s3693 = smul.addr %s3689, 128
          %s3694 = scalar_lea.hbm %s6, %s3693
          %s3695 = sshll.u32 %s3685, 4
          %s3696 = int_to_ptr.vmem [resolvable:$true] %s3695
          %3701 = dma.vmem_to_hbm [thread:$0]  %s3696, 2048, %s3694, %s3682, 128, 128, 8
        $region68: #{tpu_custom_call.1} parent=35 // pred_fallthru
          _
      $region36: #{tpu_custom_call.1} parent=5 // pred_fallthru
        _
      %p3702 = scmp.le.s32.totalorder 2, %s30
      // Predicated region
      $region69: #{tpu_custom_call.1} parent=5 // pred_check
        %p3703 = pneg %p3702
      $region70: #{tpu_custom_call.1} parent=5 // pred_check_branch
        %3705 = sbr.rel (%p3703) target = $region72
      $region71: #{tpu_custom_call.1} parent=5 // pred_region
        %s3706 = ssub.s32 %s30, 2
        // Predicated region
        $region73: #{tpu_custom_call.1} parent=71 // pred_check
          %p3707 = pneg %p186
        $region74: #{tpu_custom_call.1} parent=71 // pred_check_branch
          %3709 = sbr.rel (%p3707) target = $region76
        $region75: #{tpu_custom_call.1} parent=71 // pred_region
          %s3710 = sand.u32 %s171, 1
          %s3711 = scalar_lea.sflag [#allocation10], %s3710
          %s3712 = sand.u32 %s171, 1
          %s3713 = smul.addr %s3712, 128
          %s3714 = scalar_lea.vmem [#allocation16], %s3713
          %3715 = dma.done %s3711, 2048
        $region76: #{tpu_custom_call.1} parent=71 // pred_fallthru
          _
      $region72: #{tpu_custom_call.1} parent=5 // pred_fallthru
        _
    $region6: #{tpu_custom_call.1} parent=1 // loop_footer
      %s34 = sadd.s32 1, %s30
    $region7: #{tpu_custom_call.1} parent=1 // loop_footer_branch
      %29 = sbr.rel target = $region3
    $region8: #{tpu_custom_call.1} parent=1 // loop_exit
      _
    %3716 = vsyncpa [#allocation9], 1
    %s3717 = scalar_lea.sflag [#allocation9], 1
    %3718 = vsyncpa %s3717, 1
    %3719 = vsyncpa [#allocation12], 1
    %s3720 = scalar_lea.sflag [#allocation12], 1
    %3721 = vsyncpa %s3720, 1
    %3722 = vsyncpa [#allocation15], 1
    %3723 = vsyncpa [#allocation10], 1
    %s3724 = scalar_lea.sflag [#allocation10], 1
    %3725 = vsyncpa %s3724, 1

</llo_original>
